<compile_context>
chip_gen: v7x
topology: tpu7x:2x2x1
jax: 0.10.0
libtpu: 0.0.40
codegen_flags: <defaults>
</compile_context>

<pallas_src>
import math
import jax
import jax.numpy as jnp
from jax.experimental import pallas as pl
from jax.experimental.pallas import tpu as pltpu


# ----------------------------------------------------------------------------
# In-kernel math helpers (pure VPU/EUP ops)
# ----------------------------------------------------------------------------
def _erf(x):
    # Abramowitz & Stegun 7.1.26 rational approximation, |abs err| <= 1.5e-7.
    # TODO(synk): switch to lax.erf if/when its Mosaic lowering is guaranteed.
    a1, a2, a3, a4, a5 = (0.254829592, -0.284496736, 1.421413741,
                          -1.453152027, 1.061405429)
    pc = 0.3275911
    ax = jnp.abs(x)
    t = 1.0 / (1.0 + pc * ax)
    poly = ((((a5 * t + a4) * t + a3) * t + a2) * t + a1) * t
    y = 1.0 - poly * jnp.exp(-ax * ax)
    return jnp.where(x >= 0, y, -y)


def _gelu_exact(x):
    return 0.5 * x * (1.0 + _erf(x * 0.7071067811865475))


# ----------------------------------------------------------------------------
# Fused whole-model kernel (grid axis == layer index)
# ----------------------------------------------------------------------------
def _make_bert_kernel(B, S, H, NH, n_layers, eps=1e-12):
    T = B * S
    Dh = H // NH
    scale = 1.0 / math.sqrt(Dh)

    def layer_norm(x, g, b):
        mu = jnp.mean(x, axis=-1, keepdims=True)
        var = jnp.mean(jnp.square(x - mu), axis=-1, keepdims=True)
        return (x - mu) * jax.lax.rsqrt(var + eps) * g + b

    def kernel(x_emb_ref, mask_ref, eln_g_ref, eln_b_ref,
               qkv_w_ref, qkv_b_ref, ao_w_ref, ao_b_ref,
               aln_g_ref, aln_b_ref, i_w_ref, i_b_ref,
               o_w_ref, o_b_ref, oln_g_ref, oln_b_ref,
               pool_w_ref, pool_b_ref,
               pooled_ref, x_sc):
        l = pl.program_id(0)

        # First grid step: embedding LayerNorm into the resident VMEM activation.
        @pl.when(l == 0)
        def _():
            x_sc[...] = layer_norm(x_emb_ref[...], eln_g_ref[...], eln_b_ref[...])

        x = x_sc[...]                                   # (T, H) resident in VMEM
        mask = mask_ref[...]                            # (B, 1, S) additive mask

        # ---- self-attention: fused Q/K/V projection (one MXU pass) ----
        qkv = jnp.dot(x, qkv_w_ref[0],
                      preferred_element_type=jnp.float32) + qkv_b_ref[0]
        q, k, v = qkv[:, :H], qkv[:, H:2 * H], qkv[:, 2 * H:]

        ctx_heads = []
        for h in range(NH):                             # unrolled at trace time
            sl = slice(h * Dh, (h + 1) * Dh)
            qh = q[:, sl].reshape(B, S, Dh)
            kh = k[:, sl].reshape(B, S, Dh)
            vh = v[:, sl].reshape(B, S, Dh)
            s = jnp.einsum('bqd,bkd->bqk', qh, kh,
                           preferred_element_type=jnp.float32) * scale + mask
            s = s - jnp.max(s, axis=-1, keepdims=True)
            p = jnp.exp(s)
            p = p * pl.reciprocal(jnp.sum(p, axis=-1, keepdims=True), approx=True)
            ch = jnp.einsum('bqk,bkd->bqd', p, vh,
                            preferred_element_type=jnp.float32)
            ctx_heads.append(ch.reshape(T, Dh))
        ctx = jnp.concatenate(ctx_heads, axis=-1)       # (T, H)

        attn_out = jnp.dot(ctx, ao_w_ref[0],
                           preferred_element_type=jnp.float32) + ao_b_ref[0]
        x = layer_norm(attn_out + x, aln_g_ref[0], aln_b_ref[0])

        # ---- feed-forward ----
        inter = jnp.dot(x, i_w_ref[0],
                        preferred_element_type=jnp.float32) + i_b_ref[0]
        inter = _gelu_exact(inter)
        ff = jnp.dot(inter, o_w_ref[0],
                     preferred_element_type=jnp.float32) + o_b_ref[0]
        x = layer_norm(ff + x, oln_g_ref[0], oln_b_ref[0])

        x_sc[...] = x                                   # carry to next layer

        # Last grid step: pooler (tanh dense over [CLS]) folded in.
        @pl.when(l == n_layers - 1)
        def _():
            cls = x.reshape(B, S, H)[:, 0:1, :].reshape(B, H)
            pooled_ref[...] = jnp.tanh(
                jnp.dot(cls, pool_w_ref[...],
                        preferred_element_type=jnp.float32) + pool_b_ref[...])

    return kernel


# ----------------------------------------------------------------------------
# Forward pass wrapper
# ----------------------------------------------------------------------------
def bert_pooler_output(params, input_ids, token_type_ids, attention_mask):
    B, S = input_ids.shape
    H = params["word_emb"].shape[1]
    NH = params["num_heads"]
    lw = params["layers"]
    L = lw["qkv_w"].shape[0]
    T = B * S

    # --- embeddings: data-dependent gathers stay as plain-JAX glue ---
    we = jnp.take(params["word_emb"], input_ids, axis=0)             # (B,S,H)
    pe = params["pos_emb"][:S][None, :, :]                           # (1,S,H)
    te = jnp.take(params["type_emb"], token_type_ids, axis=0)        # (B,S,H)
    x_emb = (we + pe + te).reshape(T, H)

    # HF-style extended additive attention mask
    ext_mask = ((1.0 - attention_mask.astype(jnp.float32)) * -10000.0
                ).reshape(B, 1, S)

    kernel = _make_bert_kernel(B, S, H, NH, L)

    def full(shape):
        n = len(shape)
        return pl.BlockSpec(shape, lambda l, n=n: (0,) * n)

    def per_layer(arr):
        return pl.BlockSpec((1,) + arr.shape[1:], lambda l: (l, 0, 0))

    pooled = pl.pallas_call(
        kernel,
        out_shape=jax.ShapeDtypeStruct((B, H), jnp.float32),
        grid=(L,),
        in_specs=[
            full((T, H)),                    # embedded activations (pre-LN)
            full((B, 1, S)),                 # additive attention mask
            full((1, H)), full((1, H)),      # embedding LayerNorm
            per_layer(lw["qkv_w"]), per_layer(lw["qkv_b"]),
            per_layer(lw["ao_w"]), per_layer(lw["ao_b"]),
            per_layer(lw["attn_ln_g"]), per_layer(lw["attn_ln_b"]),
            per_layer(lw["i_w"]), per_layer(lw["i_b"]),
            per_layer(lw["o_w"]), per_layer(lw["o_b"]),
            per_layer(lw["out_ln_g"]), per_layer(lw["out_ln_b"]),
            full((H, H)), full((1, H)),      # pooler
        ],
        out_specs=pl.BlockSpec((B, H), lambda l: (0, 0)),
        scratch_shapes=[pltpu.VMEM((T, H), jnp.float32)],
        compiler_params=pltpu.CompilerParams(
            dimension_semantics=("arbitrary",)),   # layers are sequential
    )(x_emb, ext_mask, params["emb_ln_g"], params["emb_ln_b"],
      lw["qkv_w"], lw["qkv_b"], lw["ao_w"], lw["ao_b"],
      lw["attn_ln_g"], lw["attn_ln_b"], lw["i_w"], lw["i_b"],
      lw["o_w"], lw["o_b"], lw["out_ln_g"], lw["out_ln_b"],
      params["pooler_w"], params["pooler_b"])
    return pooled


# ----------------------------------------------------------------------------
# Deterministic synthetic parameters (scaled-down bert-base topology),
# per-layer weights stacked on a leading [L, ...] axis, Q/K/V fused.
# ----------------------------------------------------------------------------
def init_params(key, vocab=100, hidden=32, n_layers=2, heads=4, inter=64,
                max_pos=16, type_vocab=2):
    keys = iter(jax.random.split(key, 16))

    def w(shape):
        return jax.random.normal(next(keys), shape, jnp.float32) * 0.02

    L, H, I = n_layers, hidden, inter
    return {
        "num_heads": heads,
        "word_emb": w((vocab, H)),
        "pos_emb": w((max_pos, H)),
        "type_emb": w((type_vocab, H)),
        "emb_ln_g": jnp.ones((1, H), jnp.float32),
        "emb_ln_b": jnp.zeros((1, H), jnp.float32),
        "pooler_w": w((H, H)),
        "pooler_b": jnp.zeros((1, H), jnp.float32),
        "layers": {
            "qkv_w": w((L, H, 3 * H)),                       # fused Q/K/V
            "qkv_b": jnp.zeros((L, 1, 3 * H), jnp.float32),
            "ao_w": w((L, H, H)),
            "ao_b": jnp.zeros((L, 1, H), jnp.float32),
            "attn_ln_g": jnp.ones((L, 1, H), jnp.float32),
            "attn_ln_b": jnp.zeros((L, 1, H), jnp.float32),
            "i_w": w((L, H, I)),
            "i_b": jnp.zeros((L, 1, I), jnp.float32),
            "o_w": w((L, I, H)),
            "o_b": jnp.zeros((L, 1, H), jnp.float32),
            "out_ln_g": jnp.ones((L, 1, H), jnp.float32),
            "out_ln_b": jnp.zeros((L, 1, H), jnp.float32),
        },
    }


if __name__ == "__main__":
    B, S, VOCAB = 2, 8, 100
    key = jax.random.PRNGKey(0)
    pkey, ikey = jax.random.split(key)

    params = init_params(pkey, vocab=VOCAB, hidden=32, n_layers=2, heads=4,
                         inter=64, max_pos=16, type_vocab=2)

    input_ids = jax.random.randint(ikey, (B, S), 0, VOCAB, dtype=jnp.int32)
    token_type_ids = jnp.zeros((B, S), jnp.int32)
    attention_mask = jnp.array([[1, 1, 1, 1, 1, 1, 1, 1],
                                [1, 1, 1, 1, 1, 1, 0, 0]], jnp.int32)
    text_input = {
        "input_ids": input_ids,
        "token_type_ids": token_type_ids,
        "attention_mask": attention_mask,
    }

    pooled = bert_pooler_output(params, text_input["input_ids"],
                                text_input["token_type_ids"],
                                text_input["attention_mask"])
    pooled = jax.block_until_ready(pooled)
    assert pooled.shape == (B, 32) and pooled.dtype == jnp.float32
    assert bool(jnp.all(jnp.isfinite(pooled)))
    print("KERNEL_OK")
</pallas_src>

<mosaic_0001>
module attributes {stable_mosaic.version = 11 : i64} {
  func.func @kernel(%arg0: i32, %arg1: memref<16x32xf32, #tpu.memory_space<vmem>>, %arg2: memref<2x1x8xf32, #tpu.memory_space<vmem>>, %arg3: memref<1x32xf32, #tpu.memory_space<vmem>>, %arg4: memref<1x32xf32, #tpu.memory_space<vmem>>, %arg5: memref<1x32x96xf32, #tpu.memory_space<vmem>>, %arg6: memref<1x1x96xf32, #tpu.memory_space<vmem>>, %arg7: memref<1x32x32xf32, #tpu.memory_space<vmem>>, %arg8: memref<1x1x32xf32, #tpu.memory_space<vmem>>, %arg9: memref<1x1x32xf32, #tpu.memory_space<vmem>>, %arg10: memref<1x1x32xf32, #tpu.memory_space<vmem>>, %arg11: memref<1x32x64xf32, #tpu.memory_space<vmem>>, %arg12: memref<1x1x64xf32, #tpu.memory_space<vmem>>, %arg13: memref<1x64x32xf32, #tpu.memory_space<vmem>>, %arg14: memref<1x1x32xf32, #tpu.memory_space<vmem>>, %arg15: memref<1x1x32xf32, #tpu.memory_space<vmem>>, %arg16: memref<1x1x32xf32, #tpu.memory_space<vmem>>, %arg17: memref<32x32xf32, #tpu.memory_space<vmem>>, %arg18: memref<1x32xf32, #tpu.memory_space<vmem>>, %arg19: memref<2x32xf32, #tpu.memory_space<vmem>>, %arg20: memref<16x32xf32, #tpu.memory_space<vmem>>) attributes {dimension_semantics = [#tpu.dimension_semantics<arbitrary>], iteration_bounds = array<i64: 2>, scalar_prefetch = 0 : i64, scratch_operands = 1 : i64, tpu.core_type = #tpu.core_type<tc>, window_params = [{pipeline_mode = #tpu.pipeline_mode<synchronous>, transform_indices = @transform_0, window_bounds = array<i64: 16, 32>}, {pipeline_mode = #tpu.pipeline_mode<synchronous>, transform_indices = @transform_1, window_bounds = array<i64: 2, 1, 8>}, {pipeline_mode = #tpu.pipeline_mode<synchronous>, transform_indices = @transform_2, window_bounds = array<i64: 1, 32>}, {pipeline_mode = #tpu.pipeline_mode<synchronous>, transform_indices = @transform_3, window_bounds = array<i64: 1, 32>}, {transform_indices = @transform_4, window_bounds = array<i64: 1, 32, 96>}, {transform_indices = @transform_5, window_bounds = array<i64: 1, 1, 96>}, {transform_indices = @transform_6, window_bounds = array<i64: 1, 32, 32>}, {transform_indices = @transform_7, window_bounds = array<i64: 1, 1, 32>}, {transform_indices = @transform_8, window_bounds = array<i64: 1, 1, 32>}, {transform_indices = @transform_9, window_bounds = array<i64: 1, 1, 32>}, {transform_indices = @transform_10, window_bounds = array<i64: 1, 32, 64>}, {transform_indices = @transform_11, window_bounds = array<i64: 1, 1, 64>}, {transform_indices = @transform_12, window_bounds = array<i64: 1, 64, 32>}, {transform_indices = @transform_13, window_bounds = array<i64: 1, 1, 32>}, {transform_indices = @transform_14, window_bounds = array<i64: 1, 1, 32>}, {transform_indices = @transform_15, window_bounds = array<i64: 1, 1, 32>}, {pipeline_mode = #tpu.pipeline_mode<synchronous>, transform_indices = @transform_16, window_bounds = array<i64: 32, 32>}, {pipeline_mode = #tpu.pipeline_mode<synchronous>, transform_indices = @transform_17, window_bounds = array<i64: 1, 32>}, {pipeline_mode = #tpu.pipeline_mode<synchronous>, transform_indices = @transform_18, window_bounds = array<i64: 2, 32>}]} {
    %c0_i32 = arith.constant 0 : i32
    %0 = arith.cmpi eq, %arg0, %c0_i32 : i32
    %1 = arith.extui %0 : i1 to i32
    %c0_i32_0 = arith.constant 0 : i32
    %2 = arith.cmpi ne, %1, %c0_i32_0 : i32
    scf.if %2 {
      %c0_92 = arith.constant 0 : index
      %c0_93 = arith.constant 0 : index
      %227 = vector.load %arg1[%c0_92, %c0_93] : memref<16x32xf32, #tpu.memory_space<vmem>>, vector<16x32xf32>
      %c0_94 = arith.constant 0 : index
      %c0_95 = arith.constant 0 : index
      %228 = vector.load %arg3[%c0_94, %c0_95] : memref<1x32xf32, #tpu.memory_space<vmem>>, vector<1x32xf32>
      %c0_96 = arith.constant 0 : index
      %c0_97 = arith.constant 0 : index
      %229 = vector.load %arg4[%c0_96, %c0_97] : memref<1x32xf32, #tpu.memory_space<vmem>>, vector<1x32xf32>
      %cst_98 = arith.constant dense<0.000000e+00> : vector<16xf32>
      %230 = vector.multi_reduction <add>, %227, %cst_98 [1] : vector<16x32xf32> to vector<16xf32>
      %231 = vector.shape_cast %230 : vector<16xf32> to vector<16x1xf32>
      %cst_99 = arith.constant 3.200000e+01 : f32
      %232 = vector.broadcast %cst_99 : f32 to vector<16x1xf32>
      %233 = arith.divf %231, %232 : vector<16x1xf32>
      %234 = vector.broadcast %233 : vector<16x1xf32> to vector<16x32xf32>
      %235 = arith.subf %227, %234 : vector<16x32xf32>
      %236 = arith.mulf %235, %235 : vector<16x32xf32>
      %cst_100 = arith.constant dense<0.000000e+00> : vector<16xf32>
      %237 = vector.multi_reduction <add>, %236, %cst_100 [1] : vector<16x32xf32> to vector<16xf32>
      %238 = vector.shape_cast %237 : vector<16xf32> to vector<16x1xf32>
      %cst_101 = arith.constant 3.200000e+01 : f32
      %239 = vector.broadcast %cst_101 : f32 to vector<16x1xf32>
      %240 = arith.divf %238, %239 : vector<16x1xf32>
      %241 = vector.broadcast %233 : vector<16x1xf32> to vector<16x32xf32>
      %242 = arith.subf %227, %241 : vector<16x32xf32>
      %cst_102 = arith.constant 9.99999996E-13 : f32
      %243 = vector.broadcast %cst_102 : f32 to vector<16x1xf32>
      %244 = arith.addf %240, %243 : vector<16x1xf32>
      %245 = math.rsqrt %244 : vector<16x1xf32>
      %246 = vector.broadcast %245 : vector<16x1xf32> to vector<16x32xf32>
      %247 = arith.mulf %242, %246 : vector<16x32xf32>
      %248 = vector.broadcast %228 : vector<1x32xf32> to vector<16x32xf32>
      %249 = arith.mulf %247, %248 : vector<16x32xf32>
      %250 = vector.broadcast %229 : vector<1x32xf32> to vector<16x32xf32>
      %251 = arith.addf %249, %250 : vector<16x32xf32>
      %c0_103 = arith.constant 0 : index
      %c0_104 = arith.constant 0 : index
      %252 = vector.load %arg20[%c0_103, %c0_104] : memref<16x32xf32, #tpu.memory_space<vmem>>, vector<16x32xf32>
      tpu.vector_store %arg20[%c0_103, %c0_104], %251 {strides = array<i32>} : memref<16x32xf32, #tpu.memory_space<vmem>>, vector<16x32xf32>,
    } else {
    }
    %c0 = arith.constant 0 : index
    %c0_1 = arith.constant 0 : index
    %3 = vector.load %arg20[%c0, %c0_1] : memref<16x32xf32, #tpu.memory_space<vmem>>, vector<16x32xf32>
    %c0_2 = arith.constant 0 : index
    %c0_3 = arith.constant 0 : index
    %c0_4 = arith.constant 0 : index
    %4 = vector.load %arg2[%c0_2, %c0_3, %c0_4] : memref<2x1x8xf32, #tpu.memory_space<vmem>>, vector<2x1x8xf32>
    %c0_5 = arith.constant 0 : index
    %c0_6 = arith.constant 0 : index
    %c0_7 = arith.constant 0 : index
    %5 = vector.load %arg5[%c0_5, %c0_6, %c0_7] : memref<1x32x96xf32, #tpu.memory_space<vmem>>, vector<1x32x96xf32>
    %6 = vector.shape_cast %5 : vector<1x32x96xf32> to vector<32x96xf32>
    %cst = arith.constant dense<0.000000e+00> : vector<16x96xf32>
    %7 = tpu.matmul %3, %6, %cst {dimension_numbers = #tpu.dot_dimension_numbers<[1], [0], [0], [1], [0, 0, 1, 1], [], []>} : vector<16x32xf32>, vector<32x96xf32>, vector<16x96xf32> -> vector<16x96xf32>
    %c0_8 = arith.constant 0 : index
    %c0_9 = arith.constant 0 : index
    %c0_10 = arith.constant 0 : index
    %8 = vector.load %arg6[%c0_8, %c0_9, %c0_10] : memref<1x1x96xf32, #tpu.memory_space<vmem>>, vector<1x1x96xf32>
    %9 = vector.shape_cast %8 : vector<1x1x96xf32> to vector<1x96xf32>
    %10 = vector.broadcast %9 : vector<1x96xf32> to vector<16x96xf32>
    %11 = arith.addf %7, %10 : vector<16x96xf32>
    %12 = vector.extract_strided_slice %11 {offsets = [0, 0], sizes = [16, 32], strides = [1, 1]} : vector<16x96xf32> to vector<16x32xf32>
    %13 = vector.extract_strided_slice %11 {offsets = [0, 32], sizes = [16, 32], strides = [1, 1]} : vector<16x96xf32> to vector<16x32xf32>
    %14 = vector.extract_strided_slice %11 {offsets = [0, 64], sizes = [16, 32], strides = [1, 1]} : vector<16x96xf32> to vector<16x32xf32>
    %15 = vector.extract_strided_slice %12 {offsets = [0, 0], sizes = [16, 8], strides = [1, 1]} : vector<16x32xf32> to vector<16x8xf32>
    %16 = vector.shape_cast %15 : vector<16x8xf32> to vector<2x8x8xf32>
    %17 = vector.extract_strided_slice %13 {offsets = [0, 0], sizes = [16, 8], strides = [1, 1]} : vector<16x32xf32> to vector<16x8xf32>
    %18 = vector.shape_cast %17 : vector<16x8xf32> to vector<2x8x8xf32>
    %19 = vector.extract_strided_slice %14 {offsets = [0, 0], sizes = [16, 8], strides = [1, 1]} : vector<16x32xf32> to vector<16x8xf32>
    %20 = vector.shape_cast %19 : vector<16x8xf32> to vector<2x8x8xf32>
    "tpu.trace_start"() <{level = 10 : i32, message = "bqd,bkd->bqk"}> : () -> ()
    %cst_11 = arith.constant dense<0.000000e+00> : vector<2x8x8xf32>
    %21 = tpu.matmul %16, %18, %cst_11 {dimension_numbers = #tpu.dot_dimension_numbers<[2], [2], [1], [1], [0, 0, 0, 1, 1, 1], [0], [0]>} : vector<2x8x8xf32>, vector<2x8x8xf32>, vector<2x8x8xf32> -> vector<2x8x8xf32>
    "tpu.trace_stop"() : () -> ()
    %cst_12 = arith.constant 0.353553385 : f32
    %22 = vector.broadcast %cst_12 : f32 to vector<2x8x8xf32>
    %23 = arith.mulf %21, %22 : vector<2x8x8xf32>
    %24 = vector.broadcast %4 : vector<2x1x8xf32> to vector<2x8x8xf32>
    %25 = arith.addf %23, %24 : vector<2x8x8xf32>
    %cst_13 = arith.constant dense<0xFF800000> : vector<2x8xf32>
    %26 = vector.multi_reduction <maximumf>, %25, %cst_13 [2] : vector<2x8x8xf32> to vector<2x8xf32>
    %27 = vector.shape_cast %26 : vector<2x8xf32> to vector<2x8x1xf32>
    %28 = vector.broadcast %27 : vector<2x8x1xf32> to vector<2x8x8xf32>
    %29 = arith.subf %25, %28 : vector<2x8x8xf32>
    %30 = math.exp %29 : vector<2x8x8xf32>
    %cst_14 = arith.constant dense<0.000000e+00> : vector<2x8xf32>
    %31 = vector.multi_reduction <add>, %30, %cst_14 [2] : vector<2x8x8xf32> to vector<2x8xf32>
    %32 = vector.shape_cast %31 : vector<2x8xf32> to vector<2x8x1xf32>
    %33 = tpu.reciprocal %32 {approx = true} : vector<2x8x1xf32> -> vector<2x8x1xf32>
    %34 = vector.broadcast %33 : vector<2x8x1xf32> to vector<2x8x8xf32>
    %35 = arith.mulf %30, %34 : vector<2x8x8xf32>
    "tpu.trace_start"() <{level = 10 : i32, message = "bqk,bkd->bqd"}> : () -> ()
    %cst_15 = arith.constant dense<0.000000e+00> : vector<2x8x8xf32>
    %36 = tpu.matmul %35, %20, %cst_15 {dimension_numbers = #tpu.dot_dimension_numbers<[2], [1], [1], [2], [0, 0, 0, 1, 1, 2], [0], [0]>} : vector<2x8x8xf32>, vector<2x8x8xf32>, vector<2x8x8xf32> -> vector<2x8x8xf32>
    "tpu.trace_stop"() : () -> ()
    %37 = vector.shape_cast %36 : vector<2x8x8xf32> to vector<16x8xf32>
    %38 = vector.extract_strided_slice %12 {offsets = [0, 8], sizes = [16, 8], strides = [1, 1]} : vector<16x32xf32> to vector<16x8xf32>
    %39 = vector.shape_cast %38 : vector<16x8xf32> to vector<2x8x8xf32>
    %40 = vector.extract_strided_slice %13 {offsets = [0, 8], sizes = [16, 8], strides = [1, 1]} : vector<16x32xf32> to vector<16x8xf32>
    %41 = vector.shape_cast %40 : vector<16x8xf32> to vector<2x8x8xf32>
    %42 = vector.extract_strided_slice %14 {offsets = [0, 8], sizes = [16, 8], strides = [1, 1]} : vector<16x32xf32> to vector<16x8xf32>
    %43 = vector.shape_cast %42 : vector<16x8xf32> to vector<2x8x8xf32>
    "tpu.trace_start"() <{level = 10 : i32, message = "bqd,bkd->bqk"}> : () -> ()
    %cst_16 = arith.constant dense<0.000000e+00> : vector<2x8x8xf32>
    %44 = tpu.matmul %39, %41, %cst_16 {dimension_numbers = #tpu.dot_dimension_numbers<[2], [2], [1], [1], [0, 0, 0, 1, 1, 1], [0], [0]>} : vector<2x8x8xf32>, vector<2x8x8xf32>, vector<2x8x8xf32> -> vector<2x8x8xf32>
    "tpu.trace_stop"() : () -> ()
    %cst_17 = arith.constant 0.353553385 : f32
    %45 = vector.broadcast %cst_17 : f32 to vector<2x8x8xf32>
    %46 = arith.mulf %44, %45 : vector<2x8x8xf32>
    %47 = vector.broadcast %4 : vector<2x1x8xf32> to vector<2x8x8xf32>
    %48 = arith.addf %46, %47 : vector<2x8x8xf32>
    %cst_18 = arith.constant dense<0xFF800000> : vector<2x8xf32>
    %49 = vector.multi_reduction <maximumf>, %48, %cst_18 [2] : vector<2x8x8xf32> to vector<2x8xf32>
    %50 = vector.shape_cast %49 : vector<2x8xf32> to vector<2x8x1xf32>
    %51 = vector.broadcast %50 : vector<2x8x1xf32> to vector<2x8x8xf32>
    %52 = arith.subf %48, %51 : vector<2x8x8xf32>
    %53 = math.exp %52 : vector<2x8x8xf32>
    %cst_19 = arith.constant dense<0.000000e+00> : vector<2x8xf32>
    %54 = vector.multi_reduction <add>, %53, %cst_19 [2] : vector<2x8x8xf32> to vector<2x8xf32>
    %55 = vector.shape_cast %54 : vector<2x8xf32> to vector<2x8x1xf32>
    %56 = tpu.reciprocal %55 {approx = true} : vector<2x8x1xf32> -> vector<2x8x1xf32>
    %57 = vector.broadcast %56 : vector<2x8x1xf32> to vector<2x8x8xf32>
    %58 = arith.mulf %53, %57 : vector<2x8x8xf32>
    "tpu.trace_start"() <{level = 10 : i32, message = "bqk,bkd->bqd"}> : () -> ()
    %cst_20 = arith.constant dense<0.000000e+00> : vector<2x8x8xf32>
    %59 = tpu.matmul %58, %43, %cst_20 {dimension_numbers = #tpu.dot_dimension_numbers<[2], [1], [1], [2], [0, 0, 0, 1, 1, 2], [0], [0]>} : vector<2x8x8xf32>, vector<2x8x8xf32>, vector<2x8x8xf32> -> vector<2x8x8xf32>
    "tpu.trace_stop"() : () -> ()
    %60 = vector.shape_cast %59 : vector<2x8x8xf32> to vector<16x8xf32>
    %61 = vector.extract_strided_slice %12 {offsets = [0, 16], sizes = [16, 8], strides = [1, 1]} : vector<16x32xf32> to vector<16x8xf32>
    %62 = vector.shape_cast %61 : vector<16x8xf32> to vector<2x8x8xf32>
    %63 = vector.extract_strided_slice %13 {offsets = [0, 16], sizes = [16, 8], strides = [1, 1]} : vector<16x32xf32> to vector<16x8xf32>
    %64 = vector.shape_cast %63 : vector<16x8xf32> to vector<2x8x8xf32>
    %65 = vector.extract_strided_slice %14 {offsets = [0, 16], sizes = [16, 8], strides = [1, 1]} : vector<16x32xf32> to vector<16x8xf32>
    %66 = vector.shape_cast %65 : vector<16x8xf32> to vector<2x8x8xf32>
    "tpu.trace_start"() <{level = 10 : i32, message = "bqd,bkd->bqk"}> : () -> ()
    %cst_21 = arith.constant dense<0.000000e+00> : vector<2x8x8xf32>
    %67 = tpu.matmul %62, %64, %cst_21 {dimension_numbers = #tpu.dot_dimension_numbers<[2], [2], [1], [1], [0, 0, 0, 1, 1, 1], [0], [0]>} : vector<2x8x8xf32>, vector<2x8x8xf32>, vector<2x8x8xf32> -> vector<2x8x8xf32>
    "tpu.trace_stop"() : () -> ()
    %cst_22 = arith.constant 0.353553385 : f32
    %68 = vector.broadcast %cst_22 : f32 to vector<2x8x8xf32>
    %69 = arith.mulf %67, %68 : vector<2x8x8xf32>
    %70 = vector.broadcast %4 : vector<2x1x8xf32> to vector<2x8x8xf32>
    %71 = arith.addf %69, %70 : vector<2x8x8xf32>
    %cst_23 = arith.constant dense<0xFF800000> : vector<2x8xf32>
    %72 = vector.multi_reduction <maximumf>, %71, %cst_23 [2] : vector<2x8x8xf32> to vector<2x8xf32>
    %73 = vector.shape_cast %72 : vector<2x8xf32> to vector<2x8x1xf32>
    %74 = vector.broadcast %73 : vector<2x8x1xf32> to vector<2x8x8xf32>
    %75 = arith.subf %71, %74 : vector<2x8x8xf32>
    %76 = math.exp %75 : vector<2x8x8xf32>
    %cst_24 = arith.constant dense<0.000000e+00> : vector<2x8xf32>
    %77 = vector.multi_reduction <add>, %76, %cst_24 [2] : vector<2x8x8xf32> to vector<2x8xf32>
    %78 = vector.shape_cast %77 : vector<2x8xf32> to vector<2x8x1xf32>
    %79 = tpu.reciprocal %78 {approx = true} : vector<2x8x1xf32> -> vector<2x8x1xf32>
    %80 = vector.broadcast %79 : vector<2x8x1xf32> to vector<2x8x8xf32>
    %81 = arith.mulf %76, %80 : vector<2x8x8xf32>
    "tpu.trace_start"() <{level = 10 : i32, message = "bqk,bkd->bqd"}> : () -> ()
    %cst_25 = arith.constant dense<0.000000e+00> : vector<2x8x8xf32>
    %82 = tpu.matmul %81, %66, %cst_25 {dimension_numbers = #tpu.dot_dimension_numbers<[2], [1], [1], [2], [0, 0, 0, 1, 1, 2], [0], [0]>} : vector<2x8x8xf32>, vector<2x8x8xf32>, vector<2x8x8xf32> -> vector<2x8x8xf32>
    "tpu.trace_stop"() : () -> ()
    %83 = vector.shape_cast %82 : vector<2x8x8xf32> to vector<16x8xf32>
    %84 = vector.extract_strided_slice %12 {offsets = [0, 24], sizes = [16, 8], strides = [1, 1]} : vector<16x32xf32> to vector<16x8xf32>
    %85 = vector.shape_cast %84 : vector<16x8xf32> to vector<2x8x8xf32>
    %86 = vector.extract_strided_slice %13 {offsets = [0, 24], sizes = [16, 8], strides = [1, 1]} : vector<16x32xf32> to vector<16x8xf32>
    %87 = vector.shape_cast %86 : vector<16x8xf32> to vector<2x8x8xf32>
    %88 = vector.extract_strided_slice %14 {offsets = [0, 24], sizes = [16, 8], strides = [1, 1]} : vector<16x32xf32> to vector<16x8xf32>
    %89 = vector.shape_cast %88 : vector<16x8xf32> to vector<2x8x8xf32>
    "tpu.trace_start"() <{level = 10 : i32, message = "bqd,bkd->bqk"}> : () -> ()
    %cst_26 = arith.constant dense<0.000000e+00> : vector<2x8x8xf32>
    %90 = tpu.matmul %85, %87, %cst_26 {dimension_numbers = #tpu.dot_dimension_numbers<[2], [2], [1], [1], [0, 0, 0, 1, 1, 1], [0], [0]>} : vector<2x8x8xf32>, vector<2x8x8xf32>, vector<2x8x8xf32> -> vector<2x8x8xf32>
    "tpu.trace_stop"() : () -> ()
    %cst_27 = arith.constant 0.353553385 : f32
    %91 = vector.broadcast %cst_27 : f32 to vector<2x8x8xf32>
    %92 = arith.mulf %90, %91 : vector<2x8x8xf32>
    %93 = vector.broadcast %4 : vector<2x1x8xf32> to vector<2x8x8xf32>
    %94 = arith.addf %92, %93 : vector<2x8x8xf32>
    %cst_28 = arith.constant dense<0xFF800000> : vector<2x8xf32>
    %95 = vector.multi_reduction <maximumf>, %94, %cst_28 [2] : vector<2x8x8xf32> to vector<2x8xf32>
    %96 = vector.shape_cast %95 : vector<2x8xf32> to vector<2x8x1xf32>
    %97 = vector.broadcast %96 : vector<2x8x1xf32> to vector<2x8x8xf32>
    %98 = arith.subf %94, %97 : vector<2x8x8xf32>
    %99 = math.exp %98 : vector<2x8x8xf32>
    %cst_29 = arith.constant dense<0.000000e+00> : vector<2x8xf32>
    %100 = vector.multi_reduction <add>, %99, %cst_29 [2] : vector<2x8x8xf32> to vector<2x8xf32>
    %101 = vector.shape_cast %100 : vector<2x8xf32> to vector<2x8x1xf32>
    %102 = tpu.reciprocal %101 {approx = true} : vector<2x8x1xf32> -> vector<2x8x1xf32>
    %103 = vector.broadcast %102 : vector<2x8x1xf32> to vector<2x8x8xf32>
    %104 = arith.mulf %99, %103 : vector<2x8x8xf32>
    "tpu.trace_start"() <{level = 10 : i32, message = "bqk,bkd->bqd"}> : () -> ()
    %cst_30 = arith.constant dense<0.000000e+00> : vector<2x8x8xf32>
    %105 = tpu.matmul %104, %89, %cst_30 {dimension_numbers = #tpu.dot_dimension_numbers<[2], [1], [1], [2], [0, 0, 0, 1, 1, 2], [0], [0]>} : vector<2x8x8xf32>, vector<2x8x8xf32>, vector<2x8x8xf32> -> vector<2x8x8xf32>
    "tpu.trace_stop"() : () -> ()
    %106 = vector.shape_cast %105 : vector<2x8x8xf32> to vector<16x8xf32>
    %107 = tpu.concatenate %37, %60, %83, %106 in 1 : vector<16x8xf32>, vector<16x8xf32>, vector<16x8xf32>, vector<16x8xf32> -> vector<16x32xf32>
    %c0_31 = arith.constant 0 : index
    %c0_32 = arith.constant 0 : index
    %c0_33 = arith.constant 0 : index
    %108 = vector.load %arg7[%c0_31, %c0_32, %c0_33] : memref<1x32x32xf32, #tpu.memory_space<vmem>>, vector<1x32x32xf32>
    %109 = vector.shape_cast %108 : vector<1x32x32xf32> to vector<32x32xf32>
    %cst_34 = arith.constant dense<0.000000e+00> : vector<16x32xf32>
    %110 = tpu.matmul %107, %109, %cst_34 {dimension_numbers = #tpu.dot_dimension_numbers<[1], [0], [0], [1], [0, 0, 1, 1], [], []>} : vector<16x32xf32>, vector<32x32xf32>, vector<16x32xf32> -> vector<16x32xf32>
    %c0_35 = arith.constant 0 : index
    %c0_36 = arith.constant 0 : index
    %c0_37 = arith.constant 0 : index
    %111 = vector.load %arg8[%c0_35, %c0_36, %c0_37] : memref<1x1x32xf32, #tpu.memory_space<vmem>>, vector<1x1x32xf32>
    %112 = vector.shape_cast %111 : vector<1x1x32xf32> to vector<1x32xf32>
    %113 = vector.broadcast %112 : vector<1x32xf32> to vector<16x32xf32>
    %114 = arith.addf %110, %113 : vector<16x32xf32>
    %115 = arith.addf %114, %3 : vector<16x32xf32>
    %c0_38 = arith.constant 0 : index
    %c0_39 = arith.constant 0 : index
    %c0_40 = arith.constant 0 : index
    %116 = vector.load %arg9[%c0_38, %c0_39, %c0_40] : memref<1x1x32xf32, #tpu.memory_space<vmem>>, vector<1x1x32xf32>
    %117 = vector.shape_cast %116 : vector<1x1x32xf32> to vector<1x32xf32>
    %c0_41 = arith.constant 0 : index
    %c0_42 = arith.constant 0 : index
    %c0_43 = arith.constant 0 : index
    %118 = vector.load %arg10[%c0_41, %c0_42, %c0_43] : memref<1x1x32xf32, #tpu.memory_space<vmem>>, vector<1x1x32xf32>
    %119 = vector.shape_cast %118 : vector<1x1x32xf32> to vector<1x32xf32>
    %cst_44 = arith.constant dense<0.000000e+00> : vector<16xf32>
    %120 = vector.multi_reduction <add>, %115, %cst_44 [1] : vector<16x32xf32> to vector<16xf32>
    %121 = vector.shape_cast %120 : vector<16xf32> to vector<16x1xf32>
    %cst_45 = arith.constant 3.200000e+01 : f32
    %122 = vector.broadcast %cst_45 : f32 to vector<16x1xf32>
    %123 = arith.divf %121, %122 : vector<16x1xf32>
    %124 = vector.broadcast %123 : vector<16x1xf32> to vector<16x32xf32>
    %125 = arith.subf %115, %124 : vector<16x32xf32>
    %126 = arith.mulf %125, %125 : vector<16x32xf32>
    %cst_46 = arith.constant dense<0.000000e+00> : vector<16xf32>
    %127 = vector.multi_reduction <add>, %126, %cst_46 [1] : vector<16x32xf32> to vector<16xf32>
    %128 = vector.shape_cast %127 : vector<16xf32> to vector<16x1xf32>
    %cst_47 = arith.constant 3.200000e+01 : f32
    %129 = vector.broadcast %cst_47 : f32 to vector<16x1xf32>
    %130 = arith.divf %128, %129 : vector<16x1xf32>
    %131 = vector.broadcast %123 : vector<16x1xf32> to vector<16x32xf32>
    %132 = arith.subf %115, %131 : vector<16x32xf32>
    %cst_48 = arith.constant 9.99999996E-13 : f32
    %133 = vector.broadcast %cst_48 : f32 to vector<16x1xf32>
    %134 = arith.addf %130, %133 : vector<16x1xf32>
    %135 = math.rsqrt %134 : vector<16x1xf32>
    %136 = vector.broadcast %135 : vector<16x1xf32> to vector<16x32xf32>
    %137 = arith.mulf %132, %136 : vector<16x32xf32>
    %138 = vector.broadcast %117 : vector<1x32xf32> to vector<16x32xf32>
    %139 = arith.mulf %137, %138 : vector<16x32xf32>
    %140 = vector.broadcast %119 : vector<1x32xf32> to vector<16x32xf32>
    %141 = arith.addf %139, %140 : vector<16x32xf32>
    %c0_49 = arith.constant 0 : index
    %c0_50 = arith.constant 0 : index
    %c0_51 = arith.constant 0 : index
    %142 = vector.load %arg11[%c0_49, %c0_50, %c0_51] : memref<1x32x64xf32, #tpu.memory_space<vmem>>, vector<1x32x64xf32>
    %143 = vector.shape_cast %142 : vector<1x32x64xf32> to vector<32x64xf32>
    %cst_52 = arith.constant dense<0.000000e+00> : vector<16x64xf32>
    %144 = tpu.matmul %141, %143, %cst_52 {dimension_numbers = #tpu.dot_dimension_numbers<[1], [0], [0], [1], [0, 0, 1, 1], [], []>} : vector<16x32xf32>, vector<32x64xf32>, vector<16x64xf32> -> vector<16x64xf32>
    %c0_53 = arith.constant 0 : index
    %c0_54 = arith.constant 0 : index
    %c0_55 = arith.constant 0 : index
    %145 = vector.load %arg12[%c0_53, %c0_54, %c0_55] : memref<1x1x64xf32, #tpu.memory_space<vmem>>, vector<1x1x64xf32>
    %146 = vector.shape_cast %145 : vector<1x1x64xf32> to vector<1x64xf32>
    %147 = vector.broadcast %146 : vector<1x64xf32> to vector<16x64xf32>
    %148 = arith.addf %144, %147 : vector<16x64xf32>
    %cst_56 = arith.constant 5.000000e-01 : f32
    %149 = vector.broadcast %cst_56 : f32 to vector<16x64xf32>
    %150 = arith.mulf %149, %148 : vector<16x64xf32>
    %cst_57 = arith.constant 0.707106769 : f32
    %151 = vector.broadcast %cst_57 : f32 to vector<16x64xf32>
    %152 = arith.mulf %148, %151 : vector<16x64xf32>
    %153 = math.absf %152 : vector<16x64xf32>
    %cst_58 = arith.constant 0.327591091 : f32
    %154 = vector.broadcast %cst_58 : f32 to vector<16x64xf32>
    %155 = arith.mulf %154, %153 : vector<16x64xf32>
    %cst_59 = arith.constant 1.000000e+00 : f32
    %156 = vector.broadcast %cst_59 : f32 to vector<16x64xf32>
    %157 = arith.addf %156, %155 : vector<16x64xf32>
    %cst_60 = arith.constant 1.000000e+00 : f32
    %158 = vector.broadcast %cst_60 : f32 to vector<16x64xf32>
    %159 = arith.divf %158, %157 : vector<16x64xf32>
    %cst_61 = arith.constant 1.06140542 : f32
    %160 = vector.broadcast %cst_61 : f32 to vector<16x64xf32>
    %161 = arith.mulf %160, %159 : vector<16x64xf32>
    %cst_62 = arith.constant -1.45315206 : f32
    %162 = vector.broadcast %cst_62 : f32 to vector<16x64xf32>
    %163 = arith.addf %161, %162 : vector<16x64xf32>
    %164 = arith.mulf %163, %159 : vector<16x64xf32>
    %cst_63 = arith.constant 1.42141378 : f32
    %165 = vector.broadcast %cst_63 : f32 to vector<16x64xf32>
    %166 = arith.addf %164, %165 : vector<16x64xf32>
    %167 = arith.mulf %166, %159 : vector<16x64xf32>
    %cst_64 = arith.constant -0.284496725 : f32
    %168 = vector.broadcast %cst_64 : f32 to vector<16x64xf32>
    %169 = arith.addf %167, %168 : vector<16x64xf32>
    %170 = arith.mulf %169, %159 : vector<16x64xf32>
    %cst_65 = arith.constant 0.254829586 : f32
    %171 = vector.broadcast %cst_65 : f32 to vector<16x64xf32>
    %172 = arith.addf %170, %171 : vector<16x64xf32>
    %173 = arith.mulf %172, %159 : vector<16x64xf32>
    %cst_66 = arith.constant 0.000000e+00 : f32
    %174 = vector.broadcast %cst_66 : f32 to vector<16x64xf32>
    %175 = arith.subf %174, %153 : vector<16x64xf32>
    %176 = arith.mulf %175, %153 : vector<16x64xf32>
    %177 = math.exp %176 : vector<16x64xf32>
    %178 = arith.mulf %173, %177 : vector<16x64xf32>
    %cst_67 = arith.constant 1.000000e+00 : f32
    %179 = vector.broadcast %cst_67 : f32 to vector<16x64xf32>
    %180 = arith.subf %179, %178 : vector<16x64xf32>
    %cst_68 = arith.constant 0.000000e+00 : f32
    %181 = vector.broadcast %cst_68 : f32 to vector<16x64xf32>
    %182 = arith.cmpf oge, %152, %181 : vector<16x64xf32>
    %cst_69 = arith.constant 0.000000e+00 : f32
    %183 = vector.broadcast %cst_69 : f32 to vector<16x64xf32>
    %184 = arith.subf %183, %180 : vector<16x64xf32>
    %185 = arith.select %182, %180, %184 : vector<16x64xi1>, vector<16x64xf32>
    %cst_70 = arith.constant 1.000000e+00 : f32
    %186 = vector.broadcast %cst_70 : f32 to vector<16x64xf32>
    %187 = arith.addf %186, %185 : vector<16x64xf32>
    %188 = arith.mulf %150, %187 : vector<16x64xf32>
    %c0_71 = arith.constant 0 : index
    %c0_72 = arith.constant 0 : index
    %c0_73 = arith.constant 0 : index
    %189 = vector.load %arg13[%c0_71, %c0_72, %c0_73] : memref<1x64x32xf32, #tpu.memory_space<vmem>>, vector<1x64x32xf32>
    %190 = vector.shape_cast %189 : vector<1x64x32xf32> to vector<64x32xf32>
    %cst_74 = arith.constant dense<0.000000e+00> : vector<16x32xf32>
    %191 = tpu.matmul %188, %190, %cst_74 {dimension_numbers = #tpu.dot_dimension_numbers<[1], [0], [0], [1], [0, 0, 1, 1], [], []>} : vector<16x64xf32>, vector<64x32xf32>, vector<16x32xf32> -> vector<16x32xf32>
    %c0_75 = arith.constant 0 : index
    %c0_76 = arith.constant 0 : index
    %c0_77 = arith.constant 0 : index
    %192 = vector.load %arg14[%c0_75, %c0_76, %c0_77] : memref<1x1x32xf32, #tpu.memory_space<vmem>>, vector<1x1x32xf32>
    %193 = vector.shape_cast %192 : vector<1x1x32xf32> to vector<1x32xf32>
    %194 = vector.broadcast %193 : vector<1x32xf32> to vector<16x32xf32>
    %195 = arith.addf %191, %194 : vector<16x32xf32>
    %196 = arith.addf %195, %141 : vector<16x32xf32>
    %c0_78 = arith.constant 0 : index
    %c0_79 = arith.constant 0 : index
    %c0_80 = arith.constant 0 : index
    %197 = vector.load %arg15[%c0_78, %c0_79, %c0_80] : memref<1x1x32xf32, #tpu.memory_space<vmem>>, vector<1x1x32xf32>
    %198 = vector.shape_cast %197 : vector<1x1x32xf32> to vector<1x32xf32>
    %c0_81 = arith.constant 0 : index
    %c0_82 = arith.constant 0 : index
    %c0_83 = arith.constant 0 : index
    %199 = vector.load %arg16[%c0_81, %c0_82, %c0_83] : memref<1x1x32xf32, #tpu.memory_space<vmem>>, vector<1x1x32xf32>
    %200 = vector.shape_cast %199 : vector<1x1x32xf32> to vector<1x32xf32>
    %cst_84 = arith.constant dense<0.000000e+00> : vector<16xf32>
    %201 = vector.multi_reduction <add>, %196, %cst_84 [1] : vector<16x32xf32> to vector<16xf32>
    %202 = vector.shape_cast %201 : vector<16xf32> to vector<16x1xf32>
    %cst_85 = arith.constant 3.200000e+01 : f32
    %203 = vector.broadcast %cst_85 : f32 to vector<16x1xf32>
    %204 = arith.divf %202, %203 : vector<16x1xf32>
    %205 = vector.broadcast %204 : vector<16x1xf32> to vector<16x32xf32>
    %206 = arith.subf %196, %205 : vector<16x32xf32>
    %207 = arith.mulf %206, %206 : vector<16x32xf32>
    %cst_86 = arith.constant dense<0.000000e+00> : vector<16xf32>
    %208 = vector.multi_reduction <add>, %207, %cst_86 [1] : vector<16x32xf32> to vector<16xf32>
    %209 = vector.shape_cast %208 : vector<16xf32> to vector<16x1xf32>
    %cst_87 = arith.constant 3.200000e+01 : f32
    %210 = vector.broadcast %cst_87 : f32 to vector<16x1xf32>
    %211 = arith.divf %209, %210 : vector<16x1xf32>
    %212 = vector.broadcast %204 : vector<16x1xf32> to vector<16x32xf32>
    %213 = arith.subf %196, %212 : vector<16x32xf32>
    %cst_88 = arith.constant 9.99999996E-13 : f32
    %214 = vector.broadcast %cst_88 : f32 to vector<16x1xf32>
    %215 = arith.addf %211, %214 : vector<16x1xf32>
    %216 = math.rsqrt %215 : vector<16x1xf32>
    %217 = vector.broadcast %216 : vector<16x1xf32> to vector<16x32xf32>
    %218 = arith.mulf %213, %217 : vector<16x32xf32>
    %219 = vector.broadcast %198 : vector<1x32xf32> to vector<16x32xf32>
    %220 = arith.mulf %218, %219 : vector<16x32xf32>
    %221 = vector.broadcast %200 : vector<1x32xf32> to vector<16x32xf32>
    %222 = arith.addf %220, %221 : vector<16x32xf32>
    %c0_89 = arith.constant 0 : index
    %c0_90 = arith.constant 0 : index
    %223 = vector.load %arg20[%c0_89, %c0_90] : memref<16x32xf32, #tpu.memory_space<vmem>>, vector<16x32xf32>
    tpu.vector_store %arg20[%c0_89, %c0_90], %222 {strides = array<i32>} : memref<16x32xf32, #tpu.memory_space<vmem>>, vector<16x32xf32>,
    %c1_i32 = arith.constant 1 : i32
    %224 = arith.cmpi eq, %arg0, %c1_i32 : i32
    %225 = arith.extui %224 : i1 to i32
    %c0_i32_91 = arith.constant 0 : i32
    %226 = arith.cmpi ne, %225, %c0_i32_91 : i32
    scf.if %226 {
      %227 = vector.shape_cast %222 : vector<16x32xf32> to vector<2x8x32xf32>
      %228 = vector.extract_strided_slice %227 {offsets = [0, 0, 0], sizes = [2, 1, 32], strides = [1, 1, 1]} : vector<2x8x32xf32> to vector<2x1x32xf32>
      %229 = vector.shape_cast %228 : vector<2x1x32xf32> to vector<2x32xf32>
      %c0_92 = arith.constant 0 : index
      %c0_93 = arith.constant 0 : index
      %230 = vector.load %arg17[%c0_92, %c0_93] : memref<32x32xf32, #tpu.memory_space<vmem>>, vector<32x32xf32>
      %cst_94 = arith.constant dense<0.000000e+00> : vector<2x32xf32>
      %231 = tpu.matmul %229, %230, %cst_94 {dimension_numbers = #tpu.dot_dimension_numbers<[1], [0], [0], [1], [0, 0, 1, 1], [], []>} : vector<2x32xf32>, vector<32x32xf32>, vector<2x32xf32> -> vector<2x32xf32>
      %c0_95 = arith.constant 0 : index
      %c0_96 = arith.constant 0 : index
      %232 = vector.load %arg18[%c0_95, %c0_96] : memref<1x32xf32, #tpu.memory_space<vmem>>, vector<1x32xf32>
      %233 = vector.broadcast %232 : vector<1x32xf32> to vector<2x32xf32>
      %234 = arith.addf %231, %233 : vector<2x32xf32>
      %235 = math.tanh %234 : vector<2x32xf32>
      %c0_97 = arith.constant 0 : index
      %c0_98 = arith.constant 0 : index
      %236 = vector.load %arg19[%c0_97, %c0_98] : memref<2x32xf32, #tpu.memory_space<vmem>>, vector<2x32xf32>
      tpu.vector_store %arg19[%c0_97, %c0_98], %235 {strides = array<i32>} : memref<2x32xf32, #tpu.memory_space<vmem>>, vector<2x32xf32>,
    } else {
    }
    return
  }
  func.func @transform_0(%arg0: i32) -> (i32, i32) {
    %c0_i32 = arith.constant 0 : i32
    %c0_i32_0 = arith.constant 0 : i32
    %c0_i32_1 = arith.constant 0 : i32
    return %c0_i32, %c0_i32_0 : i32, i32
  }
  func.func @transform_1(%arg0: i32) -> (i32, i32, i32) {
    %c0_i32 = arith.constant 0 : i32
    %c0_i32_0 = arith.constant 0 : i32
    %c0_i32_1 = arith.constant 0 : i32
    %c0_i32_2 = arith.constant 0 : i32
    return %c0_i32, %c0_i32_0, %c0_i32_1 : i32, i32, i32
  }
  func.func @transform_2(%arg0: i32) -> (i32, i32) {
    %c0_i32 = arith.constant 0 : i32
    %c0_i32_0 = arith.constant 0 : i32
    %c0_i32_1 = arith.constant 0 : i32
    return %c0_i32, %c0_i32_0 : i32, i32
  }
  func.func @transform_3(%arg0: i32) -> (i32, i32) {
    %c0_i32 = arith.constant 0 : i32
    %c0_i32_0 = arith.constant 0 : i32
    %c0_i32_1 = arith.constant 0 : i32
    return %c0_i32, %c0_i32_0 : i32, i32
  }
  func.func @transform_4(%arg0: i32) -> (i32, i32, i32) {
    %c0_i32 = arith.constant 0 : i32
    %c0_i32_0 = arith.constant 0 : i32
    %c0_i32_1 = arith.constant 0 : i32
    return %arg0, %c0_i32, %c0_i32_0 : i32, i32, i32
  }
  func.func @transform_5(%arg0: i32) -> (i32, i32, i32) {
    %c0_i32 = arith.constant 0 : i32
    %c0_i32_0 = arith.constant 0 : i32
    %c0_i32_1 = arith.constant 0 : i32
    return %arg0, %c0_i32, %c0_i32_0 : i32, i32, i32
  }
  func.func @transform_6(%arg0: i32) -> (i32, i32, i32) {
    %c0_i32 = arith.constant 0 : i32
    %c0_i32_0 = arith.constant 0 : i32
    %c0_i32_1 = arith.constant 0 : i32
    return %arg0, %c0_i32, %c0_i32_0 : i32, i32, i32
  }
  func.func @transform_7(%arg0: i32) -> (i32, i32, i32) {
    %c0_i32 = arith.constant 0 : i32
    %c0_i32_0 = arith.constant 0 : i32
    %c0_i32_1 = arith.constant 0 : i32
    return %arg0, %c0_i32, %c0_i32_0 : i32, i32, i32
  }
  func.func @transform_8(%arg0: i32) -> (i32, i32, i32) {
    %c0_i32 = arith.constant 0 : i32
    %c0_i32_0 = arith.constant 0 : i32
    %c0_i32_1 = arith.constant 0 : i32
    return %arg0, %c0_i32, %c0_i32_0 : i32, i32, i32
  }
  func.func @transform_9(%arg0: i32) -> (i32, i32, i32) {
    %c0_i32 = arith.constant 0 : i32
    %c0_i32_0 = arith.constant 0 : i32
    %c0_i32_1 = arith.constant 0 : i32
    return %arg0, %c0_i32, %c0_i32_0 : i32, i32, i32
  }
  func.func @transform_10(%arg0: i32) -> (i32, i32, i32) {
    %c0_i32 = arith.constant 0 : i32
    %c0_i32_0 = arith.constant 0 : i32
    %c0_i32_1 = arith.constant 0 : i32
    return %arg0, %c0_i32, %c0_i32_0 : i32, i32, i32
  }
  func.func @transform_11(%arg0: i32) -> (i32, i32, i32) {
    %c0_i32 = arith.constant 0 : i32
    %c0_i32_0 = arith.constant 0 : i32
    %c0_i32_1 = arith.constant 0 : i32
    return %arg0, %c0_i32, %c0_i32_0 : i32, i32, i32
  }
  func.func @transform_12(%arg0: i32) -> (i32, i32, i32) {
    %c0_i32 = arith.constant 0 : i32
    %c0_i32_0 = arith.constant 0 : i32
    %c0_i32_1 = arith.constant 0 : i32
    return %arg0, %c0_i32, %c0_i32_0 : i32, i32, i32
  }
  func.func @transform_13(%arg0: i32) -> (i32, i32, i32) {
    %c0_i32 = arith.constant 0 : i32
    %c0_i32_0 = arith.constant 0 : i32
    %c0_i32_1 = arith.constant 0 : i32
    return %arg0, %c0_i32, %c0_i32_0 : i32, i32, i32
  }
  func.func @transform_14(%arg0: i32) -> (i32, i32, i32) {
    %c0_i32 = arith.constant 0 : i32
    %c0_i32_0 = arith.constant 0 : i32
    %c0_i32_1 = arith.constant 0 : i32
    return %arg0, %c0_i32, %c0_i32_0 : i32, i32, i32
  }
  func.func @transform_15(%arg0: i32) -> (i32, i32, i32) {
    %c0_i32 = arith.constant 0 : i32
    %c0_i32_0 = arith.constant 0 : i32
    %c0_i32_1 = arith.constant 0 : i32
    return %arg0, %c0_i32, %c0_i32_0 : i32, i32, i32
  }
  func.func @transform_16(%arg0: i32) -> (i32, i32) {
    %c0_i32 = arith.constant 0 : i32
    %c0_i32_0 = arith.constant 0 : i32
    %c0_i32_1 = arith.constant 0 : i32
    return %c0_i32, %c0_i32_0 : i32, i32
  }
  func.func @transform_17(%arg0: i32) -> (i32, i32) {
    %c0_i32 = arith.constant 0 : i32
    %c0_i32_0 = arith.constant 0 : i32
    %c0_i32_1 = arith.constant 0 : i32
    return %c0_i32, %c0_i32_0 : i32, i32
  }
  func.func @transform_18(%arg0: i32) -> (i32, i32) {
    %c0_i32 = arith.constant 0 : i32
    %c0_i32_0 = arith.constant 0 : i32
    %c0_i32_1 = arith.constant 0 : i32
    return %c0_i32, %c0_i32_0 : i32, i32
  }
}

</mosaic_0001>

<llo_original>
// kernel: tpu_custom_call.1
$region0: #{tpu_custom_call.1}
  #allocation0 [shape = 'u32[]', space=smem, size = 0x4, offset = 0x4, fixed_abs, tag = 'smem constant byte address 0x4 - core index']
  #allocation1 [shape = 'u32[144,128]{1,0:T(1,128)}', space=vmem, size = 0x12000, scoped, tag = 'internal scratch']
  #allocation2 [shape = 'f32[16,32]{1,0:T(8,128)}', space=vmem, size = 0x2000, scoped, tag = 'scratch operand']
  %s0 = inlined_call_operand.hbm [shape: f32[16,32], index: 0, kind: input, shape index: {}]
  %s1 = inlined_call_operand.vmem [shape: f32[2,1,8], index: 1, kind: input, shape index: {}]
  %s2 = inlined_call_operand.hbm [shape: f32[1,32], index: 2, kind: input, shape index: {}]
  %s3 = inlined_call_operand.hbm [shape: f32[1,32], index: 3, kind: input, shape index: {}]
  %s4 = inlined_call_operand.vmem [shape: f32[2,32,96], index: 4, kind: input, shape index: {}]
  %s5 = inlined_call_operand.hbm [shape: f32[2,1,96], index: 5, kind: input, shape index: {}]
  %s6 = inlined_call_operand.vmem [shape: f32[2,32,32], index: 6, kind: input, shape index: {}]
  %s7 = inlined_call_operand.hbm [shape: f32[2,1,32], index: 7, kind: input, shape index: {}]
  %s8 = inlined_call_operand.hbm [shape: f32[2,1,32], index: 8, kind: input, shape index: {}]
  %s9 = inlined_call_operand.hbm [shape: f32[2,1,32], index: 9, kind: input, shape index: {}]
  %s10 = inlined_call_operand.vmem [shape: f32[2,32,64], index: 10, kind: input, shape index: {}]
  %s11 = inlined_call_operand.vmem [shape: f32[2,1,64], index: 11, kind: input, shape index: {}]
  %s12 = inlined_call_operand.vmem [shape: f32[2,64,32], index: 12, kind: input, shape index: {}]
  %s13 = inlined_call_operand.vmem [shape: f32[2,1,32], index: 13, kind: input, shape index: {}]
  %s14 = inlined_call_operand.vmem [shape: f32[2,1,32], index: 14, kind: input, shape index: {}]
  %s15 = inlined_call_operand.vmem [shape: f32[2,1,32], index: 15, kind: input, shape index: {}]
  %s16 = inlined_call_operand.vmem [shape: f32[32,32], index: 16, kind: input, shape index: {}]
  %s17 = inlined_call_operand.vmem [shape: f32[1,32], index: 17, kind: input, shape index: {}]
  %s18 = inlined_call_operand.hbm [shape: f32[2,32], index: 18, kind: output, shape index: {}]
  %s19 = sld [smem:[#allocation0]]
  $region141: #{tpu_custom_call.1} parent=0
    _
  %s21 = ssub.s32 1, %s19
  %s22 = scalar_select 0, %s21, %s19
  $region1: #{tpu_custom_call.1} parent=0
    #allocation3 [shape = 'u8[8192]{0}', space=vmem, size = 0x2000, scoped, tag = 'input window, operand 0, single buffered']
    #allocation4 [shape = 's32[2]{0}', space=sflag, size = 0x8, scoped, tag = 'scoped memory for tpu_custom_call.1']
    #allocation5 [shape = 's32[2]{0}', space=sflag, size = 0x8, scoped, tag = 'scoped memory for tpu_custom_call.1']
    #allocation6 [shape = 'u8[512]{0}', space=vmem, size = 0x400, scoped, tag = 'input window, operand 2, single buffered']
    #allocation7 [shape = 's32[1]{0}', space=sflag, size = 0x4, scoped, tag = 'scoped memory for tpu_custom_call.1']
    #allocation8 [shape = 'u8[512]{0}', space=vmem, size = 0x400, scoped, tag = 'input window, operand 3, single buffered']
    #allocation9 [shape = 'u8[1024]{0}', space=vmem, size = 0x400, scoped, tag = 'input window, operand 5']
    #allocation10 [shape = 's32[2]{0}', space=sflag, size = 0x8, scoped, tag = 'scoped memory for tpu_custom_call.1']
    #allocation11 [shape = 'u8[1024]{0}', space=vmem, size = 0x400, scoped, tag = 'input window, operand 7']
    #allocation12 [shape = 'u8[1024]{0}', space=vmem, size = 0x400, scoped, tag = 'input window, operand 8']
    #allocation13 [shape = 's32[2]{0}', space=sflag, size = 0x8, scoped, tag = 'scoped memory for tpu_custom_call.1']
    #allocation14 [shape = 'u8[1024]{0}', space=vmem, size = 0x400, scoped, tag = 'input window, operand 9']
    #allocation15 [shape = 'u8[1024]{0}', space=vmem, size = 0x400, scoped, tag = 'output window, operand 0, single buffered']
    %23 = vsyncpa [#allocation4], 0
    %24 = vsyncpa [#allocation7], 0
    %25 = vsyncpa [#allocation10], 0
    %s26 = scalar_lea.sflag [#allocation10], 1
    %27 = vsyncpa %s26, 0
    %28 = vsyncpa [#allocation13], 0
    %s29 = scalar_lea.sflag [#allocation13], 1
    %30 = vsyncpa %s29, 0
    %31 = vsyncpa [#allocation5], 0
    loop: start=0, step=1, limit=4
    $region2: #{tpu_custom_call.1} parent=1 // loop_pre_header
      _
    $region3: #{tpu_custom_call.1} parent=1 // loop_header
      %s33 = sphi 0, %s37
      %p34 = scmp.ge.s32.totalorder %s33, 4
      %s41 = sphi 0, %s41
      %s43 = sphi 0, %s41
      %s44 = sphi 0, %s43
      %s58 = sphi 0, %s44
      %s62 = sphi 0, %s62
      %s64 = sphi 0, %s62
      %s65 = sphi 0, %s64
      %s79 = sphi 0, %s65
      %s83 = sphi 0, %s83
      %s85 = sphi 0, %s83
      %s86 = sphi 0, %s85
      %s100 = sphi 0, %s86
      %s104 = sphi 0, %s104
      %s106 = sphi 0, %s104
      %s107 = sphi 0, %s106
      %s121 = sphi 0, %s107
      %s127 = sphi 0, %s129
      %s130 = sphi 0, %s127
      %s131 = sphi 0, %s130
      %s147 = sphi 0, %s131
      %s153 = sphi 0, %s155
      %s156 = sphi 0, %s153
      %s157 = sphi 0, %s156
      %s173 = sphi 0, %s157
      %s179 = sphi 0, %s181
      %s182 = sphi 0, %s179
      %s183 = sphi 0, %s182
      %s199 = sphi 0, %s183
      %s205 = sphi 0, %s207
      %s208 = sphi 0, %s205
      %s209 = sphi 0, %s208
      %s225 = sphi 0, %s209
      %s231 = sphi 0, %s233
      %s234 = sphi 0, %s231
      %s235 = sphi 0, %s234
      %s251 = sphi 0, %s235
      %s257 = sphi 0, %s259
      %s260 = sphi 0, %s257
      %s261 = sphi 0, %s260
      %s277 = sphi 0, %s261
      %s283 = sphi 0, %s285
      %s286 = sphi 0, %s283
      %s287 = sphi 0, %s286
      %s303 = sphi 0, %s287
      %s309 = sphi 0, %s311
      %s312 = sphi 0, %s309
      %s313 = sphi 0, %s312
      %s329 = sphi 0, %s313
      %s335 = sphi 0, %s337
      %s338 = sphi 0, %s335
      %s339 = sphi 0, %s338
      %s355 = sphi 0, %s339
      %s361 = sphi 0, %s363
      %s364 = sphi 0, %s361
      %s365 = sphi 0, %s364
      %s381 = sphi 0, %s365
      %s387 = sphi 0, %s389
      %s390 = sphi 0, %s387
      %s391 = sphi 0, %s390
      %s407 = sphi 0, %s391
      %s413 = sphi 0, %s415
      %s416 = sphi 0, %s413
      %s417 = sphi 0, %s416
      %s433 = sphi 0, %s417
      %s437 = sphi 0, %s437
      %s439 = sphi 0, %s437
      %s440 = sphi 0, %s439
      %s454 = sphi 0, %s440
      %s458 = sphi 0, %s458
      %s460 = sphi 0, %s458
      %s461 = sphi 0, %s460
      %s475 = sphi 0, %s461
      %s479 = sphi 0, %s479
      %s481 = sphi 0, %s479
      %s482 = sphi 0, %s481
      %s496 = sphi 0, %s482
    $region4: #{tpu_custom_call.1} parent=1 // loop_header_branch
      %36 = sbr.rel (%p34) target = $region8
    $region5: #{tpu_custom_call.1} parent=1 // loop_body
      %s38 = ssub.s32 %s33, 1
      %s39 = ssub.s32 %s33, 2
      %s40 = sadd.s32 %s33, 1
      %s42 = sadd.s32 %s41, 1
      %p45 = scmp.eq.s32.totalorder %s33, 1
      %p46 = scmp.ne.s32.totalorder %s41, %s43
      %p47 = scmp.eq.s32.totalorder %s33, 0
      %p48 = por %p46, %p47
      %p49 = scmp.ne.s32.totalorder %s41, %s43
      %p50 = scmp.eq.s32.totalorder %s38, 1
      %p51 = por %p49, %p50
      %p52 = scmp.ne.s32.totalorder %s43, %s44
      %p53 = scmp.eq.s32.totalorder %s38, 0
      %p54 = por %p52, %p53
      %p55 = scmp.ne.s32.totalorder %s43, %s44
      %p56 = scmp.eq.s32.totalorder %s39, 1
      %p57 = por %p55, %p56
      %p59 = scmp.ne.s32.totalorder %s44, %s58
      %p60 = scmp.eq.s32.totalorder %s39, 0
      %p61 = por %p59, %p60
      %s63 = sadd.s32 %s62, 1
      %p66 = scmp.eq.s32.totalorder %s33, 1
      %p67 = scmp.ne.s32.totalorder %s62, %s64
      %p68 = scmp.eq.s32.totalorder %s33, 0
      %p69 = por %p67, %p68
      %p70 = scmp.ne.s32.totalorder %s62, %s64
      %p71 = scmp.eq.s32.totalorder %s38, 1
      %p72 = por %p70, %p71
      %p73 = scmp.ne.s32.totalorder %s64, %s65
      %p74 = scmp.eq.s32.totalorder %s38, 0
      %p75 = por %p73, %p74
      %p76 = scmp.ne.s32.totalorder %s64, %s65
      %p77 = scmp.eq.s32.totalorder %s39, 1
      %p78 = por %p76, %p77
      %p80 = scmp.ne.s32.totalorder %s65, %s79
      %p81 = scmp.eq.s32.totalorder %s39, 0
      %p82 = por %p80, %p81
      %s84 = sadd.s32 %s83, 1
      %p87 = scmp.eq.s32.totalorder %s33, 1
      %p88 = scmp.ne.s32.totalorder %s83, %s85
      %p89 = scmp.eq.s32.totalorder %s33, 0
      %p90 = por %p88, %p89
      %p91 = scmp.ne.s32.totalorder %s83, %s85
      %p92 = scmp.eq.s32.totalorder %s38, 1
      %p93 = por %p91, %p92
      %p94 = scmp.ne.s32.totalorder %s85, %s86
      %p95 = scmp.eq.s32.totalorder %s38, 0
      %p96 = por %p94, %p95
      %p97 = scmp.ne.s32.totalorder %s85, %s86
      %p98 = scmp.eq.s32.totalorder %s39, 1
      %p99 = por %p97, %p98
      %p101 = scmp.ne.s32.totalorder %s86, %s100
      %p102 = scmp.eq.s32.totalorder %s39, 0
      %p103 = por %p101, %p102
      %s105 = sadd.s32 %s104, 1
      %p108 = scmp.eq.s32.totalorder %s33, 1
      %p109 = scmp.ne.s32.totalorder %s104, %s106
      %p110 = scmp.eq.s32.totalorder %s33, 0
      %p111 = por %p109, %p110
      %p112 = scmp.ne.s32.totalorder %s104, %s106
      %p113 = scmp.eq.s32.totalorder %s38, 1
      %p114 = por %p112, %p113
      %p115 = scmp.ne.s32.totalorder %s106, %s107
      %p116 = scmp.eq.s32.totalorder %s38, 0
      %p117 = por %p115, %p116
      %p118 = scmp.ne.s32.totalorder %s106, %s107
      %p119 = scmp.eq.s32.totalorder %s39, 1
      %p120 = por %p118, %p119
      %p122 = scmp.ne.s32.totalorder %s107, %s121
      %p123 = scmp.eq.s32.totalorder %s39, 0
      %p124 = por %p122, %p123
      %s125 = ssub.s32 %s33, %s40
      %p126 = scmp.eq.s32.totalorder %s125, 0
      %s128 = sadd.s32 %s127, 1
      %s129 = scalar_select %p126, %s127, %s128
      %p132 = pneg %p126
      %p133 = scmp.eq.s32.totalorder %s33, 1
      %p134 = por %p132, %p133
      %p135 = scmp.ne.s32.totalorder %s127, %s130
      %p136 = scmp.eq.s32.totalorder %s33, 0
      %p137 = por %p135, %p136
      %p138 = scmp.ne.s32.totalorder %s127, %s130
      %p139 = scmp.eq.s32.totalorder %s38, 1
      %p140 = por %p138, %p139
      %p141 = scmp.ne.s32.totalorder %s130, %s131
      %p142 = scmp.eq.s32.totalorder %s38, 0
      %p143 = por %p141, %p142
      %p144 = scmp.ne.s32.totalorder %s130, %s131
      %p145 = scmp.eq.s32.totalorder %s39, 1
      %p146 = por %p144, %p145
      %p148 = scmp.ne.s32.totalorder %s131, %s147
      %p149 = scmp.eq.s32.totalorder %s39, 0
      %p150 = por %p148, %p149
      %s151 = ssub.s32 %s33, %s40
      %p152 = scmp.eq.s32.totalorder %s151, 0
      %s154 = sadd.s32 %s153, 1
      %s155 = scalar_select %p152, %s153, %s154
      %p158 = pneg %p152
      %p159 = scmp.eq.s32.totalorder %s33, 1
      %p160 = por %p158, %p159
      %p161 = scmp.ne.s32.totalorder %s153, %s156
      %p162 = scmp.eq.s32.totalorder %s33, 0
      %p163 = por %p161, %p162
      %p164 = scmp.ne.s32.totalorder %s153, %s156
      %p165 = scmp.eq.s32.totalorder %s38, 1
      %p166 = por %p164, %p165
      %p167 = scmp.ne.s32.totalorder %s156, %s157
      %p168 = scmp.eq.s32.totalorder %s38, 0
      %p169 = por %p167, %p168
      %p170 = scmp.ne.s32.totalorder %s156, %s157
      %p171 = scmp.eq.s32.totalorder %s39, 1
      %p172 = por %p170, %p171
      %p174 = scmp.ne.s32.totalorder %s157, %s173
      %p175 = scmp.eq.s32.totalorder %s39, 0
      %p176 = por %p174, %p175
      %s177 = ssub.s32 %s33, %s40
      %p178 = scmp.eq.s32.totalorder %s177, 0
      %s180 = sadd.s32 %s179, 1
      %s181 = scalar_select %p178, %s179, %s180
      %p184 = pneg %p178
      %p185 = scmp.eq.s32.totalorder %s33, 1
      %p186 = por %p184, %p185
      %p187 = scmp.ne.s32.totalorder %s179, %s182
      %p188 = scmp.eq.s32.totalorder %s33, 0
      %p189 = por %p187, %p188
      %p190 = scmp.ne.s32.totalorder %s179, %s182
      %p191 = scmp.eq.s32.totalorder %s38, 1
      %p192 = por %p190, %p191
      %p193 = scmp.ne.s32.totalorder %s182, %s183
      %p194 = scmp.eq.s32.totalorder %s38, 0
      %p195 = por %p193, %p194
      %p196 = scmp.ne.s32.totalorder %s182, %s183
      %p197 = scmp.eq.s32.totalorder %s39, 1
      %p198 = por %p196, %p197
      %p200 = scmp.ne.s32.totalorder %s183, %s199
      %p201 = scmp.eq.s32.totalorder %s39, 0
      %p202 = por %p200, %p201
      %s203 = ssub.s32 %s33, %s40
      %p204 = scmp.eq.s32.totalorder %s203, 0
      %s206 = sadd.s32 %s205, 1
      %s207 = scalar_select %p204, %s205, %s206
      %p210 = pneg %p204
      %p211 = scmp.eq.s32.totalorder %s33, 1
      %p212 = por %p210, %p211
      %p213 = scmp.ne.s32.totalorder %s205, %s208
      %p214 = scmp.eq.s32.totalorder %s33, 0
      %p215 = por %p213, %p214
      %p216 = scmp.ne.s32.totalorder %s205, %s208
      %p217 = scmp.eq.s32.totalorder %s38, 1
      %p218 = por %p216, %p217
      %p219 = scmp.ne.s32.totalorder %s208, %s209
      %p220 = scmp.eq.s32.totalorder %s38, 0
      %p221 = por %p219, %p220
      %p222 = scmp.ne.s32.totalorder %s208, %s209
      %p223 = scmp.eq.s32.totalorder %s39, 1
      %p224 = por %p222, %p223
      %p226 = scmp.ne.s32.totalorder %s209, %s225
      %p227 = scmp.eq.s32.totalorder %s39, 0
      %p228 = por %p226, %p227
      %s229 = ssub.s32 %s33, %s40
      %p230 = scmp.eq.s32.totalorder %s229, 0
      %s232 = sadd.s32 %s231, 1
      %s233 = scalar_select %p230, %s231, %s232
      %p236 = pneg %p230
      %p237 = scmp.eq.s32.totalorder %s33, 1
      %p238 = por %p236, %p237
      %p239 = scmp.ne.s32.totalorder %s231, %s234
      %p240 = scmp.eq.s32.totalorder %s33, 0
      %p241 = por %p239, %p240
      %p242 = scmp.ne.s32.totalorder %s231, %s234
      %p243 = scmp.eq.s32.totalorder %s38, 1
      %p244 = por %p242, %p243
      %p245 = scmp.ne.s32.totalorder %s234, %s235
      %p246 = scmp.eq.s32.totalorder %s38, 0
      %p247 = por %p245, %p246
      %p248 = scmp.ne.s32.totalorder %s234, %s235
      %p249 = scmp.eq.s32.totalorder %s39, 1
      %p250 = por %p248, %p249
      %p252 = scmp.ne.s32.totalorder %s235, %s251
      %p253 = scmp.eq.s32.totalorder %s39, 0
      %p254 = por %p252, %p253
      %s255 = ssub.s32 %s33, %s40
      %p256 = scmp.eq.s32.totalorder %s255, 0
      %s258 = sadd.s32 %s257, 1
      %s259 = scalar_select %p256, %s257, %s258
      %p262 = pneg %p256
      %p263 = scmp.eq.s32.totalorder %s33, 1
      %p264 = por %p262, %p263
      %p265 = scmp.ne.s32.totalorder %s257, %s260
      %p266 = scmp.eq.s32.totalorder %s33, 0
      %p267 = por %p265, %p266
      %p268 = scmp.ne.s32.totalorder %s257, %s260
      %p269 = scmp.eq.s32.totalorder %s38, 1
      %p270 = por %p268, %p269
      %p271 = scmp.ne.s32.totalorder %s260, %s261
      %p272 = scmp.eq.s32.totalorder %s38, 0
      %p273 = por %p271, %p272
      %p274 = scmp.ne.s32.totalorder %s260, %s261
      %p275 = scmp.eq.s32.totalorder %s39, 1
      %p276 = por %p274, %p275
      %p278 = scmp.ne.s32.totalorder %s261, %s277
      %p279 = scmp.eq.s32.totalorder %s39, 0
      %p280 = por %p278, %p279
      %s281 = ssub.s32 %s33, %s40
      %p282 = scmp.eq.s32.totalorder %s281, 0
      %s284 = sadd.s32 %s283, 1
      %s285 = scalar_select %p282, %s283, %s284
      %p288 = pneg %p282
      %p289 = scmp.eq.s32.totalorder %s33, 1
      %p290 = por %p288, %p289
      %p291 = scmp.ne.s32.totalorder %s283, %s286
      %p292 = scmp.eq.s32.totalorder %s33, 0
      %p293 = por %p291, %p292
      %p294 = scmp.ne.s32.totalorder %s283, %s286
      %p295 = scmp.eq.s32.totalorder %s38, 1
      %p296 = por %p294, %p295
      %p297 = scmp.ne.s32.totalorder %s286, %s287
      %p298 = scmp.eq.s32.totalorder %s38, 0
      %p299 = por %p297, %p298
      %p300 = scmp.ne.s32.totalorder %s286, %s287
      %p301 = scmp.eq.s32.totalorder %s39, 1
      %p302 = por %p300, %p301
      %p304 = scmp.ne.s32.totalorder %s287, %s303
      %p305 = scmp.eq.s32.totalorder %s39, 0
      %p306 = por %p304, %p305
      %s307 = ssub.s32 %s33, %s40
      %p308 = scmp.eq.s32.totalorder %s307, 0
      %s310 = sadd.s32 %s309, 1
      %s311 = scalar_select %p308, %s309, %s310
      %p314 = pneg %p308
      %p315 = scmp.eq.s32.totalorder %s33, 1
      %p316 = por %p314, %p315
      %p317 = scmp.ne.s32.totalorder %s309, %s312
      %p318 = scmp.eq.s32.totalorder %s33, 0
      %p319 = por %p317, %p318
      %p320 = scmp.ne.s32.totalorder %s309, %s312
      %p321 = scmp.eq.s32.totalorder %s38, 1
      %p322 = por %p320, %p321
      %p323 = scmp.ne.s32.totalorder %s312, %s313
      %p324 = scmp.eq.s32.totalorder %s38, 0
      %p325 = por %p323, %p324
      %p326 = scmp.ne.s32.totalorder %s312, %s313
      %p327 = scmp.eq.s32.totalorder %s39, 1
      %p328 = por %p326, %p327
      %p330 = scmp.ne.s32.totalorder %s313, %s329
      %p331 = scmp.eq.s32.totalorder %s39, 0
      %p332 = por %p330, %p331
      %s333 = ssub.s32 %s33, %s40
      %p334 = scmp.eq.s32.totalorder %s333, 0
      %s336 = sadd.s32 %s335, 1
      %s337 = scalar_select %p334, %s335, %s336
      %p340 = pneg %p334
      %p341 = scmp.eq.s32.totalorder %s33, 1
      %p342 = por %p340, %p341
      %p343 = scmp.ne.s32.totalorder %s335, %s338
      %p344 = scmp.eq.s32.totalorder %s33, 0
      %p345 = por %p343, %p344
      %p346 = scmp.ne.s32.totalorder %s335, %s338
      %p347 = scmp.eq.s32.totalorder %s38, 1
      %p348 = por %p346, %p347
      %p349 = scmp.ne.s32.totalorder %s338, %s339
      %p350 = scmp.eq.s32.totalorder %s38, 0
      %p351 = por %p349, %p350
      %p352 = scmp.ne.s32.totalorder %s338, %s339
      %p353 = scmp.eq.s32.totalorder %s39, 1
      %p354 = por %p352, %p353
      %p356 = scmp.ne.s32.totalorder %s339, %s355
      %p357 = scmp.eq.s32.totalorder %s39, 0
      %p358 = por %p356, %p357
      %s359 = ssub.s32 %s33, %s40
      %p360 = scmp.eq.s32.totalorder %s359, 0
      %s362 = sadd.s32 %s361, 1
      %s363 = scalar_select %p360, %s361, %s362
      %p366 = pneg %p360
      %p367 = scmp.eq.s32.totalorder %s33, 1
      %p368 = por %p366, %p367
      %p369 = scmp.ne.s32.totalorder %s361, %s364
      %p370 = scmp.eq.s32.totalorder %s33, 0
      %p371 = por %p369, %p370
      %p372 = scmp.ne.s32.totalorder %s361, %s364
      %p373 = scmp.eq.s32.totalorder %s38, 1
      %p374 = por %p372, %p373
      %p375 = scmp.ne.s32.totalorder %s364, %s365
      %p376 = scmp.eq.s32.totalorder %s38, 0
      %p377 = por %p375, %p376
      %p378 = scmp.ne.s32.totalorder %s364, %s365
      %p379 = scmp.eq.s32.totalorder %s39, 1
      %p380 = por %p378, %p379
      %p382 = scmp.ne.s32.totalorder %s365, %s381
      %p383 = scmp.eq.s32.totalorder %s39, 0
      %p384 = por %p382, %p383
      %s385 = ssub.s32 %s33, %s40
      %p386 = scmp.eq.s32.totalorder %s385, 0
      %s388 = sadd.s32 %s387, 1
      %s389 = scalar_select %p386, %s387, %s388
      %p392 = pneg %p386
      %p393 = scmp.eq.s32.totalorder %s33, 1
      %p394 = por %p392, %p393
      %p395 = scmp.ne.s32.totalorder %s387, %s390
      %p396 = scmp.eq.s32.totalorder %s33, 0
      %p397 = por %p395, %p396
      %p398 = scmp.ne.s32.totalorder %s387, %s390
      %p399 = scmp.eq.s32.totalorder %s38, 1
      %p400 = por %p398, %p399
      %p401 = scmp.ne.s32.totalorder %s390, %s391
      %p402 = scmp.eq.s32.totalorder %s38, 0
      %p403 = por %p401, %p402
      %p404 = scmp.ne.s32.totalorder %s390, %s391
      %p405 = scmp.eq.s32.totalorder %s39, 1
      %p406 = por %p404, %p405
      %p408 = scmp.ne.s32.totalorder %s391, %s407
      %p409 = scmp.eq.s32.totalorder %s39, 0
      %p410 = por %p408, %p409
      %s411 = ssub.s32 %s33, %s40
      %p412 = scmp.eq.s32.totalorder %s411, 0
      %s414 = sadd.s32 %s413, 1
      %s415 = scalar_select %p412, %s413, %s414
      %p418 = pneg %p412
      %p419 = scmp.eq.s32.totalorder %s33, 1
      %p420 = por %p418, %p419
      %p421 = scmp.ne.s32.totalorder %s413, %s416
      %p422 = scmp.eq.s32.totalorder %s33, 0
      %p423 = por %p421, %p422
      %p424 = scmp.ne.s32.totalorder %s413, %s416
      %p425 = scmp.eq.s32.totalorder %s38, 1
      %p426 = por %p424, %p425
      %p427 = scmp.ne.s32.totalorder %s416, %s417
      %p428 = scmp.eq.s32.totalorder %s38, 0
      %p429 = por %p427, %p428
      %p430 = scmp.ne.s32.totalorder %s416, %s417
      %p431 = scmp.eq.s32.totalorder %s39, 1
      %p432 = por %p430, %p431
      %p434 = scmp.ne.s32.totalorder %s417, %s433
      %p435 = scmp.eq.s32.totalorder %s39, 0
      %p436 = por %p434, %p435
      %s438 = sadd.s32 %s437, 1
      %p441 = scmp.eq.s32.totalorder %s33, 1
      %p442 = scmp.ne.s32.totalorder %s437, %s439
      %p443 = scmp.eq.s32.totalorder %s33, 0
      %p444 = por %p442, %p443
      %p445 = scmp.ne.s32.totalorder %s437, %s439
      %p446 = scmp.eq.s32.totalorder %s38, 1
      %p447 = por %p445, %p446
      %p448 = scmp.ne.s32.totalorder %s439, %s440
      %p449 = scmp.eq.s32.totalorder %s38, 0
      %p450 = por %p448, %p449
      %p451 = scmp.ne.s32.totalorder %s439, %s440
      %p452 = scmp.eq.s32.totalorder %s39, 1
      %p453 = por %p451, %p452
      %p455 = scmp.ne.s32.totalorder %s440, %s454
      %p456 = scmp.eq.s32.totalorder %s39, 0
      %p457 = por %p455, %p456
      %s459 = sadd.s32 %s458, 1
      %p462 = scmp.eq.s32.totalorder %s33, 1
      %p463 = scmp.ne.s32.totalorder %s458, %s460
      %p464 = scmp.eq.s32.totalorder %s33, 0
      %p465 = por %p463, %p464
      %p466 = scmp.ne.s32.totalorder %s458, %s460
      %p467 = scmp.eq.s32.totalorder %s38, 1
      %p468 = por %p466, %p467
      %p469 = scmp.ne.s32.totalorder %s460, %s461
      %p470 = scmp.eq.s32.totalorder %s38, 0
      %p471 = por %p469, %p470
      %p472 = scmp.ne.s32.totalorder %s460, %s461
      %p473 = scmp.eq.s32.totalorder %s39, 1
      %p474 = por %p472, %p473
      %p476 = scmp.ne.s32.totalorder %s461, %s475
      %p477 = scmp.eq.s32.totalorder %s39, 0
      %p478 = por %p476, %p477
      %s480 = sadd.s32 %s479, 1
      %p483 = scmp.eq.s32.totalorder %s33, 1
      %p484 = scmp.ne.s32.totalorder %s479, %s481
      %p485 = scmp.eq.s32.totalorder %s33, 0
      %p486 = por %p484, %p485
      %p487 = scmp.ne.s32.totalorder %s479, %s481
      %p488 = scmp.eq.s32.totalorder %s38, 1
      %p489 = por %p487, %p488
      %p490 = scmp.ne.s32.totalorder %s481, %s482
      %p491 = scmp.eq.s32.totalorder %s38, 0
      %p492 = por %p490, %p491
      %p493 = scmp.ne.s32.totalorder %s481, %s482
      %p494 = scmp.eq.s32.totalorder %s39, 1
      %p495 = por %p493, %p494
      %p497 = scmp.ne.s32.totalorder %s482, %s496
      %p498 = scmp.eq.s32.totalorder %s39, 0
      %p499 = por %p497, %p498
      %p500 = scmp.le.s32.totalorder 1, %s33
      %p501 = scmp.lt.s32.totalorder %s33, 3
      %p502 = pnand %p500, %p501
      %p503 = pneg %p502
      // Predicated region
      $region9: #{tpu_custom_call.1} parent=5 // pred_check
        _
      $region10: #{tpu_custom_call.1} parent=5 // pred_check_branch
        %505 = sbr.rel (%p502) target = $region12
      $region11: #{tpu_custom_call.1} parent=5 // pred_region
        %s506 = ssub.s32 %s33, 1
        // Predicated region
        $region13: #{tpu_custom_call.1} parent=11 // pred_check
          %p507 = pneg %p54
        $region14: #{tpu_custom_call.1} parent=11 // pred_check_branch
          %509 = sbr.rel (%p507) target = $region16
        $region15: #{tpu_custom_call.1} parent=11 // pred_region
          %s511 = ssub.s32 256, 256
          %512 = vsyncadd [#allocation4], %s511
          %s513 = sshll.u32 [#allocation3], 4
          %s514 = int_to_ptr.vmem [resolvable:$true] %s513
          %519 = dma.hbm_to_vmem [thread:$0]  %s0, 256, %s514, [#allocation4], 128, 128, 8
        $region16: #{tpu_custom_call.1} parent=11 // pred_fallthru
          _
        // Predicated region
        $region17: #{tpu_custom_call.1} parent=11 // pred_check
          %p520 = pneg %p75
        $region18: #{tpu_custom_call.1} parent=11 // pred_check_branch
          %522 = sbr.rel (%p520) target = $region20
        $region19: #{tpu_custom_call.1} parent=11 // pred_region
          _
        $region20: #{tpu_custom_call.1} parent=11 // pred_fallthru
          _
        // Predicated region
        $region21: #{tpu_custom_call.1} parent=11 // pred_check
          %p523 = pneg %p96
        $region22: #{tpu_custom_call.1} parent=11 // pred_check_branch
          %525 = sbr.rel (%p523) target = $region24
        $region23: #{tpu_custom_call.1} parent=11 // pred_region
          %s527 = ssub.s32 16, 16
          %528 = vsyncadd [#allocation7], %s527
          %s530 = sshll.u32 [#allocation6], 4
          %s531 = int_to_ptr.vmem [resolvable:$true] %s530
          %533 = dma.hbm_to_vmem [thread:$0]  %s2, 16, %s531, [#allocation7]
        $region24: #{tpu_custom_call.1} parent=11 // pred_fallthru
          _
        // Predicated region
        $region25: #{tpu_custom_call.1} parent=11 // pred_check
          %p534 = pneg %p117
        $region26: #{tpu_custom_call.1} parent=11 // pred_check_branch
          %536 = sbr.rel (%p534) target = $region28
        $region27: #{tpu_custom_call.1} parent=11 // pred_region
          %s538 = ssub.s32 16, 16
          %539 = vsyncadd [#allocation7], %s538
          %s541 = sshll.u32 [#allocation8], 4
          %s542 = int_to_ptr.vmem [resolvable:$true] %s541
          %544 = dma.hbm_to_vmem [thread:$0]  %s3, 16, %s542, [#allocation7]
        $region28: #{tpu_custom_call.1} parent=11 // pred_fallthru
          _
        // Predicated region
        $region29: #{tpu_custom_call.1} parent=11 // pred_check
          %p545 = pneg %p450
        $region30: #{tpu_custom_call.1} parent=11 // pred_check_branch
          %547 = sbr.rel (%p545) target = $region32
        $region31: #{tpu_custom_call.1} parent=11 // pred_region
          _
        $region32: #{tpu_custom_call.1} parent=11 // pred_fallthru
          _
        // Predicated region
        $region33: #{tpu_custom_call.1} parent=11 // pred_check
          %p548 = pneg %p471
        $region34: #{tpu_custom_call.1} parent=11 // pred_check_branch
          %550 = sbr.rel (%p548) target = $region36
        $region35: #{tpu_custom_call.1} parent=11 // pred_region
          _
        $region36: #{tpu_custom_call.1} parent=11 // pred_fallthru
          _
      $region12: #{tpu_custom_call.1} parent=5 // pred_fallthru
        _
      %p551 = scmp.lt.s32.totalorder %s33, 2
      // Predicated region
      $region37: #{tpu_custom_call.1} parent=5 // pred_check
        %p552 = pneg %p551
      $region38: #{tpu_custom_call.1} parent=5 // pred_check_branch
        %554 = sbr.rel (%p552) target = $region40
      $region39: #{tpu_custom_call.1} parent=5 // pred_region
        // Predicated region
        $region41: #{tpu_custom_call.1} parent=39 // pred_check
          %p555 = pneg %p137
        $region42: #{tpu_custom_call.1} parent=39 // pred_check_branch
          %557 = sbr.rel (%p555) target = $region44
        $region43: #{tpu_custom_call.1} parent=39 // pred_region
          %p558 = scmp.lt.s32.totalorder %s33, 1
          %s559 = scalar_select %p558, %s33, 1
          %s560 = smul.addr %s559, 4
          %s561 = smul.addr %s560, 8
          %s562 = scalar_lea.vmem %s4, %s561
        $region44: #{tpu_custom_call.1} parent=39 // pred_fallthru
          _
        // Predicated region
        $region45: #{tpu_custom_call.1} parent=39 // pred_check
          %p563 = pneg %p163
        $region46: #{tpu_custom_call.1} parent=39 // pred_check_branch
          %565 = sbr.rel (%p563) target = $region48
        $region47: #{tpu_custom_call.1} parent=39 // pred_region
          %s566 = sand.u32 %s33, 1
          %s567 = scalar_lea.sflag [#allocation10], %s566
          %s568 = sand.u32 %s153, 1
          %s569 = scalar_lea.vmem [#allocation9], %s568
          %s571 = ssub.s32 16, 16
          %572 = vsyncadd %s567, %s571
          %s573 = smul.addr %s33, 16
          %s574 = scalar_lea.hbm %s5, %s573
          %s576 = sshll.u32 %s569, 4
          %s577 = int_to_ptr.vmem [resolvable:$true] %s576
          %579 = dma.hbm_to_vmem [thread:$0]  %s574, 16, %s577, %s567
        $region48: #{tpu_custom_call.1} parent=39 // pred_fallthru
          _
        // Predicated region
        $region49: #{tpu_custom_call.1} parent=39 // pred_check
          %p580 = pneg %p189
        $region50: #{tpu_custom_call.1} parent=39 // pred_check_branch
          %582 = sbr.rel (%p580) target = $region52
        $region51: #{tpu_custom_call.1} parent=39 // pred_region
          %p583 = scmp.lt.s32.totalorder %s33, 1
          %s584 = scalar_select %p583, %s33, 1
          %s585 = smul.addr %s584, 4
          %s586 = smul.addr %s585, 8
          %s587 = scalar_lea.vmem %s6, %s586
        $region52: #{tpu_custom_call.1} parent=39 // pred_fallthru
          _
        // Predicated region
        $region53: #{tpu_custom_call.1} parent=39 // pred_check
          %p588 = pneg %p215
        $region54: #{tpu_custom_call.1} parent=39 // pred_check_branch
          %590 = sbr.rel (%p588) target = $region56
        $region55: #{tpu_custom_call.1} parent=39 // pred_region
          %s591 = sand.u32 %s33, 1
          %s592 = scalar_lea.sflag [#allocation10], %s591
          %s593 = sand.u32 %s205, 1
          %s594 = scalar_lea.vmem [#allocation11], %s593
          %s596 = ssub.s32 16, 16
          %597 = vsyncadd %s592, %s596
          %s598 = smul.addr %s33, 16
          %s599 = scalar_lea.hbm %s7, %s598
          %s601 = sshll.u32 %s594, 4
          %s602 = int_to_ptr.vmem [resolvable:$true] %s601
          %604 = dma.hbm_to_vmem [thread:$0]  %s599, 16, %s602, %s592
        $region56: #{tpu_custom_call.1} parent=39 // pred_fallthru
          _
        // Predicated region
        $region57: #{tpu_custom_call.1} parent=39 // pred_check
          %p605 = pneg %p241
        $region58: #{tpu_custom_call.1} parent=39 // pred_check_branch
          %607 = sbr.rel (%p605) target = $region60
        $region59: #{tpu_custom_call.1} parent=39 // pred_region
          %s608 = sand.u32 %s33, 1
          %s609 = scalar_lea.sflag [#allocation13], %s608
          %s610 = sand.u32 %s231, 1
          %s611 = scalar_lea.vmem [#allocation12], %s610
          %s613 = ssub.s32 16, 16
          %614 = vsyncadd %s609, %s613
          %s615 = smul.addr %s33, 16
          %s616 = scalar_lea.hbm %s8, %s615
          %s618 = sshll.u32 %s611, 4
          %s619 = int_to_ptr.vmem [resolvable:$true] %s618
          %621 = dma.hbm_to_vmem [thread:$0]  %s616, 16, %s619, %s609
        $region60: #{tpu_custom_call.1} parent=39 // pred_fallthru
          _
        // Predicated region
        $region61: #{tpu_custom_call.1} parent=39 // pred_check
          %p622 = pneg %p267
        $region62: #{tpu_custom_call.1} parent=39 // pred_check_branch
          %624 = sbr.rel (%p622) target = $region64
        $region63: #{tpu_custom_call.1} parent=39 // pred_region
          %s625 = sand.u32 %s33, 1
          %s626 = scalar_lea.sflag [#allocation13], %s625
          %s627 = sand.u32 %s257, 1
          %s628 = scalar_lea.vmem [#allocation14], %s627
          %s630 = ssub.s32 16, 16
          %631 = vsyncadd %s626, %s630
          %s632 = smul.addr %s33, 16
          %s633 = scalar_lea.hbm %s9, %s632
          %s635 = sshll.u32 %s628, 4
          %s636 = int_to_ptr.vmem [resolvable:$true] %s635
          %638 = dma.hbm_to_vmem [thread:$0]  %s633, 16, %s636, %s626
        $region64: #{tpu_custom_call.1} parent=39 // pred_fallthru
          _
        // Predicated region
        $region65: #{tpu_custom_call.1} parent=39 // pred_check
          %p639 = pneg %p293
        $region66: #{tpu_custom_call.1} parent=39 // pred_check_branch
          %641 = sbr.rel (%p639) target = $region68
        $region67: #{tpu_custom_call.1} parent=39 // pred_region
          %p642 = scmp.lt.s32.totalorder %s33, 1
          %s643 = scalar_select %p642, %s33, 1
          %s644 = smul.addr %s643, 4
          %s645 = smul.addr %s644, 8
          %s646 = scalar_lea.vmem %s10, %s645
        $region68: #{tpu_custom_call.1} parent=39 // pred_fallthru
          _
        // Predicated region
        $region69: #{tpu_custom_call.1} parent=39 // pred_check
          %p647 = pneg %p319
        $region70: #{tpu_custom_call.1} parent=39 // pred_check_branch
          %649 = sbr.rel (%p647) target = $region72
        $region71: #{tpu_custom_call.1} parent=39 // pred_region
          %p650 = scmp.lt.s32.totalorder %s33, 1
          %s651 = scalar_select %p650, %s33, 1
          %s652 = scalar_lea.vmem %s11, %s651
        $region72: #{tpu_custom_call.1} parent=39 // pred_fallthru
          _
        // Predicated region
        $region73: #{tpu_custom_call.1} parent=39 // pred_check
          %p653 = pneg %p345
        $region74: #{tpu_custom_call.1} parent=39 // pred_check_branch
          %655 = sbr.rel (%p653) target = $region76
        $region75: #{tpu_custom_call.1} parent=39 // pred_region
          %p656 = scmp.lt.s32.totalorder %s33, 1
          %s657 = scalar_select %p656, %s33, 1
          %s658 = smul.addr %s657, 8
          %s659 = smul.addr %s658, 8
          %s660 = scalar_lea.vmem %s12, %s659
        $region76: #{tpu_custom_call.1} parent=39 // pred_fallthru
          _
        // Predicated region
        $region77: #{tpu_custom_call.1} parent=39 // pred_check
          %p661 = pneg %p371
        $region78: #{tpu_custom_call.1} parent=39 // pred_check_branch
          %663 = sbr.rel (%p661) target = $region80
        $region79: #{tpu_custom_call.1} parent=39 // pred_region
          %p664 = scmp.lt.s32.totalorder %s33, 1
          %s665 = scalar_select %p664, %s33, 1
          %s666 = scalar_lea.vmem %s13, %s665
        $region80: #{tpu_custom_call.1} parent=39 // pred_fallthru
          _
        // Predicated region
        $region81: #{tpu_custom_call.1} parent=39 // pred_check
          %p667 = pneg %p397
        $region82: #{tpu_custom_call.1} parent=39 // pred_check_branch
          %669 = sbr.rel (%p667) target = $region84
        $region83: #{tpu_custom_call.1} parent=39 // pred_region
          %p670 = scmp.lt.s32.totalorder %s33, 1
          %s671 = scalar_select %p670, %s33, 1
          %s672 = scalar_lea.vmem %s14, %s671
        $region84: #{tpu_custom_call.1} parent=39 // pred_fallthru
          _
        // Predicated region
        $region85: #{tpu_custom_call.1} parent=39 // pred_check
          %p673 = pneg %p423
        $region86: #{tpu_custom_call.1} parent=39 // pred_check_branch
          %675 = sbr.rel (%p673) target = $region88
        $region87: #{tpu_custom_call.1} parent=39 // pred_region
          %p676 = scmp.lt.s32.totalorder %s33, 1
          %s677 = scalar_select %p676, %s33, 1
          %s678 = scalar_lea.vmem %s15, %s677
        $region88: #{tpu_custom_call.1} parent=39 // pred_fallthru
          _
      $region40: #{tpu_custom_call.1} parent=5 // pred_fallthru
        _
      %p679 = scmp.le.s32.totalorder 1, %s33
      %p680 = scmp.lt.s32.totalorder %s33, 3
      %p681 = pnand %p679, %p680
      %p682 = pneg %p681
      // Predicated region
      $region89: #{tpu_custom_call.1} parent=5 // pred_check
        _
      $region90: #{tpu_custom_call.1} parent=5 // pred_check_branch
        %684 = sbr.rel (%p681) target = $region92
      $region91: #{tpu_custom_call.1} parent=5 // pred_region
        %s685 = ssub.s32 %s33, 1
        // Predicated region
        $region93: #{tpu_custom_call.1} parent=91 // pred_check
          %p686 = pneg %p54
        $region94: #{tpu_custom_call.1} parent=91 // pred_check_branch
          %688 = sbr.rel (%p686) target = $region96
        $region95: #{tpu_custom_call.1} parent=91 // pred_region
          %689 = dma.done [#allocation4], 256
        $region96: #{tpu_custom_call.1} parent=91 // pred_fallthru
          _
        // Predicated region
        $region97: #{tpu_custom_call.1} parent=91 // pred_check
          %p690 = pneg %p96
        $region98: #{tpu_custom_call.1} parent=91 // pred_check_branch
          %692 = sbr.rel (%p690) target = $region100
        $region99: #{tpu_custom_call.1} parent=91 // pred_region
          %693 = dma.done [#allocation7], 16
        $region100: #{tpu_custom_call.1} parent=91 // pred_fallthru
          _
        // Predicated region
        $region101: #{tpu_custom_call.1} parent=91 // pred_check
          %p694 = pneg %p117
        $region102: #{tpu_custom_call.1} parent=91 // pred_check_branch
          %696 = sbr.rel (%p694) target = $region104
        $region103: #{tpu_custom_call.1} parent=91 // pred_region
          %697 = dma.done [#allocation7], 16
        $region104: #{tpu_custom_call.1} parent=91 // pred_fallthru
          _
        %s698 = sand.u32 %s38, 1
        %s699 = scalar_lea.sflag [#allocation10], %s698
        %s700 = sand.u32 %s156, 1
        %s701 = scalar_lea.vmem [#allocation9], %s700
        // Predicated region
        $region105: #{tpu_custom_call.1} parent=91 // pred_check
          %p702 = pneg %p169
        $region106: #{tpu_custom_call.1} parent=91 // pred_check_branch
          %704 = sbr.rel (%p702) target = $region108
        $region107: #{tpu_custom_call.1} parent=91 // pred_region
          %705 = dma.done %s699, 16
        $region108: #{tpu_custom_call.1} parent=91 // pred_fallthru
          _
        %s706 = sand.u32 %s38, 1
        %s707 = scalar_lea.sflag [#allocation10], %s706
        %s708 = sand.u32 %s208, 1
        %s709 = scalar_lea.vmem [#allocation11], %s708
        // Predicated region
        $region109: #{tpu_custom_call.1} parent=91 // pred_check
          %p710 = pneg %p221
        $region110: #{tpu_custom_call.1} parent=91 // pred_check_branch
          %712 = sbr.rel (%p710) target = $region112
        $region111: #{tpu_custom_call.1} parent=91 // pred_region
          %713 = dma.done %s707, 16
        $region112: #{tpu_custom_call.1} parent=91 // pred_fallthru
          _
        %s714 = sand.u32 %s38, 1
        %s715 = scalar_lea.sflag [#allocation13], %s714
        %s716 = sand.u32 %s234, 1
        %s717 = scalar_lea.vmem [#allocation12], %s716
        // Predicated region
        $region113: #{tpu_custom_call.1} parent=91 // pred_check
          %p718 = pneg %p247
        $region114: #{tpu_custom_call.1} parent=91 // pred_check_branch
          %720 = sbr.rel (%p718) target = $region116
        $region115: #{tpu_custom_call.1} parent=91 // pred_region
          %721 = dma.done %s715, 16
        $region116: #{tpu_custom_call.1} parent=91 // pred_fallthru
          _
        %s722 = sand.u32 %s38, 1
        %s723 = scalar_lea.sflag [#allocation13], %s722
        %s724 = sand.u32 %s260, 1
        %s725 = scalar_lea.vmem [#allocation14], %s724
        // Predicated region
        $region117: #{tpu_custom_call.1} parent=91 // pred_check
          %p726 = pneg %p273
        $region118: #{tpu_custom_call.1} parent=91 // pred_check_branch
          %728 = sbr.rel (%p726) target = $region120
        $region119: #{tpu_custom_call.1} parent=91 // pred_region
          %729 = dma.done %s723, 16
        $region120: #{tpu_custom_call.1} parent=91 // pred_fallthru
          _
        %p730 = pneg %p54
        %p731 = pneg %p51
        %p732 = pneg %p75
        %p733 = pneg %p72
        %p734 = pneg %p96
        %p735 = pneg %p93
        %p736 = pneg %p117
        %p737 = pneg %p114
        %p738 = scmp.lt.s32.totalorder %s38, 1
        %s739 = scalar_select %p738, %s38, 1
        %s740 = smul.addr %s739, 4
        %s741 = smul.addr %s740, 8
        %s742 = scalar_lea.vmem %s4, %s741
        %p743 = pneg %p143
        %p744 = pneg %p140
        %s745 = sand.u32 %s38, 1
        %s746 = scalar_lea.sflag [#allocation10], %s745
        %s747 = sand.u32 %s156, 1
        %s748 = scalar_lea.vmem [#allocation9], %s747
        %p749 = pneg %p169
        %p750 = pneg %p166
        %p751 = scmp.lt.s32.totalorder %s38, 1
        %s752 = scalar_select %p751, %s38, 1
        %s753 = smul.addr %s752, 4
        %s754 = smul.addr %s753, 8
        %s755 = scalar_lea.vmem %s6, %s754
        %p756 = pneg %p195
        %p757 = pneg %p192
        %s758 = sand.u32 %s38, 1
        %s759 = scalar_lea.sflag [#allocation10], %s758
        %s760 = sand.u32 %s208, 1
        %s761 = scalar_lea.vmem [#allocation11], %s760
        %p762 = pneg %p221
        %p763 = pneg %p218
        %s764 = sand.u32 %s38, 1
        %s765 = scalar_lea.sflag [#allocation13], %s764
        %s766 = sand.u32 %s234, 1
        %s767 = scalar_lea.vmem [#allocation12], %s766
        %p768 = pneg %p247
        %p769 = pneg %p244
        %s770 = sand.u32 %s38, 1
        %s771 = scalar_lea.sflag [#allocation13], %s770
        %s772 = sand.u32 %s260, 1
        %s773 = scalar_lea.vmem [#allocation14], %s772
        %p774 = pneg %p273
        %p775 = pneg %p270
        %p776 = scmp.lt.s32.totalorder %s38, 1
        %s777 = scalar_select %p776, %s38, 1
        %s778 = smul.addr %s777, 4
        %s779 = smul.addr %s778, 8
        %s780 = scalar_lea.vmem %s10, %s779
        %p781 = pneg %p299
        %p782 = pneg %p296
        %p783 = scmp.lt.s32.totalorder %s38, 1
        %s784 = scalar_select %p783, %s38, 1
        %s785 = scalar_lea.vmem %s11, %s784
        %p786 = pneg %p325
        %p787 = pneg %p322
        %p788 = scmp.lt.s32.totalorder %s38, 1
        %s789 = scalar_select %p788, %s38, 1
        %s790 = smul.addr %s789, 8
        %s791 = smul.addr %s790, 8
        %s792 = scalar_lea.vmem %s12, %s791
        %p793 = pneg %p351
        %p794 = pneg %p348
        %p795 = scmp.lt.s32.totalorder %s38, 1
        %s796 = scalar_select %p795, %s38, 1
        %s797 = scalar_lea.vmem %s13, %s796
        %p798 = pneg %p377
        %p799 = pneg %p374
        %p800 = scmp.lt.s32.totalorder %s38, 1
        %s801 = scalar_select %p800, %s38, 1
        %s802 = scalar_lea.vmem %s14, %s801
        %p803 = pneg %p403
        %p804 = pneg %p400
        %p805 = scmp.lt.s32.totalorder %s38, 1
        %s806 = scalar_select %p805, %s38, 1
        %s807 = scalar_lea.vmem %s15, %s806
        %p808 = pneg %p429
        %p809 = pneg %p426
        %p810 = pneg %p450
        %p811 = pneg %p447
        %p812 = pneg %p471
        %p813 = pneg %p468
        %p814 = pneg %p492
        %p815 = pneg %p489
        %p816 = scmp.lt.s32.totalorder %s38, 1
        %s817 = scalar_select %p816, %s38, 1
        %s818 = smul.addr %s817, 4
        %s819 = smul.addr %s818, 8
        %s820 = scalar_lea.vmem %s4, %s819
        %p821 = scmp.lt.s32.totalorder %s38, 1
        %s822 = scalar_select %p821, %s38, 1
        %s823 = smul.addr %s822, 4
        %s824 = smul.addr %s823, 8
        %s825 = scalar_lea.vmem %s6, %s824
        %p826 = scmp.lt.s32.totalorder %s38, 1
        %s827 = scalar_select %p826, %s38, 1
        %s828 = smul.addr %s827, 4
        %s829 = smul.addr %s828, 8
        %s830 = scalar_lea.vmem %s10, %s829
        %p831 = scmp.lt.s32.totalorder %s38, 1
        %s832 = scalar_select %p831, %s38, 1
        %s833 = scalar_lea.vmem %s11, %s832
        %p834 = scmp.lt.s32.totalorder %s38, 1
        %s835 = scalar_select %p834, %s38, 1
        %s836 = smul.addr %s835, 8
        %s837 = smul.addr %s836, 8
        %s838 = scalar_lea.vmem %s12, %s837
        %p839 = scmp.lt.s32.totalorder %s38, 1
        %s840 = scalar_select %p839, %s38, 1
        %s841 = scalar_lea.vmem %s13, %s840
        %p842 = scmp.lt.s32.totalorder %s38, 1
        %s843 = scalar_select %p842, %s38, 1
        %s844 = scalar_lea.vmem %s14, %s843
        %p845 = scmp.lt.s32.totalorder %s38, 1
        %s846 = scalar_select %p845, %s38, 1
        %s847 = scalar_lea.vmem %s15, %s846
        %p848 = scmp.eq.s32.totalorder %s38, 0
        // Predicated region
        $region121: #{tpu_custom_call.1} parent=91 // pred_check
          %p849 = pneg %p848
        $region122: #{tpu_custom_call.1} parent=91 // pred_check_branch
          %851 = sbr.rel (%p849) target = $region124
        $region123: #{tpu_custom_call.1} parent=91 // pred_region
          %v852 = vld [vmem:[#allocation3] sm:$0xff]
          %v853 = vld [vmem:[#allocation3 + $0x8] sm:$0xff]
          %v854 = vld [vmem:[#allocation6] sm:$0x1]
          %v855 = vld [vmem:[#allocation8] sm:$0x1]
          %vm856 = vcmask 261120
          %v857 = vsel %vm856, %v852, 0.0
          %858 = vadd.xlane.f32.xlu0 %v857
          %v859 = vpop.xlane.xlu0 %858
          %v860 = vsel %vm856, %v853, 0.0
          %861 = vadd.xlane.f32.xlu0 %v860
          %v862 = vpop.xlane.xlu0 %861
          %v863 = vrcp.pop 32.0
          %v864 = vmul.f32 %v859, %v863
          %v865 = vmul.f32 %v862, %v863
          %v866 = vsub.f32 %v852, %v864
          %v867 = vsub.f32 %v853, %v865
          %v868 = vmul.f32 %v866, %v866
          %v869 = vmul.f32 %v867, %v867
          %v870 = vsel %vm856, %v868, 0.0
          %871 = vadd.xlane.f32.xlu0 %v870
          %v872 = vpop.xlane.xlu0 %871
          %v873 = vsel %vm856, %v869, 0.0
          %874 = vadd.xlane.f32.xlu0 %v873
          %v875 = vpop.xlane.xlu0 %874
          %v876 = vmul.f32 %v872, %v863
          %v877 = vmul.f32 %v875, %v863
          %v878 = vadd.f32 %v876, 1e-12
          %v879 = vadd.f32 %v877, 1e-12
          %v880 = vrsqrt.pop %v878
          %v881 = vrsqrt.pop %v879
          %v882 = vmul.f32 %v866, %v880
          %v883 = vmul.f32 %v867, %v881
          %v885 = vlaneseq
          %v886 = vshrl.u32 %v885, 7
          %v887 = vsub.s32 0, %v886
          %v888 = vrot.slane %v854, %v887
          %v890 = vmul.f32 %v882, %v888
          %v891 = vmul.f32 %v883, %v888
          %v893 = vlaneseq
          %v894 = vshrl.u32 %v893, 7
          %v895 = vsub.s32 0, %v894
          %v896 = vrot.slane %v855, %v895
          %v898 = vadd.f32 %v890, %v896
          %v899 = vadd.f32 %v891, %v896
          %900 = vst.msk [vmem:[#allocation2] sm:$0xff] %vm856, %v898
          %901 = vst.msk [vmem:[#allocation2 + $0x8] sm:$0xff] %vm856, %v899
        $region124: #{tpu_custom_call.1} parent=91 // pred_fallthru
          _
        %v902 = vld [vmem:[#allocation2] sm:$0xff]
        %v903 = vld [vmem:[#allocation2 + $0x8] sm:$0xff]
        %v904 = vld [vmem:[%s1] sm:$0x1]
        %v905 = vld [vmem:[%s1 + $0x1] sm:$0x1]
        %v906 = vld [vmem:[%s820] sm:$0xff]
        %v907 = vld [vmem:[%s820 + $0x8] sm:$0xff]
        %v908 = vld [vmem:[%s820 + $0x10] sm:$0xff]
        %v909 = vld [vmem:[%s820 + $0x18] sm:$0xff]
        %v910 = vld [vmem:[%s701] sm:$0x1]
        %v912 = vlaneseq
        %v913 = vshrl.u32 %v912, 7
        %v914 = vsub.s32 0, %v913
        %v915 = vrot.slane %v910, %v914
        %vm917 = vcmask 261120
        %v919 = vsel %vm917, %v902, 0
        %v922 = vsel %vm917, %v903, 0
        %924 = vmatprep.subr.mxu0 0.0
        %925 = vmatpush1.msra.mxu0 %v906
        %926 = vmatprep.subr.mxu0 0.0
        %927 = vmatpush1.msra.mxu0 %v907
        %928 = vmatprep.subr.mxu0 0.0
        %929 = vmatpush1.msra.mxu0 %v908
        %930 = vmatprep.subr.mxu0 0.0
        %931 = vmatpush1.msra.mxu0 %v909
        %932 = vmatprep.subr.mxu0 0.0
        %933 = vmatpush1.msra.mxu0 0.0
        %934 = vmatprep.subr.mxu0 0.0
        %935 = vmatpush1.msra.mxu0 0.0
        %936 = vmatprep.subr.mxu0 0.0
        %937 = vmatpush1.msra.mxu0 0.0
        %938 = vmatprep.subr.mxu0 0.0
        %939 = vmatpush1.msra.mxu0 0.0
        %940 = vmatprep.subr.mxu0 0.0
        %941 = vmatpush1.msra.mxu0 0.0
        %942 = vmatprep.subr.mxu0 0.0
        %943 = vmatpush1.msra.mxu0 0.0
        %944 = vmatprep.subr.mxu0 0.0
        %945 = vmatpush1.msra.mxu0 0.0
        %946 = vmatprep.subr.mxu0 0.0
        %947 = vmatpush1.msra.mxu0 0.0
        %948 = vmatprep.subr.mxu0 0.0
        %949 = vmatpush1.msra.mxu0 0.0
        %950 = vmatprep.subr.mxu0 0.0
        %951 = vmatpush1.msra.mxu0 0.0
        %952 = vmatprep.subr.mxu0 0.0
        %953 = vmatpush1.msra.mxu0 0.0
        %954 = vmatprep.subr.mxu0 0.0
        %955 = vmatpush1.msra.mxu0 0.0
        %956 = vmatprep.subr.mxu0 0.0
        %957 = vmatpush1.msra.mxu0 0.0
        %958 = vmatprep.subr.mxu0 0.0
        %959 = vmatpush1.msra.mxu0 0.0
        %960 = vmatprep.subr.mxu0 0.0
        %961 = vmatpush1.msra.mxu0 0.0
        %962 = vmatprep.subr.mxu0 0.0
        %963 = vmatpush1.msra.mxu0 0.0
        %964 = vmatprep.subr.mxu0 0.0
        %965 = vmatpush1.msra.mxu0 0.0
        %966 = vmatprep.subr.mxu0 0.0
        %967 = vmatpush1.msra.mxu0 0.0
        %968 = vmatprep.subr.mxu0 0.0
        %969 = vmatpush1.msra.mxu0 0.0
        %970 = vmatprep.subr.mxu0 0.0
        %971 = vmatpush1.msra.mxu0 0.0
        %972 = vmatprep.subr.mxu0 0.0
        %973 = vmatpush1.msra.mxu0 0.0
        %974 = vmatprep.subr.mxu0 0.0
        %975 = vmatpush1.msra.mxu0 0.0
        %976 = vmatprep.subr.mxu0 0.0
        %977 = vmatpush1.msra.mxu0 0.0
        %978 = vmatprep.subr.mxu0 0.0
        %979 = vmatpush1.msra.mxu0 0.0
        %980 = vmatprep.subr.mxu0 0.0
        %981 = vmatpush1.msra.mxu0 0.0
        %982 = vmatprep.subr.mxu0 0.0
        %983 = vmatpush1.msra.mxu0 0.0
        %984 = vmatprep.subr.mxu0 0.0
        %985 = vmatpush1.msra.mxu0 0.0
        %986 = vmatprep.subr.mxu0 0.0
        %987 = vmatpush1.msra.mxu0 0.0
        %988 = vmatprep.mubr.f32.mxu0 0.0
        %989 = vmatmul.mubr.f32.gmra.mrb[0].mxu0 %v919
        %v990 = vpop.f32.mrb[0].mxu0
        %v991 = vadd.f32 %v915, %v990
        %v992 = vpop.f32.mrb[0].mxu0
        %993 = vmatprep.mubr.f32.mxu0 0.0
        %994 = vmatmul.mubr.f32.gmra.mrb[0].mxu0 %v922
        %v995 = vpop.f32.mrb[0].mxu0
        %v996 = vadd.f32 %v915, %v995
        %v997 = vpop.f32.mrb[0].mxu0
        %998 = vdwg.mxu0
        %1000 = vrot.lane.b32.xlu0 %v991, 96
        %v1001 = vpop.permute.xlu0 %1000
        %vm1002 = vcmask 64512
        %v1003 = vsel %vm1002, %v991, 0
        %v1005 = vsel %vm1002, %v1001, 0
        %1007 = vmatprep.subr.mxu0 0.0
        %1008 = vmatpush1.xpose.msra.mxu0 %v1005
        %1009 = vmatprep.subr.mxu0 0.0
        %1010 = vmatpush1.xpose.msra.mxu0 0.0
        %1011 = vmatprep.subr.mxu0 0.0
        %1012 = vmatpush1.xpose.msra.mxu0 0.0
        %1013 = vmatprep.subr.mxu0 0.0
        %1014 = vmatpush1.xpose.msra.mxu0 0.0
        %1015 = vmatprep.subr.mxu0 0.0
        %1016 = vmatpush1.xpose.msra.mxu0 0.0
        %1017 = vmatprep.subr.mxu0 0.0
        %1018 = vmatpush1.xpose.msra.mxu0 0.0
        %1019 = vmatprep.subr.mxu0 0.0
        %1020 = vmatpush1.xpose.msra.mxu0 0.0
        %1021 = vmatprep.subr.mxu0 0.0
        %1022 = vmatpush1.xpose.msra.mxu0 0.0
        %1023 = vmatprep.subr.mxu0 0.0
        %1024 = vmatpush1.xpose.msra.mxu0 0.0
        %1025 = vmatprep.subr.mxu0 0.0
        %1026 = vmatpush1.xpose.msra.mxu0 0.0
        %1027 = vmatprep.subr.mxu0 0.0
        %1028 = vmatpush1.xpose.msra.mxu0 0.0
        %1029 = vmatprep.subr.mxu0 0.0
        %1030 = vmatpush1.xpose.msra.mxu0 0.0
        %1031 = vmatprep.subr.mxu0 0.0
        %1032 = vmatpush1.xpose.msra.mxu0 0.0
        %1033 = vmatprep.subr.mxu0 0.0
        %1034 = vmatpush1.xpose.msra.mxu0 0.0
        %1035 = vmatprep.subr.mxu0 0.0
        %1036 = vmatpush1.xpose.msra.mxu0 0.0
        %1037 = vmatprep.subr.mxu0 0.0
        %1038 = vmatpush1.xpose.msra.mxu0 0.0
        %1039 = vmatprep.subr.mxu0 0.0
        %1040 = vmatpush1.xpose.msra.mxu0 0.0
        %1041 = vmatprep.subr.mxu0 0.0
        %1042 = vmatpush1.xpose.msra.mxu0 0.0
        %1043 = vmatprep.subr.mxu0 0.0
        %1044 = vmatpush1.xpose.msra.mxu0 0.0
        %1045 = vmatprep.subr.mxu0 0.0
        %1046 = vmatpush1.xpose.msra.mxu0 0.0
        %1047 = vmatprep.subr.mxu0 0.0
        %1048 = vmatpush1.xpose.msra.mxu0 0.0
        %1049 = vmatprep.subr.mxu0 0.0
        %1050 = vmatpush1.xpose.msra.mxu0 0.0
        %1051 = vmatprep.subr.mxu0 0.0
        %1052 = vmatpush1.xpose.msra.mxu0 0.0
        %1053 = vmatprep.subr.mxu0 0.0
        %1054 = vmatpush1.xpose.msra.mxu0 0.0
        %1055 = vmatprep.subr.mxu0 0.0
        %1056 = vmatpush1.xpose.msra.mxu0 0.0
        %1057 = vmatprep.subr.mxu0 0.0
        %1058 = vmatpush1.xpose.msra.mxu0 0.0
        %1059 = vmatprep.subr.mxu0 0.0
        %1060 = vmatpush1.xpose.msra.mxu0 0.0
        %1061 = vmatprep.subr.mxu0 0.0
        %1062 = vmatpush1.xpose.msra.mxu0 0.0
        %1063 = vmatprep.subr.mxu0 0.0
        %1064 = vmatpush1.xpose.msra.mxu0 0.0
        %1065 = vmatprep.subr.mxu0 0.0
        %1066 = vmatpush1.xpose.msra.mxu0 0.0
        %1067 = vmatprep.subr.mxu0 0.0
        %1068 = vmatpush1.xpose.msra.mxu0 0.0
        %1069 = vmatprep.subr.mxu0 0.0
        %1070 = vmatpush1.xpose.msra.mxu0 0.0
        %1071 = vmatprep.mubr.f32.mxu0 0.0
        %1072 = vmatmul.mubr.f32.gmra.mrb[0].mxu0 %v1003
        %v1073 = vpop.f32.mrb[0].mxu0
        %v1074 = vadd.f32 0.0, %v1073
        %v1075 = vpop.f32.mrb[0].mxu0
        %1076 = vdwg.mxu0
        %1078 = vrot.lane.b32.xlu0 %v996, 96
        %v1079 = vpop.permute.xlu0 %1078
        %v1080 = vsel %vm1002, %v996, 0
        %v1082 = vsel %vm1002, %v1079, 0
        %1084 = vmatprep.subr.mxu0 0.0
        %1085 = vmatpush1.xpose.msra.mxu0 %v1082
        %1086 = vmatprep.subr.mxu0 0.0
        %1087 = vmatpush1.xpose.msra.mxu0 0.0
        %1088 = vmatprep.subr.mxu0 0.0
        %1089 = vmatpush1.xpose.msra.mxu0 0.0
        %1090 = vmatprep.subr.mxu0 0.0
        %1091 = vmatpush1.xpose.msra.mxu0 0.0
        %1092 = vmatprep.subr.mxu0 0.0
        %1093 = vmatpush1.xpose.msra.mxu0 0.0
        %1094 = vmatprep.subr.mxu0 0.0
        %1095 = vmatpush1.xpose.msra.mxu0 0.0
        %1096 = vmatprep.subr.mxu0 0.0
        %1097 = vmatpush1.xpose.msra.mxu0 0.0
        %1098 = vmatprep.subr.mxu0 0.0
        %1099 = vmatpush1.xpose.msra.mxu0 0.0
        %1100 = vmatprep.subr.mxu0 0.0
        %1101 = vmatpush1.xpose.msra.mxu0 0.0
        %1102 = vmatprep.subr.mxu0 0.0
        %1103 = vmatpush1.xpose.msra.mxu0 0.0
        %1104 = vmatprep.subr.mxu0 0.0
        %1105 = vmatpush1.xpose.msra.mxu0 0.0
        %1106 = vmatprep.subr.mxu0 0.0
        %1107 = vmatpush1.xpose.msra.mxu0 0.0
        %1108 = vmatprep.subr.mxu0 0.0
        %1109 = vmatpush1.xpose.msra.mxu0 0.0
        %1110 = vmatprep.subr.mxu0 0.0
        %1111 = vmatpush1.xpose.msra.mxu0 0.0
        %1112 = vmatprep.subr.mxu0 0.0
        %1113 = vmatpush1.xpose.msra.mxu0 0.0
        %1114 = vmatprep.subr.mxu0 0.0
        %1115 = vmatpush1.xpose.msra.mxu0 0.0
        %1116 = vmatprep.subr.mxu0 0.0
        %1117 = vmatpush1.xpose.msra.mxu0 0.0
        %1118 = vmatprep.subr.mxu0 0.0
        %1119 = vmatpush1.xpose.msra.mxu0 0.0
        %1120 = vmatprep.subr.mxu0 0.0
        %1121 = vmatpush1.xpose.msra.mxu0 0.0
        %1122 = vmatprep.subr.mxu0 0.0
        %1123 = vmatpush1.xpose.msra.mxu0 0.0
        %1124 = vmatprep.subr.mxu0 0.0
        %1125 = vmatpush1.xpose.msra.mxu0 0.0
        %1126 = vmatprep.subr.mxu0 0.0
        %1127 = vmatpush1.xpose.msra.mxu0 0.0
        %1128 = vmatprep.subr.mxu0 0.0
        %1129 = vmatpush1.xpose.msra.mxu0 0.0
        %1130 = vmatprep.subr.mxu0 0.0
        %1131 = vmatpush1.xpose.msra.mxu0 0.0
        %1132 = vmatprep.subr.mxu0 0.0
        %1133 = vmatpush1.xpose.msra.mxu0 0.0
        %1134 = vmatprep.subr.mxu0 0.0
        %1135 = vmatpush1.xpose.msra.mxu0 0.0
        %1136 = vmatprep.subr.mxu0 0.0
        %1137 = vmatpush1.xpose.msra.mxu0 0.0
        %1138 = vmatprep.subr.mxu0 0.0
        %1139 = vmatpush1.xpose.msra.mxu0 0.0
        %1140 = vmatprep.subr.mxu0 0.0
        %1141 = vmatpush1.xpose.msra.mxu0 0.0
        %1142 = vmatprep.subr.mxu0 0.0
        %1143 = vmatpush1.xpose.msra.mxu0 0.0
        %1144 = vmatprep.subr.mxu0 0.0
        %1145 = vmatpush1.xpose.msra.mxu0 0.0
        %1146 = vmatprep.subr.mxu0 0.0
        %1147 = vmatpush1.xpose.msra.mxu0 0.0
        %1148 = vmatprep.mubr.f32.mxu0 0.0
        %1149 = vmatmul.mubr.f32.gmra.mrb[0].mxu0 %v1080
        %v1150 = vpop.f32.mrb[0].mxu0
        %v1151 = vadd.f32 0.0, %v1150
        %v1152 = vpop.f32.mrb[0].mxu0
        %1153 = vdwg.mxu0
        %v1154 = vmul.f32 %v1074, 0.35355338
        %v1155 = vmul.f32 %v1151, 0.35355338
        %v1158 = vlaneseq
        %v1159 = vshrl.u32 %v1158, 7
        %v1160 = vsub.s32 0, %v1159
        %v1161 = vrot.slane %v904, %v1160
        %v1162 = vlaneseq
        %v1163 = vshrl.u32 %v1162, 7
        %v1164 = vsub.s32 0, %v1163
        %v1165 = vrot.slane %v905, %v1164
        %v1168 = vadd.f32 %v1154, %v1161
        %v1169 = vadd.f32 %v1155, %v1165
        %v1170 = vsel %vm1002, %v1168, -inf
        %1171 = vmax.xlane.f32.xlu0 %v1170
        %v1172 = vpop.xlane.xlu0 %1171
        %v1173 = vsel %vm1002, %v1169, -inf
        %1174 = vmax.xlane.f32.xlu0 %v1173
        %v1175 = vpop.xlane.xlu0 %1174
        %v1176 = vsub.f32 %v1168, %v1172
        %v1177 = vsub.f32 %v1169, %v1175
        %v1178 = vmul.f32 %v1176, 1.442695
        %v1179 = vpow.pop %v1178
        %v1180 = vmul.f32 %v1177, 1.442695
        %v1181 = vpow.pop %v1180
        %v1182 = vsel %vm1002, %v1179, 0.0
        %1183 = vadd.xlane.f32.xlu0 %v1182
        %v1184 = vpop.xlane.xlu0 %1183
        %v1185 = vsel %vm1002, %v1181, 0.0
        %1186 = vadd.xlane.f32.xlu0 %v1185
        %v1187 = vpop.xlane.xlu0 %1186
        %v1188 = vrcp.pop %v1184
        %v1189 = vrcp.pop %v1187
        %v1190 = vmul.f32 %v1179, %v1188
        %v1191 = vmul.f32 %v1181, %v1189
        %1192 = vrot.lane.b32.xlu0 %v991, 64
        %v1193 = vpop.permute.xlu0 %1192
        %v1196 = vsel %vm1002, %v1190, 0
        %1198 = vmatprep.subr.mxu0 0.0
        %1199 = vmatpush1.msra.mxu0 %v1193
        %1200 = vmatprep.subr.mxu0 0.0
        %1201 = vmatpush1.msra.mxu0 0.0
        %1202 = vmatprep.subr.mxu0 0.0
        %1203 = vmatpush1.msra.mxu0 0.0
        %1204 = vmatprep.subr.mxu0 0.0
        %1205 = vmatpush1.msra.mxu0 0.0
        %1206 = vmatprep.subr.mxu0 0.0
        %1207 = vmatpush1.msra.mxu0 0.0
        %1208 = vmatprep.subr.mxu0 0.0
        %1209 = vmatpush1.msra.mxu0 0.0
        %1210 = vmatprep.subr.mxu0 0.0
        %1211 = vmatpush1.msra.mxu0 0.0
        %1212 = vmatprep.subr.mxu0 0.0
        %1213 = vmatpush1.msra.mxu0 0.0
        %1214 = vmatprep.subr.mxu0 0.0
        %1215 = vmatpush1.msra.mxu0 0.0
        %1216 = vmatprep.subr.mxu0 0.0
        %1217 = vmatpush1.msra.mxu0 0.0
        %1218 = vmatprep.subr.mxu0 0.0
        %1219 = vmatpush1.msra.mxu0 0.0
        %1220 = vmatprep.subr.mxu0 0.0
        %1221 = vmatpush1.msra.mxu0 0.0
        %1222 = vmatprep.subr.mxu0 0.0
        %1223 = vmatpush1.msra.mxu0 0.0
        %1224 = vmatprep.subr.mxu0 0.0
        %1225 = vmatpush1.msra.mxu0 0.0
        %1226 = vmatprep.subr.mxu0 0.0
        %1227 = vmatpush1.msra.mxu0 0.0
        %1228 = vmatprep.subr.mxu0 0.0
        %1229 = vmatpush1.msra.mxu0 0.0
        %1230 = vmatprep.subr.mxu0 0.0
        %1231 = vmatpush1.msra.mxu0 0.0
        %1232 = vmatprep.subr.mxu0 0.0
        %1233 = vmatpush1.msra.mxu0 0.0
        %1234 = vmatprep.subr.mxu0 0.0
        %1235 = vmatpush1.msra.mxu0 0.0
        %1236 = vmatprep.subr.mxu0 0.0
        %1237 = vmatpush1.msra.mxu0 0.0
        %1238 = vmatprep.subr.mxu0 0.0
        %1239 = vmatpush1.msra.mxu0 0.0
        %1240 = vmatprep.subr.mxu0 0.0
        %1241 = vmatpush1.msra.mxu0 0.0
        %1242 = vmatprep.subr.mxu0 0.0
        %1243 = vmatpush1.msra.mxu0 0.0
        %1244 = vmatprep.subr.mxu0 0.0
        %1245 = vmatpush1.msra.mxu0 0.0
        %1246 = vmatprep.subr.mxu0 0.0
        %1247 = vmatpush1.msra.mxu0 0.0
        %1248 = vmatprep.subr.mxu0 0.0
        %1249 = vmatpush1.msra.mxu0 0.0
        %1250 = vmatprep.subr.mxu0 0.0
        %1251 = vmatpush1.msra.mxu0 0.0
        %1252 = vmatprep.subr.mxu0 0.0
        %1253 = vmatpush1.msra.mxu0 0.0
        %1254 = vmatprep.subr.mxu0 0.0
        %1255 = vmatpush1.msra.mxu0 0.0
        %1256 = vmatprep.subr.mxu0 0.0
        %1257 = vmatpush1.msra.mxu0 0.0
        %1258 = vmatprep.subr.mxu0 0.0
        %1259 = vmatpush1.msra.mxu0 0.0
        %1260 = vmatprep.subr.mxu0 0.0
        %1261 = vmatpush1.msra.mxu0 0.0
        %1262 = vmatprep.mubr.f32.mxu0 0.0
        %1263 = vmatmul.mubr.f32.gmra.mrb[0].mxu0 %v1196
        %v1264 = vpop.f32.mrb[0].mxu0
        %v1265 = vadd.f32 0.0, %v1264
        %v1266 = vpop.f32.mrb[0].mxu0
        %1267 = vdwg.mxu0
        %1268 = vrot.lane.b32.xlu0 %v996, 64
        %v1269 = vpop.permute.xlu0 %1268
        %v1272 = vsel %vm1002, %v1191, 0
        %1274 = vmatprep.subr.mxu0 0.0
        %1275 = vmatpush1.msra.mxu0 %v1269
        %1276 = vmatprep.subr.mxu0 0.0
        %1277 = vmatpush1.msra.mxu0 0.0
        %1278 = vmatprep.subr.mxu0 0.0
        %1279 = vmatpush1.msra.mxu0 0.0
        %1280 = vmatprep.subr.mxu0 0.0
        %1281 = vmatpush1.msra.mxu0 0.0
        %1282 = vmatprep.subr.mxu0 0.0
        %1283 = vmatpush1.msra.mxu0 0.0
        %1284 = vmatprep.subr.mxu0 0.0
        %1285 = vmatpush1.msra.mxu0 0.0
        %1286 = vmatprep.subr.mxu0 0.0
        %1287 = vmatpush1.msra.mxu0 0.0
        %1288 = vmatprep.subr.mxu0 0.0
        %1289 = vmatpush1.msra.mxu0 0.0
        %1290 = vmatprep.subr.mxu0 0.0
        %1291 = vmatpush1.msra.mxu0 0.0
        %1292 = vmatprep.subr.mxu0 0.0
        %1293 = vmatpush1.msra.mxu0 0.0
        %1294 = vmatprep.subr.mxu0 0.0
        %1295 = vmatpush1.msra.mxu0 0.0
        %1296 = vmatprep.subr.mxu0 0.0
        %1297 = vmatpush1.msra.mxu0 0.0
        %1298 = vmatprep.subr.mxu0 0.0
        %1299 = vmatpush1.msra.mxu0 0.0
        %1300 = vmatprep.subr.mxu0 0.0
        %1301 = vmatpush1.msra.mxu0 0.0
        %1302 = vmatprep.subr.mxu0 0.0
        %1303 = vmatpush1.msra.mxu0 0.0
        %1304 = vmatprep.subr.mxu0 0.0
        %1305 = vmatpush1.msra.mxu0 0.0
        %1306 = vmatprep.subr.mxu0 0.0
        %1307 = vmatpush1.msra.mxu0 0.0
        %1308 = vmatprep.subr.mxu0 0.0
        %1309 = vmatpush1.msra.mxu0 0.0
        %1310 = vmatprep.subr.mxu0 0.0
        %1311 = vmatpush1.msra.mxu0 0.0
        %1312 = vmatprep.subr.mxu0 0.0
        %1313 = vmatpush1.msra.mxu0 0.0
        %1314 = vmatprep.subr.mxu0 0.0
        %1315 = vmatpush1.msra.mxu0 0.0
        %1316 = vmatprep.subr.mxu0 0.0
        %1317 = vmatpush1.msra.mxu0 0.0
        %1318 = vmatprep.subr.mxu0 0.0
        %1319 = vmatpush1.msra.mxu0 0.0
        %1320 = vmatprep.subr.mxu0 0.0
        %1321 = vmatpush1.msra.mxu0 0.0
        %1322 = vmatprep.subr.mxu0 0.0
        %1323 = vmatpush1.msra.mxu0 0.0
        %1324 = vmatprep.subr.mxu0 0.0
        %1325 = vmatpush1.msra.mxu0 0.0
        %1326 = vmatprep.subr.mxu0 0.0
        %1327 = vmatpush1.msra.mxu0 0.0
        %1328 = vmatprep.subr.mxu0 0.0
        %1329 = vmatpush1.msra.mxu0 0.0
        %1330 = vmatprep.subr.mxu0 0.0
        %1331 = vmatpush1.msra.mxu0 0.0
        %1332 = vmatprep.subr.mxu0 0.0
        %1333 = vmatpush1.msra.mxu0 0.0
        %1334 = vmatprep.subr.mxu0 0.0
        %1335 = vmatpush1.msra.mxu0 0.0
        %1336 = vmatprep.subr.mxu0 0.0
        %1337 = vmatpush1.msra.mxu0 0.0
        %1338 = vmatprep.mubr.f32.mxu0 0.0
        %1339 = vmatmul.mubr.f32.gmra.mrb[0].mxu0 %v1272
        %v1340 = vpop.f32.mrb[0].mxu0
        %v1341 = vadd.f32 0.0, %v1340
        %v1342 = vpop.f32.mrb[0].mxu0
        %1343 = vdwg.mxu0
        %1344 = vrot.lane.b32.xlu0 %v991, 120
        %v1345 = vpop.permute.xlu0 %1344
        %1346 = vrot.lane.b32.xlu0 %v991, 88
        %v1347 = vpop.permute.xlu0 %1346
        %v1348 = vsel %vm1002, %v1345, 0
        %v1350 = vsel %vm1002, %v1347, 0
        %1352 = vmatprep.subr.mxu0 0.0
        %1353 = vmatpush1.xpose.msra.mxu0 %v1350
        %1354 = vmatprep.subr.mxu0 0.0
        %1355 = vmatpush1.xpose.msra.mxu0 0.0
        %1356 = vmatprep.subr.mxu0 0.0
        %1357 = vmatpush1.xpose.msra.mxu0 0.0
        %1358 = vmatprep.subr.mxu0 0.0
        %1359 = vmatpush1.xpose.msra.mxu0 0.0
        %1360 = vmatprep.subr.mxu0 0.0
        %1361 = vmatpush1.xpose.msra.mxu0 0.0
        %1362 = vmatprep.subr.mxu0 0.0
        %1363 = vmatpush1.xpose.msra.mxu0 0.0
        %1364 = vmatprep.subr.mxu0 0.0
        %1365 = vmatpush1.xpose.msra.mxu0 0.0
        %1366 = vmatprep.subr.mxu0 0.0
        %1367 = vmatpush1.xpose.msra.mxu0 0.0
        %1368 = vmatprep.subr.mxu0 0.0
        %1369 = vmatpush1.xpose.msra.mxu0 0.0
        %1370 = vmatprep.subr.mxu0 0.0
        %1371 = vmatpush1.xpose.msra.mxu0 0.0
        %1372 = vmatprep.subr.mxu0 0.0
        %1373 = vmatpush1.xpose.msra.mxu0 0.0
        %1374 = vmatprep.subr.mxu0 0.0
        %1375 = vmatpush1.xpose.msra.mxu0 0.0
        %1376 = vmatprep.subr.mxu0 0.0
        %1377 = vmatpush1.xpose.msra.mxu0 0.0
        %1378 = vmatprep.subr.mxu0 0.0
        %1379 = vmatpush1.xpose.msra.mxu0 0.0
        %1380 = vmatprep.subr.mxu0 0.0
        %1381 = vmatpush1.xpose.msra.mxu0 0.0
        %1382 = vmatprep.subr.mxu0 0.0
        %1383 = vmatpush1.xpose.msra.mxu0 0.0
        %1384 = vmatprep.subr.mxu0 0.0
        %1385 = vmatpush1.xpose.msra.mxu0 0.0
        %1386 = vmatprep.subr.mxu0 0.0
        %1387 = vmatpush1.xpose.msra.mxu0 0.0
        %1388 = vmatprep.subr.mxu0 0.0
        %1389 = vmatpush1.xpose.msra.mxu0 0.0
        %1390 = vmatprep.subr.mxu0 0.0
        %1391 = vmatpush1.xpose.msra.mxu0 0.0
        %1392 = vmatprep.subr.mxu0 0.0
        %1393 = vmatpush1.xpose.msra.mxu0 0.0
        %1394 = vmatprep.subr.mxu0 0.0
        %1395 = vmatpush1.xpose.msra.mxu0 0.0
        %1396 = vmatprep.subr.mxu0 0.0
        %1397 = vmatpush1.xpose.msra.mxu0 0.0
        %1398 = vmatprep.subr.mxu0 0.0
        %1399 = vmatpush1.xpose.msra.mxu0 0.0
        %1400 = vmatprep.subr.mxu0 0.0
        %1401 = vmatpush1.xpose.msra.mxu0 0.0
        %1402 = vmatprep.subr.mxu0 0.0
        %1403 = vmatpush1.xpose.msra.mxu0 0.0
        %1404 = vmatprep.subr.mxu0 0.0
        %1405 = vmatpush1.xpose.msra.mxu0 0.0
        %1406 = vmatprep.subr.mxu0 0.0
        %1407 = vmatpush1.xpose.msra.mxu0 0.0
        %1408 = vmatprep.subr.mxu0 0.0
        %1409 = vmatpush1.xpose.msra.mxu0 0.0
        %1410 = vmatprep.subr.mxu0 0.0
        %1411 = vmatpush1.xpose.msra.mxu0 0.0
        %1412 = vmatprep.subr.mxu0 0.0
        %1413 = vmatpush1.xpose.msra.mxu0 0.0
        %1414 = vmatprep.subr.mxu0 0.0
        %1415 = vmatpush1.xpose.msra.mxu0 0.0
        %1416 = vmatprep.mubr.f32.mxu0 0.0
        %1417 = vmatmul.mubr.f32.gmra.mrb[0].mxu0 %v1348
        %v1418 = vpop.f32.mrb[0].mxu0
        %v1419 = vadd.f32 0.0, %v1418
        %v1420 = vpop.f32.mrb[0].mxu0
        %1421 = vdwg.mxu0
        %1422 = vrot.lane.b32.xlu0 %v996, 120
        %v1423 = vpop.permute.xlu0 %1422
        %1424 = vrot.lane.b32.xlu0 %v996, 88
        %v1425 = vpop.permute.xlu0 %1424
        %v1426 = vsel %vm1002, %v1423, 0
        %v1428 = vsel %vm1002, %v1425, 0
        %1430 = vmatprep.subr.mxu0 0.0
        %1431 = vmatpush1.xpose.msra.mxu0 %v1428
        %1432 = vmatprep.subr.mxu0 0.0
        %1433 = vmatpush1.xpose.msra.mxu0 0.0
        %1434 = vmatprep.subr.mxu0 0.0
        %1435 = vmatpush1.xpose.msra.mxu0 0.0
        %1436 = vmatprep.subr.mxu0 0.0
        %1437 = vmatpush1.xpose.msra.mxu0 0.0
        %1438 = vmatprep.subr.mxu0 0.0
        %1439 = vmatpush1.xpose.msra.mxu0 0.0
        %1440 = vmatprep.subr.mxu0 0.0
        %1441 = vmatpush1.xpose.msra.mxu0 0.0
        %1442 = vmatprep.subr.mxu0 0.0
        %1443 = vmatpush1.xpose.msra.mxu0 0.0
        %1444 = vmatprep.subr.mxu0 0.0
        %1445 = vmatpush1.xpose.msra.mxu0 0.0
        %1446 = vmatprep.subr.mxu0 0.0
        %1447 = vmatpush1.xpose.msra.mxu0 0.0
        %1448 = vmatprep.subr.mxu0 0.0
        %1449 = vmatpush1.xpose.msra.mxu0 0.0
        %1450 = vmatprep.subr.mxu0 0.0
        %1451 = vmatpush1.xpose.msra.mxu0 0.0
        %1452 = vmatprep.subr.mxu0 0.0
        %1453 = vmatpush1.xpose.msra.mxu0 0.0
        %1454 = vmatprep.subr.mxu0 0.0
        %1455 = vmatpush1.xpose.msra.mxu0 0.0
        %1456 = vmatprep.subr.mxu0 0.0
        %1457 = vmatpush1.xpose.msra.mxu0 0.0
        %1458 = vmatprep.subr.mxu0 0.0
        %1459 = vmatpush1.xpose.msra.mxu0 0.0
        %1460 = vmatprep.subr.mxu0 0.0
        %1461 = vmatpush1.xpose.msra.mxu0 0.0
        %1462 = vmatprep.subr.mxu0 0.0
        %1463 = vmatpush1.xpose.msra.mxu0 0.0
        %1464 = vmatprep.subr.mxu0 0.0
        %1465 = vmatpush1.xpose.msra.mxu0 0.0
        %1466 = vmatprep.subr.mxu0 0.0
        %1467 = vmatpush1.xpose.msra.mxu0 0.0
        %1468 = vmatprep.subr.mxu0 0.0
        %1469 = vmatpush1.xpose.msra.mxu0 0.0
        %1470 = vmatprep.subr.mxu0 0.0
        %1471 = vmatpush1.xpose.msra.mxu0 0.0
        %1472 = vmatprep.subr.mxu0 0.0
        %1473 = vmatpush1.xpose.msra.mxu0 0.0
        %1474 = vmatprep.subr.mxu0 0.0
        %1475 = vmatpush1.xpose.msra.mxu0 0.0
        %1476 = vmatprep.subr.mxu0 0.0
        %1477 = vmatpush1.xpose.msra.mxu0 0.0
        %1478 = vmatprep.subr.mxu0 0.0
        %1479 = vmatpush1.xpose.msra.mxu0 0.0
        %1480 = vmatprep.subr.mxu0 0.0
        %1481 = vmatpush1.xpose.msra.mxu0 0.0
        %1482 = vmatprep.subr.mxu0 0.0
        %1483 = vmatpush1.xpose.msra.mxu0 0.0
        %1484 = vmatprep.subr.mxu0 0.0
        %1485 = vmatpush1.xpose.msra.mxu0 0.0
        %1486 = vmatprep.subr.mxu0 0.0
        %1487 = vmatpush1.xpose.msra.mxu0 0.0
        %1488 = vmatprep.subr.mxu0 0.0
        %1489 = vmatpush1.xpose.msra.mxu0 0.0
        %1490 = vmatprep.subr.mxu0 0.0
        %1491 = vmatpush1.xpose.msra.mxu0 0.0
        %1492 = vmatprep.subr.mxu0 0.0
        %1493 = vmatpush1.xpose.msra.mxu0 0.0
        %1494 = vmatprep.mubr.f32.mxu0 0.0
        %1495 = vmatmul.mubr.f32.gmra.mrb[0].mxu0 %v1426
        %v1496 = vpop.f32.mrb[0].mxu0
        %v1497 = vadd.f32 0.0, %v1496
        %v1498 = vpop.f32.mrb[0].mxu0
        %1499 = vdwg.mxu0
        %v1500 = vmul.f32 %v1419, 0.35355338
        %v1501 = vmul.f32 %v1497, 0.35355338
        %v1502 = vadd.f32 %v1500, %v1161
        %v1503 = vadd.f32 %v1501, %v1165
        %v1504 = vsel %vm1002, %v1502, -inf
        %1505 = vmax.xlane.f32.xlu0 %v1504
        %v1506 = vpop.xlane.xlu0 %1505
        %v1507 = vsel %vm1002, %v1503, -inf
        %1508 = vmax.xlane.f32.xlu0 %v1507
        %v1509 = vpop.xlane.xlu0 %1508
        %v1510 = vsub.f32 %v1502, %v1506
        %v1511 = vsub.f32 %v1503, %v1509
        %v1512 = vmul.f32 %v1510, 1.442695
        %v1513 = vpow.pop %v1512
        %v1514 = vmul.f32 %v1511, 1.442695
        %v1515 = vpow.pop %v1514
        %v1516 = vsel %vm1002, %v1513, 0.0
        %1517 = vadd.xlane.f32.xlu0 %v1516
        %v1518 = vpop.xlane.xlu0 %1517
        %v1519 = vsel %vm1002, %v1515, 0.0
        %1520 = vadd.xlane.f32.xlu0 %v1519
        %v1521 = vpop.xlane.xlu0 %1520
        %v1522 = vrcp.pop %v1518
        %v1523 = vrcp.pop %v1521
        %v1524 = vmul.f32 %v1513, %v1522
        %v1525 = vmul.f32 %v1515, %v1523
        %1526 = vrot.lane.b32.xlu0 %v991, 56
        %v1527 = vpop.permute.xlu0 %1526
        %v1530 = vsel %vm1002, %v1524, 0
        %1532 = vmatprep.subr.mxu0 0.0
        %1533 = vmatpush1.msra.mxu0 %v1527
        %1534 = vmatprep.subr.mxu0 0.0
        %1535 = vmatpush1.msra.mxu0 0.0
        %1536 = vmatprep.subr.mxu0 0.0
        %1537 = vmatpush1.msra.mxu0 0.0
        %1538 = vmatprep.subr.mxu0 0.0
        %1539 = vmatpush1.msra.mxu0 0.0
        %1540 = vmatprep.subr.mxu0 0.0
        %1541 = vmatpush1.msra.mxu0 0.0
        %1542 = vmatprep.subr.mxu0 0.0
        %1543 = vmatpush1.msra.mxu0 0.0
        %1544 = vmatprep.subr.mxu0 0.0
        %1545 = vmatpush1.msra.mxu0 0.0
        %1546 = vmatprep.subr.mxu0 0.0
        %1547 = vmatpush1.msra.mxu0 0.0
        %1548 = vmatprep.subr.mxu0 0.0
        %1549 = vmatpush1.msra.mxu0 0.0
        %1550 = vmatprep.subr.mxu0 0.0
        %1551 = vmatpush1.msra.mxu0 0.0
        %1552 = vmatprep.subr.mxu0 0.0
        %1553 = vmatpush1.msra.mxu0 0.0
        %1554 = vmatprep.subr.mxu0 0.0
        %1555 = vmatpush1.msra.mxu0 0.0
        %1556 = vmatprep.subr.mxu0 0.0
        %1557 = vmatpush1.msra.mxu0 0.0
        %1558 = vmatprep.subr.mxu0 0.0
        %1559 = vmatpush1.msra.mxu0 0.0
        %1560 = vmatprep.subr.mxu0 0.0
        %1561 = vmatpush1.msra.mxu0 0.0
        %1562 = vmatprep.subr.mxu0 0.0
        %1563 = vmatpush1.msra.mxu0 0.0
        %1564 = vmatprep.subr.mxu0 0.0
        %1565 = vmatpush1.msra.mxu0 0.0
        %1566 = vmatprep.subr.mxu0 0.0
        %1567 = vmatpush1.msra.mxu0 0.0
        %1568 = vmatprep.subr.mxu0 0.0
        %1569 = vmatpush1.msra.mxu0 0.0
        %1570 = vmatprep.subr.mxu0 0.0
        %1571 = vmatpush1.msra.mxu0 0.0
        %1572 = vmatprep.subr.mxu0 0.0
        %1573 = vmatpush1.msra.mxu0 0.0
        %1574 = vmatprep.subr.mxu0 0.0
        %1575 = vmatpush1.msra.mxu0 0.0
        %1576 = vmatprep.subr.mxu0 0.0
        %1577 = vmatpush1.msra.mxu0 0.0
        %1578 = vmatprep.subr.mxu0 0.0
        %1579 = vmatpush1.msra.mxu0 0.0
        %1580 = vmatprep.subr.mxu0 0.0
        %1581 = vmatpush1.msra.mxu0 0.0
        %1582 = vmatprep.subr.mxu0 0.0
        %1583 = vmatpush1.msra.mxu0 0.0
        %1584 = vmatprep.subr.mxu0 0.0
        %1585 = vmatpush1.msra.mxu0 0.0
        %1586 = vmatprep.subr.mxu0 0.0
        %1587 = vmatpush1.msra.mxu0 0.0
        %1588 = vmatprep.subr.mxu0 0.0
        %1589 = vmatpush1.msra.mxu0 0.0
        %1590 = vmatprep.subr.mxu0 0.0
        %1591 = vmatpush1.msra.mxu0 0.0
        %1592 = vmatprep.subr.mxu0 0.0
        %1593 = vmatpush1.msra.mxu0 0.0
        %1594 = vmatprep.subr.mxu0 0.0
        %1595 = vmatpush1.msra.mxu0 0.0
        %1596 = vmatprep.mubr.f32.mxu0 0.0
        %1597 = vmatmul.mubr.f32.gmra.mrb[0].mxu0 %v1530
        %v1598 = vpop.f32.mrb[0].mxu0
        %v1599 = vadd.f32 0.0, %v1598
        %v1600 = vpop.f32.mrb[0].mxu0
        %1601 = vdwg.mxu0
        %1602 = vrot.lane.b32.xlu0 %v996, 56
        %v1603 = vpop.permute.xlu0 %1602
        %v1606 = vsel %vm1002, %v1525, 0
        %1608 = vmatprep.subr.mxu0 0.0
        %1609 = vmatpush1.msra.mxu0 %v1603
        %1610 = vmatprep.subr.mxu0 0.0
        %1611 = vmatpush1.msra.mxu0 0.0
        %1612 = vmatprep.subr.mxu0 0.0
        %1613 = vmatpush1.msra.mxu0 0.0
        %1614 = vmatprep.subr.mxu0 0.0
        %1615 = vmatpush1.msra.mxu0 0.0
        %1616 = vmatprep.subr.mxu0 0.0
        %1617 = vmatpush1.msra.mxu0 0.0
        %1618 = vmatprep.subr.mxu0 0.0
        %1619 = vmatpush1.msra.mxu0 0.0
        %1620 = vmatprep.subr.mxu0 0.0
        %1621 = vmatpush1.msra.mxu0 0.0
        %1622 = vmatprep.subr.mxu0 0.0
        %1623 = vmatpush1.msra.mxu0 0.0
        %1624 = vmatprep.subr.mxu0 0.0
        %1625 = vmatpush1.msra.mxu0 0.0
        %1626 = vmatprep.subr.mxu0 0.0
        %1627 = vmatpush1.msra.mxu0 0.0
        %1628 = vmatprep.subr.mxu0 0.0
        %1629 = vmatpush1.msra.mxu0 0.0
        %1630 = vmatprep.subr.mxu0 0.0
        %1631 = vmatpush1.msra.mxu0 0.0
        %1632 = vmatprep.subr.mxu0 0.0
        %1633 = vmatpush1.msra.mxu0 0.0
        %1634 = vmatprep.subr.mxu0 0.0
        %1635 = vmatpush1.msra.mxu0 0.0
        %1636 = vmatprep.subr.mxu0 0.0
        %1637 = vmatpush1.msra.mxu0 0.0
        %1638 = vmatprep.subr.mxu0 0.0
        %1639 = vmatpush1.msra.mxu0 0.0
        %1640 = vmatprep.subr.mxu0 0.0
        %1641 = vmatpush1.msra.mxu0 0.0
        %1642 = vmatprep.subr.mxu0 0.0
        %1643 = vmatpush1.msra.mxu0 0.0
        %1644 = vmatprep.subr.mxu0 0.0
        %1645 = vmatpush1.msra.mxu0 0.0
        %1646 = vmatprep.subr.mxu0 0.0
        %1647 = vmatpush1.msra.mxu0 0.0
        %1648 = vmatprep.subr.mxu0 0.0
        %1649 = vmatpush1.msra.mxu0 0.0
        %1650 = vmatprep.subr.mxu0 0.0
        %1651 = vmatpush1.msra.mxu0 0.0
        %1652 = vmatprep.subr.mxu0 0.0
        %1653 = vmatpush1.msra.mxu0 0.0
        %1654 = vmatprep.subr.mxu0 0.0
        %1655 = vmatpush1.msra.mxu0 0.0
        %1656 = vmatprep.subr.mxu0 0.0
        %1657 = vmatpush1.msra.mxu0 0.0
        %1658 = vmatprep.subr.mxu0 0.0
        %1659 = vmatpush1.msra.mxu0 0.0
        %1660 = vmatprep.subr.mxu0 0.0
        %1661 = vmatpush1.msra.mxu0 0.0
        %1662 = vmatprep.subr.mxu0 0.0
        %1663 = vmatpush1.msra.mxu0 0.0
        %1664 = vmatprep.subr.mxu0 0.0
        %1665 = vmatpush1.msra.mxu0 0.0
        %1666 = vmatprep.subr.mxu0 0.0
        %1667 = vmatpush1.msra.mxu0 0.0
        %1668 = vmatprep.subr.mxu0 0.0
        %1669 = vmatpush1.msra.mxu0 0.0
        %1670 = vmatprep.subr.mxu0 0.0
        %1671 = vmatpush1.msra.mxu0 0.0
        %1672 = vmatprep.mubr.f32.mxu0 0.0
        %1673 = vmatmul.mubr.f32.gmra.mrb[0].mxu0 %v1606
        %v1674 = vpop.f32.mrb[0].mxu0
        %v1675 = vadd.f32 0.0, %v1674
        %v1676 = vpop.f32.mrb[0].mxu0
        %1677 = vdwg.mxu0
        %1678 = vrot.lane.b32.xlu0 %v991, 112
        %v1679 = vpop.permute.xlu0 %1678
        %1680 = vrot.lane.b32.xlu0 %v991, 80
        %v1681 = vpop.permute.xlu0 %1680
        %v1682 = vsel %vm1002, %v1679, 0
        %v1684 = vsel %vm1002, %v1681, 0
        %1686 = vmatprep.subr.mxu0 0.0
        %1687 = vmatpush1.xpose.msra.mxu0 %v1684
        %1688 = vmatprep.subr.mxu0 0.0
        %1689 = vmatpush1.xpose.msra.mxu0 0.0
        %1690 = vmatprep.subr.mxu0 0.0
        %1691 = vmatpush1.xpose.msra.mxu0 0.0
        %1692 = vmatprep.subr.mxu0 0.0
        %1693 = vmatpush1.xpose.msra.mxu0 0.0
        %1694 = vmatprep.subr.mxu0 0.0
        %1695 = vmatpush1.xpose.msra.mxu0 0.0
        %1696 = vmatprep.subr.mxu0 0.0
        %1697 = vmatpush1.xpose.msra.mxu0 0.0
        %1698 = vmatprep.subr.mxu0 0.0
        %1699 = vmatpush1.xpose.msra.mxu0 0.0
        %1700 = vmatprep.subr.mxu0 0.0
        %1701 = vmatpush1.xpose.msra.mxu0 0.0
        %1702 = vmatprep.subr.mxu0 0.0
        %1703 = vmatpush1.xpose.msra.mxu0 0.0
        %1704 = vmatprep.subr.mxu0 0.0
        %1705 = vmatpush1.xpose.msra.mxu0 0.0
        %1706 = vmatprep.subr.mxu0 0.0
        %1707 = vmatpush1.xpose.msra.mxu0 0.0
        %1708 = vmatprep.subr.mxu0 0.0
        %1709 = vmatpush1.xpose.msra.mxu0 0.0
        %1710 = vmatprep.subr.mxu0 0.0
        %1711 = vmatpush1.xpose.msra.mxu0 0.0
        %1712 = vmatprep.subr.mxu0 0.0
        %1713 = vmatpush1.xpose.msra.mxu0 0.0
        %1714 = vmatprep.subr.mxu0 0.0
        %1715 = vmatpush1.xpose.msra.mxu0 0.0
        %1716 = vmatprep.subr.mxu0 0.0
        %1717 = vmatpush1.xpose.msra.mxu0 0.0
        %1718 = vmatprep.subr.mxu0 0.0
        %1719 = vmatpush1.xpose.msra.mxu0 0.0
        %1720 = vmatprep.subr.mxu0 0.0
        %1721 = vmatpush1.xpose.msra.mxu0 0.0
        %1722 = vmatprep.subr.mxu0 0.0
        %1723 = vmatpush1.xpose.msra.mxu0 0.0
        %1724 = vmatprep.subr.mxu0 0.0
        %1725 = vmatpush1.xpose.msra.mxu0 0.0
        %1726 = vmatprep.subr.mxu0 0.0
        %1727 = vmatpush1.xpose.msra.mxu0 0.0
        %1728 = vmatprep.subr.mxu0 0.0
        %1729 = vmatpush1.xpose.msra.mxu0 0.0
        %1730 = vmatprep.subr.mxu0 0.0
        %1731 = vmatpush1.xpose.msra.mxu0 0.0
        %1732 = vmatprep.subr.mxu0 0.0
        %1733 = vmatpush1.xpose.msra.mxu0 0.0
        %1734 = vmatprep.subr.mxu0 0.0
        %1735 = vmatpush1.xpose.msra.mxu0 0.0
        %1736 = vmatprep.subr.mxu0 0.0
        %1737 = vmatpush1.xpose.msra.mxu0 0.0
        %1738 = vmatprep.subr.mxu0 0.0
        %1739 = vmatpush1.xpose.msra.mxu0 0.0
        %1740 = vmatprep.subr.mxu0 0.0
        %1741 = vmatpush1.xpose.msra.mxu0 0.0
        %1742 = vmatprep.subr.mxu0 0.0
        %1743 = vmatpush1.xpose.msra.mxu0 0.0
        %1744 = vmatprep.subr.mxu0 0.0
        %1745 = vmatpush1.xpose.msra.mxu0 0.0
        %1746 = vmatprep.subr.mxu0 0.0
        %1747 = vmatpush1.xpose.msra.mxu0 0.0
        %1748 = vmatprep.subr.mxu0 0.0
        %1749 = vmatpush1.xpose.msra.mxu0 0.0
        %1750 = vmatprep.mubr.f32.mxu0 0.0
        %1751 = vmatmul.mubr.f32.gmra.mrb[0].mxu0 %v1682
        %v1752 = vpop.f32.mrb[0].mxu0
        %v1753 = vadd.f32 0.0, %v1752
        %v1754 = vpop.f32.mrb[0].mxu0
        %1755 = vdwg.mxu0
        %1756 = vrot.lane.b32.xlu0 %v996, 112
        %v1757 = vpop.permute.xlu0 %1756
        %1758 = vrot.lane.b32.xlu0 %v996, 80
        %v1759 = vpop.permute.xlu0 %1758
        %v1760 = vsel %vm1002, %v1757, 0
        %v1762 = vsel %vm1002, %v1759, 0
        %1764 = vmatprep.subr.mxu0 0.0
        %1765 = vmatpush1.xpose.msra.mxu0 %v1762
        %1766 = vmatprep.subr.mxu0 0.0
        %1767 = vmatpush1.xpose.msra.mxu0 0.0
        %1768 = vmatprep.subr.mxu0 0.0
        %1769 = vmatpush1.xpose.msra.mxu0 0.0
        %1770 = vmatprep.subr.mxu0 0.0
        %1771 = vmatpush1.xpose.msra.mxu0 0.0
        %1772 = vmatprep.subr.mxu0 0.0
        %1773 = vmatpush1.xpose.msra.mxu0 0.0
        %1774 = vmatprep.subr.mxu0 0.0
        %1775 = vmatpush1.xpose.msra.mxu0 0.0
        %1776 = vmatprep.subr.mxu0 0.0
        %1777 = vmatpush1.xpose.msra.mxu0 0.0
        %1778 = vmatprep.subr.mxu0 0.0
        %1779 = vmatpush1.xpose.msra.mxu0 0.0
        %1780 = vmatprep.subr.mxu0 0.0
        %1781 = vmatpush1.xpose.msra.mxu0 0.0
        %1782 = vmatprep.subr.mxu0 0.0
        %1783 = vmatpush1.xpose.msra.mxu0 0.0
        %1784 = vmatprep.subr.mxu0 0.0
        %1785 = vmatpush1.xpose.msra.mxu0 0.0
        %1786 = vmatprep.subr.mxu0 0.0
        %1787 = vmatpush1.xpose.msra.mxu0 0.0
        %1788 = vmatprep.subr.mxu0 0.0
        %1789 = vmatpush1.xpose.msra.mxu0 0.0
        %1790 = vmatprep.subr.mxu0 0.0
        %1791 = vmatpush1.xpose.msra.mxu0 0.0
        %1792 = vmatprep.subr.mxu0 0.0
        %1793 = vmatpush1.xpose.msra.mxu0 0.0
        %1794 = vmatprep.subr.mxu0 0.0
        %1795 = vmatpush1.xpose.msra.mxu0 0.0
        %1796 = vmatprep.subr.mxu0 0.0
        %1797 = vmatpush1.xpose.msra.mxu0 0.0
        %1798 = vmatprep.subr.mxu0 0.0
        %1799 = vmatpush1.xpose.msra.mxu0 0.0
        %1800 = vmatprep.subr.mxu0 0.0
        %1801 = vmatpush1.xpose.msra.mxu0 0.0
        %1802 = vmatprep.subr.mxu0 0.0
        %1803 = vmatpush1.xpose.msra.mxu0 0.0
        %1804 = vmatprep.subr.mxu0 0.0
        %1805 = vmatpush1.xpose.msra.mxu0 0.0
        %1806 = vmatprep.subr.mxu0 0.0
        %1807 = vmatpush1.xpose.msra.mxu0 0.0
        %1808 = vmatprep.subr.mxu0 0.0
        %1809 = vmatpush1.xpose.msra.mxu0 0.0
        %1810 = vmatprep.subr.mxu0 0.0
        %1811 = vmatpush1.xpose.msra.mxu0 0.0
        %1812 = vmatprep.subr.mxu0 0.0
        %1813 = vmatpush1.xpose.msra.mxu0 0.0
        %1814 = vmatprep.subr.mxu0 0.0
        %1815 = vmatpush1.xpose.msra.mxu0 0.0
        %1816 = vmatprep.subr.mxu0 0.0
        %1817 = vmatpush1.xpose.msra.mxu0 0.0
        %1818 = vmatprep.subr.mxu0 0.0
        %1819 = vmatpush1.xpose.msra.mxu0 0.0
        %1820 = vmatprep.subr.mxu0 0.0
        %1821 = vmatpush1.xpose.msra.mxu0 0.0
        %1822 = vmatprep.subr.mxu0 0.0
        %1823 = vmatpush1.xpose.msra.mxu0 0.0
        %1824 = vmatprep.subr.mxu0 0.0
        %1825 = vmatpush1.xpose.msra.mxu0 0.0
        %1826 = vmatprep.subr.mxu0 0.0
        %1827 = vmatpush1.xpose.msra.mxu0 0.0
        %1828 = vmatprep.mubr.f32.mxu0 0.0
        %1829 = vmatmul.mubr.f32.gmra.mrb[0].mxu0 %v1760
        %v1830 = vpop.f32.mrb[0].mxu0
        %v1831 = vadd.f32 0.0, %v1830
        %v1832 = vpop.f32.mrb[0].mxu0
        %1833 = vdwg.mxu0
        %v1834 = vmul.f32 %v1753, 0.35355338
        %v1835 = vmul.f32 %v1831, 0.35355338
        %v1836 = vadd.f32 %v1834, %v1161
        %v1837 = vadd.f32 %v1835, %v1165
        %v1838 = vsel %vm1002, %v1836, -inf
        %1839 = vmax.xlane.f32.xlu0 %v1838
        %v1840 = vpop.xlane.xlu0 %1839
        %v1841 = vsel %vm1002, %v1837, -inf
        %1842 = vmax.xlane.f32.xlu0 %v1841
        %v1843 = vpop.xlane.xlu0 %1842
        %v1844 = vsub.f32 %v1836, %v1840
        %v1845 = vsub.f32 %v1837, %v1843
        %v1846 = vmul.f32 %v1844, 1.442695
        %v1847 = vpow.pop %v1846
        %v1848 = vmul.f32 %v1845, 1.442695
        %v1849 = vpow.pop %v1848
        %v1850 = vsel %vm1002, %v1847, 0.0
        %1851 = vadd.xlane.f32.xlu0 %v1850
        %v1852 = vpop.xlane.xlu0 %1851
        %v1853 = vsel %vm1002, %v1849, 0.0
        %1854 = vadd.xlane.f32.xlu0 %v1853
        %v1855 = vpop.xlane.xlu0 %1854
        %v1856 = vrcp.pop %v1852
        %v1857 = vrcp.pop %v1855
        %v1858 = vmul.f32 %v1847, %v1856
        %v1859 = vmul.f32 %v1849, %v1857
        %1860 = vrot.lane.b32.xlu0 %v991, 48
        %v1861 = vpop.permute.xlu0 %1860
        %v1864 = vsel %vm1002, %v1858, 0
        %1866 = vmatprep.subr.mxu0 0.0
        %1867 = vmatpush1.msra.mxu0 %v1861
        %1868 = vmatprep.subr.mxu0 0.0
        %1869 = vmatpush1.msra.mxu0 0.0
        %1870 = vmatprep.subr.mxu0 0.0
        %1871 = vmatpush1.msra.mxu0 0.0
        %1872 = vmatprep.subr.mxu0 0.0
        %1873 = vmatpush1.msra.mxu0 0.0
        %1874 = vmatprep.subr.mxu0 0.0
        %1875 = vmatpush1.msra.mxu0 0.0
        %1876 = vmatprep.subr.mxu0 0.0
        %1877 = vmatpush1.msra.mxu0 0.0
        %1878 = vmatprep.subr.mxu0 0.0
        %1879 = vmatpush1.msra.mxu0 0.0
        %1880 = vmatprep.subr.mxu0 0.0
        %1881 = vmatpush1.msra.mxu0 0.0
        %1882 = vmatprep.subr.mxu0 0.0
        %1883 = vmatpush1.msra.mxu0 0.0
        %1884 = vmatprep.subr.mxu0 0.0
        %1885 = vmatpush1.msra.mxu0 0.0
        %1886 = vmatprep.subr.mxu0 0.0
        %1887 = vmatpush1.msra.mxu0 0.0
        %1888 = vmatprep.subr.mxu0 0.0
        %1889 = vmatpush1.msra.mxu0 0.0
        %1890 = vmatprep.subr.mxu0 0.0
        %1891 = vmatpush1.msra.mxu0 0.0
        %1892 = vmatprep.subr.mxu0 0.0
        %1893 = vmatpush1.msra.mxu0 0.0
        %1894 = vmatprep.subr.mxu0 0.0
        %1895 = vmatpush1.msra.mxu0 0.0
        %1896 = vmatprep.subr.mxu0 0.0
        %1897 = vmatpush1.msra.mxu0 0.0
        %1898 = vmatprep.subr.mxu0 0.0
        %1899 = vmatpush1.msra.mxu0 0.0
        %1900 = vmatprep.subr.mxu0 0.0
        %1901 = vmatpush1.msra.mxu0 0.0
        %1902 = vmatprep.subr.mxu0 0.0
        %1903 = vmatpush1.msra.mxu0 0.0
        %1904 = vmatprep.subr.mxu0 0.0
        %1905 = vmatpush1.msra.mxu0 0.0
        %1906 = vmatprep.subr.mxu0 0.0
        %1907 = vmatpush1.msra.mxu0 0.0
        %1908 = vmatprep.subr.mxu0 0.0
        %1909 = vmatpush1.msra.mxu0 0.0
        %1910 = vmatprep.subr.mxu0 0.0
        %1911 = vmatpush1.msra.mxu0 0.0
        %1912 = vmatprep.subr.mxu0 0.0
        %1913 = vmatpush1.msra.mxu0 0.0
        %1914 = vmatprep.subr.mxu0 0.0
        %1915 = vmatpush1.msra.mxu0 0.0
        %1916 = vmatprep.subr.mxu0 0.0
        %1917 = vmatpush1.msra.mxu0 0.0
        %1918 = vmatprep.subr.mxu0 0.0
        %1919 = vmatpush1.msra.mxu0 0.0
        %1920 = vmatprep.subr.mxu0 0.0
        %1921 = vmatpush1.msra.mxu0 0.0
        %1922 = vmatprep.subr.mxu0 0.0
        %1923 = vmatpush1.msra.mxu0 0.0
        %1924 = vmatprep.subr.mxu0 0.0
        %1925 = vmatpush1.msra.mxu0 0.0
        %1926 = vmatprep.subr.mxu0 0.0
        %1927 = vmatpush1.msra.mxu0 0.0
        %1928 = vmatprep.subr.mxu0 0.0
        %1929 = vmatpush1.msra.mxu0 0.0
        %1930 = vmatprep.mubr.f32.mxu0 0.0
        %1931 = vmatmul.mubr.f32.gmra.mrb[0].mxu0 %v1864
        %v1932 = vpop.f32.mrb[0].mxu0
        %v1933 = vadd.f32 0.0, %v1932
        %v1934 = vpop.f32.mrb[0].mxu0
        %1935 = vdwg.mxu0
        %1936 = vrot.lane.b32.xlu0 %v996, 48
        %v1937 = vpop.permute.xlu0 %1936
        %v1940 = vsel %vm1002, %v1859, 0
        %1942 = vmatprep.subr.mxu0 0.0
        %1943 = vmatpush1.msra.mxu0 %v1937
        %1944 = vmatprep.subr.mxu0 0.0
        %1945 = vmatpush1.msra.mxu0 0.0
        %1946 = vmatprep.subr.mxu0 0.0
        %1947 = vmatpush1.msra.mxu0 0.0
        %1948 = vmatprep.subr.mxu0 0.0
        %1949 = vmatpush1.msra.mxu0 0.0
        %1950 = vmatprep.subr.mxu0 0.0
        %1951 = vmatpush1.msra.mxu0 0.0
        %1952 = vmatprep.subr.mxu0 0.0
        %1953 = vmatpush1.msra.mxu0 0.0
        %1954 = vmatprep.subr.mxu0 0.0
        %1955 = vmatpush1.msra.mxu0 0.0
        %1956 = vmatprep.subr.mxu0 0.0
        %1957 = vmatpush1.msra.mxu0 0.0
        %1958 = vmatprep.subr.mxu0 0.0
        %1959 = vmatpush1.msra.mxu0 0.0
        %1960 = vmatprep.subr.mxu0 0.0
        %1961 = vmatpush1.msra.mxu0 0.0
        %1962 = vmatprep.subr.mxu0 0.0
        %1963 = vmatpush1.msra.mxu0 0.0
        %1964 = vmatprep.subr.mxu0 0.0
        %1965 = vmatpush1.msra.mxu0 0.0
        %1966 = vmatprep.subr.mxu0 0.0
        %1967 = vmatpush1.msra.mxu0 0.0
        %1968 = vmatprep.subr.mxu0 0.0
        %1969 = vmatpush1.msra.mxu0 0.0
        %1970 = vmatprep.subr.mxu0 0.0
        %1971 = vmatpush1.msra.mxu0 0.0
        %1972 = vmatprep.subr.mxu0 0.0
        %1973 = vmatpush1.msra.mxu0 0.0
        %1974 = vmatprep.subr.mxu0 0.0
        %1975 = vmatpush1.msra.mxu0 0.0
        %1976 = vmatprep.subr.mxu0 0.0
        %1977 = vmatpush1.msra.mxu0 0.0
        %1978 = vmatprep.subr.mxu0 0.0
        %1979 = vmatpush1.msra.mxu0 0.0
        %1980 = vmatprep.subr.mxu0 0.0
        %1981 = vmatpush1.msra.mxu0 0.0
        %1982 = vmatprep.subr.mxu0 0.0
        %1983 = vmatpush1.msra.mxu0 0.0
        %1984 = vmatprep.subr.mxu0 0.0
        %1985 = vmatpush1.msra.mxu0 0.0
        %1986 = vmatprep.subr.mxu0 0.0
        %1987 = vmatpush1.msra.mxu0 0.0
        %1988 = vmatprep.subr.mxu0 0.0
        %1989 = vmatpush1.msra.mxu0 0.0
        %1990 = vmatprep.subr.mxu0 0.0
        %1991 = vmatpush1.msra.mxu0 0.0
        %1992 = vmatprep.subr.mxu0 0.0
        %1993 = vmatpush1.msra.mxu0 0.0
        %1994 = vmatprep.subr.mxu0 0.0
        %1995 = vmatpush1.msra.mxu0 0.0
        %1996 = vmatprep.subr.mxu0 0.0
        %1997 = vmatpush1.msra.mxu0 0.0
        %1998 = vmatprep.subr.mxu0 0.0
        %1999 = vmatpush1.msra.mxu0 0.0
        %2000 = vmatprep.subr.mxu0 0.0
        %2001 = vmatpush1.msra.mxu0 0.0
        %2002 = vmatprep.subr.mxu0 0.0
        %2003 = vmatpush1.msra.mxu0 0.0
        %2004 = vmatprep.subr.mxu0 0.0
        %2005 = vmatpush1.msra.mxu0 0.0
        %2006 = vmatprep.mubr.f32.mxu0 0.0
        %2007 = vmatmul.mubr.f32.gmra.mrb[0].mxu0 %v1940
        %v2008 = vpop.f32.mrb[0].mxu0
        %v2009 = vadd.f32 0.0, %v2008
        %v2010 = vpop.f32.mrb[0].mxu0
        %2011 = vdwg.mxu0
        %2012 = vrot.lane.b32.xlu0 %v991, 104
        %v2013 = vpop.permute.xlu0 %2012
        %2014 = vrot.lane.b32.xlu0 %v991, 72
        %v2015 = vpop.permute.xlu0 %2014
        %v2016 = vsel %vm1002, %v2013, 0
        %v2018 = vsel %vm1002, %v2015, 0
        %2020 = vmatprep.subr.mxu0 0.0
        %2021 = vmatpush1.xpose.msra.mxu0 %v2018
        %2022 = vmatprep.subr.mxu0 0.0
        %2023 = vmatpush1.xpose.msra.mxu0 0.0
        %2024 = vmatprep.subr.mxu0 0.0
        %2025 = vmatpush1.xpose.msra.mxu0 0.0
        %2026 = vmatprep.subr.mxu0 0.0
        %2027 = vmatpush1.xpose.msra.mxu0 0.0
        %2028 = vmatprep.subr.mxu0 0.0
        %2029 = vmatpush1.xpose.msra.mxu0 0.0
        %2030 = vmatprep.subr.mxu0 0.0
        %2031 = vmatpush1.xpose.msra.mxu0 0.0
        %2032 = vmatprep.subr.mxu0 0.0
        %2033 = vmatpush1.xpose.msra.mxu0 0.0
        %2034 = vmatprep.subr.mxu0 0.0
        %2035 = vmatpush1.xpose.msra.mxu0 0.0
        %2036 = vmatprep.subr.mxu0 0.0
        %2037 = vmatpush1.xpose.msra.mxu0 0.0
        %2038 = vmatprep.subr.mxu0 0.0
        %2039 = vmatpush1.xpose.msra.mxu0 0.0
        %2040 = vmatprep.subr.mxu0 0.0
        %2041 = vmatpush1.xpose.msra.mxu0 0.0
        %2042 = vmatprep.subr.mxu0 0.0
        %2043 = vmatpush1.xpose.msra.mxu0 0.0
        %2044 = vmatprep.subr.mxu0 0.0
        %2045 = vmatpush1.xpose.msra.mxu0 0.0
        %2046 = vmatprep.subr.mxu0 0.0
        %2047 = vmatpush1.xpose.msra.mxu0 0.0
        %2048 = vmatprep.subr.mxu0 0.0
        %2049 = vmatpush1.xpose.msra.mxu0 0.0
        %2050 = vmatprep.subr.mxu0 0.0
        %2051 = vmatpush1.xpose.msra.mxu0 0.0
        %2052 = vmatprep.subr.mxu0 0.0
        %2053 = vmatpush1.xpose.msra.mxu0 0.0
        %2054 = vmatprep.subr.mxu0 0.0
        %2055 = vmatpush1.xpose.msra.mxu0 0.0
        %2056 = vmatprep.subr.mxu0 0.0
        %2057 = vmatpush1.xpose.msra.mxu0 0.0
        %2058 = vmatprep.subr.mxu0 0.0
        %2059 = vmatpush1.xpose.msra.mxu0 0.0
        %2060 = vmatprep.subr.mxu0 0.0
        %2061 = vmatpush1.xpose.msra.mxu0 0.0
        %2062 = vmatprep.subr.mxu0 0.0
        %2063 = vmatpush1.xpose.msra.mxu0 0.0
        %2064 = vmatprep.subr.mxu0 0.0
        %2065 = vmatpush1.xpose.msra.mxu0 0.0
        %2066 = vmatprep.subr.mxu0 0.0
        %2067 = vmatpush1.xpose.msra.mxu0 0.0
        %2068 = vmatprep.subr.mxu0 0.0
        %2069 = vmatpush1.xpose.msra.mxu0 0.0
        %2070 = vmatprep.subr.mxu0 0.0
        %2071 = vmatpush1.xpose.msra.mxu0 0.0
        %2072 = vmatprep.subr.mxu0 0.0
        %2073 = vmatpush1.xpose.msra.mxu0 0.0
        %2074 = vmatprep.subr.mxu0 0.0
        %2075 = vmatpush1.xpose.msra.mxu0 0.0
        %2076 = vmatprep.subr.mxu0 0.0
        %2077 = vmatpush1.xpose.msra.mxu0 0.0
        %2078 = vmatprep.subr.mxu0 0.0
        %2079 = vmatpush1.xpose.msra.mxu0 0.0
        %2080 = vmatprep.subr.mxu0 0.0
        %2081 = vmatpush1.xpose.msra.mxu0 0.0
        %2082 = vmatprep.subr.mxu0 0.0
        %2083 = vmatpush1.xpose.msra.mxu0 0.0
        %2084 = vmatprep.mubr.f32.mxu0 0.0
        %2085 = vmatmul.mubr.f32.gmra.mrb[0].mxu0 %v2016
        %v2086 = vpop.f32.mrb[0].mxu0
        %v2087 = vadd.f32 0.0, %v2086
        %v2088 = vpop.f32.mrb[0].mxu0
        %2089 = vdwg.mxu0
        %2090 = vrot.lane.b32.xlu0 %v996, 104
        %v2091 = vpop.permute.xlu0 %2090
        %2092 = vrot.lane.b32.xlu0 %v996, 72
        %v2093 = vpop.permute.xlu0 %2092
        %v2094 = vsel %vm1002, %v2091, 0
        %v2096 = vsel %vm1002, %v2093, 0
        %2098 = vmatprep.subr.mxu0 0.0
        %2099 = vmatpush1.xpose.msra.mxu0 %v2096
        %2100 = vmatprep.subr.mxu0 0.0
        %2101 = vmatpush1.xpose.msra.mxu0 0.0
        %2102 = vmatprep.subr.mxu0 0.0
        %2103 = vmatpush1.xpose.msra.mxu0 0.0
        %2104 = vmatprep.subr.mxu0 0.0
        %2105 = vmatpush1.xpose.msra.mxu0 0.0
        %2106 = vmatprep.subr.mxu0 0.0
        %2107 = vmatpush1.xpose.msra.mxu0 0.0
        %2108 = vmatprep.subr.mxu0 0.0
        %2109 = vmatpush1.xpose.msra.mxu0 0.0
        %2110 = vmatprep.subr.mxu0 0.0
        %2111 = vmatpush1.xpose.msra.mxu0 0.0
        %2112 = vmatprep.subr.mxu0 0.0
        %2113 = vmatpush1.xpose.msra.mxu0 0.0
        %2114 = vmatprep.subr.mxu0 0.0
        %2115 = vmatpush1.xpose.msra.mxu0 0.0
        %2116 = vmatprep.subr.mxu0 0.0
        %2117 = vmatpush1.xpose.msra.mxu0 0.0
        %2118 = vmatprep.subr.mxu0 0.0
        %2119 = vmatpush1.xpose.msra.mxu0 0.0
        %2120 = vmatprep.subr.mxu0 0.0
        %2121 = vmatpush1.xpose.msra.mxu0 0.0
        %2122 = vmatprep.subr.mxu0 0.0
        %2123 = vmatpush1.xpose.msra.mxu0 0.0
        %2124 = vmatprep.subr.mxu0 0.0
        %2125 = vmatpush1.xpose.msra.mxu0 0.0
        %2126 = vmatprep.subr.mxu0 0.0
        %2127 = vmatpush1.xpose.msra.mxu0 0.0
        %2128 = vmatprep.subr.mxu0 0.0
        %2129 = vmatpush1.xpose.msra.mxu0 0.0
        %2130 = vmatprep.subr.mxu0 0.0
        %2131 = vmatpush1.xpose.msra.mxu0 0.0
        %2132 = vmatprep.subr.mxu0 0.0
        %2133 = vmatpush1.xpose.msra.mxu0 0.0
        %2134 = vmatprep.subr.mxu0 0.0
        %2135 = vmatpush1.xpose.msra.mxu0 0.0
        %2136 = vmatprep.subr.mxu0 0.0
        %2137 = vmatpush1.xpose.msra.mxu0 0.0
        %2138 = vmatprep.subr.mxu0 0.0
        %2139 = vmatpush1.xpose.msra.mxu0 0.0
        %2140 = vmatprep.subr.mxu0 0.0
        %2141 = vmatpush1.xpose.msra.mxu0 0.0
        %2142 = vmatprep.subr.mxu0 0.0
        %2143 = vmatpush1.xpose.msra.mxu0 0.0
        %2144 = vmatprep.subr.mxu0 0.0
        %2145 = vmatpush1.xpose.msra.mxu0 0.0
        %2146 = vmatprep.subr.mxu0 0.0
        %2147 = vmatpush1.xpose.msra.mxu0 0.0
        %2148 = vmatprep.subr.mxu0 0.0
        %2149 = vmatpush1.xpose.msra.mxu0 0.0
        %2150 = vmatprep.subr.mxu0 0.0
        %2151 = vmatpush1.xpose.msra.mxu0 0.0
        %2152 = vmatprep.subr.mxu0 0.0
        %2153 = vmatpush1.xpose.msra.mxu0 0.0
        %2154 = vmatprep.subr.mxu0 0.0
        %2155 = vmatpush1.xpose.msra.mxu0 0.0
        %2156 = vmatprep.subr.mxu0 0.0
        %2157 = vmatpush1.xpose.msra.mxu0 0.0
        %2158 = vmatprep.subr.mxu0 0.0
        %2159 = vmatpush1.xpose.msra.mxu0 0.0
        %2160 = vmatprep.subr.mxu0 0.0
        %2161 = vmatpush1.xpose.msra.mxu0 0.0
        %2162 = vmatprep.mubr.f32.mxu0 0.0
        %2163 = vmatmul.mubr.f32.gmra.mrb[0].mxu0 %v2094
        %v2164 = vpop.f32.mrb[0].mxu0
        %v2165 = vadd.f32 0.0, %v2164
        %v2166 = vpop.f32.mrb[0].mxu0
        %2167 = vdwg.mxu0
        %v2168 = vmul.f32 %v2087, 0.35355338
        %v2169 = vmul.f32 %v2165, 0.35355338
        %v2170 = vadd.f32 %v2168, %v1161
        %v2171 = vadd.f32 %v2169, %v1165
        %v2172 = vsel %vm1002, %v2170, -inf
        %2173 = vmax.xlane.f32.xlu0 %v2172
        %v2174 = vpop.xlane.xlu0 %2173
        %v2175 = vsel %vm1002, %v2171, -inf
        %2176 = vmax.xlane.f32.xlu0 %v2175
        %v2177 = vpop.xlane.xlu0 %2176
        %v2178 = vsub.f32 %v2170, %v2174
        %v2179 = vsub.f32 %v2171, %v2177
        %v2180 = vmul.f32 %v2178, 1.442695
        %v2181 = vpow.pop %v2180
        %v2182 = vmul.f32 %v2179, 1.442695
        %v2183 = vpow.pop %v2182
        %v2184 = vsel %vm1002, %v2181, 0.0
        %2185 = vadd.xlane.f32.xlu0 %v2184
        %v2186 = vpop.xlane.xlu0 %2185
        %v2187 = vsel %vm1002, %v2183, 0.0
        %2188 = vadd.xlane.f32.xlu0 %v2187
        %v2189 = vpop.xlane.xlu0 %2188
        %v2190 = vrcp.pop %v2186
        %v2191 = vrcp.pop %v2189
        %v2192 = vmul.f32 %v2181, %v2190
        %v2193 = vmul.f32 %v2183, %v2191
        %2194 = vrot.lane.b32.xlu0 %v991, 40
        %v2195 = vpop.permute.xlu0 %2194
        %v2198 = vsel %vm1002, %v2192, 0
        %2200 = vmatprep.subr.mxu0 0.0
        %2201 = vmatpush1.msra.mxu0 %v2195
        %2202 = vmatprep.subr.mxu0 0.0
        %2203 = vmatpush1.msra.mxu0 0.0
        %2204 = vmatprep.subr.mxu0 0.0
        %2205 = vmatpush1.msra.mxu0 0.0
        %2206 = vmatprep.subr.mxu0 0.0
        %2207 = vmatpush1.msra.mxu0 0.0
        %2208 = vmatprep.subr.mxu0 0.0
        %2209 = vmatpush1.msra.mxu0 0.0
        %2210 = vmatprep.subr.mxu0 0.0
        %2211 = vmatpush1.msra.mxu0 0.0
        %2212 = vmatprep.subr.mxu0 0.0
        %2213 = vmatpush1.msra.mxu0 0.0
        %2214 = vmatprep.subr.mxu0 0.0
        %2215 = vmatpush1.msra.mxu0 0.0
        %2216 = vmatprep.subr.mxu0 0.0
        %2217 = vmatpush1.msra.mxu0 0.0
        %2218 = vmatprep.subr.mxu0 0.0
        %2219 = vmatpush1.msra.mxu0 0.0
        %2220 = vmatprep.subr.mxu0 0.0
        %2221 = vmatpush1.msra.mxu0 0.0
        %2222 = vmatprep.subr.mxu0 0.0
        %2223 = vmatpush1.msra.mxu0 0.0
        %2224 = vmatprep.subr.mxu0 0.0
        %2225 = vmatpush1.msra.mxu0 0.0
        %2226 = vmatprep.subr.mxu0 0.0
        %2227 = vmatpush1.msra.mxu0 0.0
        %2228 = vmatprep.subr.mxu0 0.0
        %2229 = vmatpush1.msra.mxu0 0.0
        %2230 = vmatprep.subr.mxu0 0.0
        %2231 = vmatpush1.msra.mxu0 0.0
        %2232 = vmatprep.subr.mxu0 0.0
        %2233 = vmatpush1.msra.mxu0 0.0
        %2234 = vmatprep.subr.mxu0 0.0
        %2235 = vmatpush1.msra.mxu0 0.0
        %2236 = vmatprep.subr.mxu0 0.0
        %2237 = vmatpush1.msra.mxu0 0.0
        %2238 = vmatprep.subr.mxu0 0.0
        %2239 = vmatpush1.msra.mxu0 0.0
        %2240 = vmatprep.subr.mxu0 0.0
        %2241 = vmatpush1.msra.mxu0 0.0
        %2242 = vmatprep.subr.mxu0 0.0
        %2243 = vmatpush1.msra.mxu0 0.0
        %2244 = vmatprep.subr.mxu0 0.0
        %2245 = vmatpush1.msra.mxu0 0.0
        %2246 = vmatprep.subr.mxu0 0.0
        %2247 = vmatpush1.msra.mxu0 0.0
        %2248 = vmatprep.subr.mxu0 0.0
        %2249 = vmatpush1.msra.mxu0 0.0
        %2250 = vmatprep.subr.mxu0 0.0
        %2251 = vmatpush1.msra.mxu0 0.0
        %2252 = vmatprep.subr.mxu0 0.0
        %2253 = vmatpush1.msra.mxu0 0.0
        %2254 = vmatprep.subr.mxu0 0.0
        %2255 = vmatpush1.msra.mxu0 0.0
        %2256 = vmatprep.subr.mxu0 0.0
        %2257 = vmatpush1.msra.mxu0 0.0
        %2258 = vmatprep.subr.mxu0 0.0
        %2259 = vmatpush1.msra.mxu0 0.0
        %2260 = vmatprep.subr.mxu0 0.0
        %2261 = vmatpush1.msra.mxu0 0.0
        %2262 = vmatprep.subr.mxu0 0.0
        %2263 = vmatpush1.msra.mxu0 0.0
        %2264 = vmatprep.mubr.f32.mxu0 0.0
        %2265 = vmatmul.mubr.f32.gmra.mrb[0].mxu0 %v2198
        %v2266 = vpop.f32.mrb[0].mxu0
        %v2267 = vadd.f32 0.0, %v2266
        %v2268 = vpop.f32.mrb[0].mxu0
        %2269 = vdwg.mxu0
        %2270 = vrot.lane.b32.xlu0 %v996, 40
        %v2271 = vpop.permute.xlu0 %2270
        %v2274 = vsel %vm1002, %v2193, 0
        %2276 = vmatprep.subr.mxu0 0.0
        %2277 = vmatpush1.msra.mxu0 %v2271
        %2278 = vmatprep.subr.mxu0 0.0
        %2279 = vmatpush1.msra.mxu0 0.0
        %2280 = vmatprep.subr.mxu0 0.0
        %2281 = vmatpush1.msra.mxu0 0.0
        %2282 = vmatprep.subr.mxu0 0.0
        %2283 = vmatpush1.msra.mxu0 0.0
        %2284 = vmatprep.subr.mxu0 0.0
        %2285 = vmatpush1.msra.mxu0 0.0
        %2286 = vmatprep.subr.mxu0 0.0
        %2287 = vmatpush1.msra.mxu0 0.0
        %2288 = vmatprep.subr.mxu0 0.0
        %2289 = vmatpush1.msra.mxu0 0.0
        %2290 = vmatprep.subr.mxu0 0.0
        %2291 = vmatpush1.msra.mxu0 0.0
        %2292 = vmatprep.subr.mxu0 0.0
        %2293 = vmatpush1.msra.mxu0 0.0
        %2294 = vmatprep.subr.mxu0 0.0
        %2295 = vmatpush1.msra.mxu0 0.0
        %2296 = vmatprep.subr.mxu0 0.0
        %2297 = vmatpush1.msra.mxu0 0.0
        %2298 = vmatprep.subr.mxu0 0.0
        %2299 = vmatpush1.msra.mxu0 0.0
        %2300 = vmatprep.subr.mxu0 0.0
        %2301 = vmatpush1.msra.mxu0 0.0
        %2302 = vmatprep.subr.mxu0 0.0
        %2303 = vmatpush1.msra.mxu0 0.0
        %2304 = vmatprep.subr.mxu0 0.0
        %2305 = vmatpush1.msra.mxu0 0.0
        %2306 = vmatprep.subr.mxu0 0.0
        %2307 = vmatpush1.msra.mxu0 0.0
        %2308 = vmatprep.subr.mxu0 0.0
        %2309 = vmatpush1.msra.mxu0 0.0
        %2310 = vmatprep.subr.mxu0 0.0
        %2311 = vmatpush1.msra.mxu0 0.0
        %2312 = vmatprep.subr.mxu0 0.0
        %2313 = vmatpush1.msra.mxu0 0.0
        %2314 = vmatprep.subr.mxu0 0.0
        %2315 = vmatpush1.msra.mxu0 0.0
        %2316 = vmatprep.subr.mxu0 0.0
        %2317 = vmatpush1.msra.mxu0 0.0
        %2318 = vmatprep.subr.mxu0 0.0
        %2319 = vmatpush1.msra.mxu0 0.0
        %2320 = vmatprep.subr.mxu0 0.0
        %2321 = vmatpush1.msra.mxu0 0.0
        %2322 = vmatprep.subr.mxu0 0.0
        %2323 = vmatpush1.msra.mxu0 0.0
        %2324 = vmatprep.subr.mxu0 0.0
        %2325 = vmatpush1.msra.mxu0 0.0
        %2326 = vmatprep.subr.mxu0 0.0
        %2327 = vmatpush1.msra.mxu0 0.0
        %2328 = vmatprep.subr.mxu0 0.0
        %2329 = vmatpush1.msra.mxu0 0.0
        %2330 = vmatprep.subr.mxu0 0.0
        %2331 = vmatpush1.msra.mxu0 0.0
        %2332 = vmatprep.subr.mxu0 0.0
        %2333 = vmatpush1.msra.mxu0 0.0
        %2334 = vmatprep.subr.mxu0 0.0
        %2335 = vmatpush1.msra.mxu0 0.0
        %2336 = vmatprep.subr.mxu0 0.0
        %2337 = vmatpush1.msra.mxu0 0.0
        %2338 = vmatprep.subr.mxu0 0.0
        %2339 = vmatpush1.msra.mxu0 0.0
        %2340 = vmatprep.mubr.f32.mxu0 0.0
        %2341 = vmatmul.mubr.f32.gmra.mrb[0].mxu0 %v2274
        %v2342 = vpop.f32.mrb[0].mxu0
        %v2343 = vadd.f32 0.0, %v2342
        %v2344 = vpop.f32.mrb[0].mxu0
        %2345 = vdwg.mxu0
        %2348 = vrot.lane.b32.xlu0 %v1599, 8
        %v2349 = vpop.permute.xlu0 %2348
        %2350 = vrot.lane.b32.xlu0 %v1675, 8
        %v2351 = vpop.permute.xlu0 %2350
        %2356 = vrot.lane.b32.xlu0 %v1933, 16
        %v2357 = vpop.permute.xlu0 %2356
        %2358 = vrot.lane.b32.xlu0 %v2009, 16
        %v2359 = vpop.permute.xlu0 %2358
        %2364 = vrot.lane.b32.xlu0 %v2267, 24
        %v2365 = vpop.permute.xlu0 %2364
        %2366 = vrot.lane.b32.xlu0 %v2343, 24
        %v2367 = vpop.permute.xlu0 %2366
        %v2370 = vsel %vm1002, %v1265, %v2349
        %v2371 = vsel %vm1002, %v1341, %v2351
        %vm2372 = vcmask 130048
        %v2373 = vsel %vm2372, %v2370, %v2357
        %v2374 = vsel %vm2372, %v2371, %v2359
        %vm2375 = vcmask 195584
        %v2376 = vsel %vm2375, %v2373, %v2365
        %v2377 = vsel %vm2375, %v2374, %v2367
        %v2378 = vld [vmem:[%s825] sm:$0xff]
        %v2379 = vld [vmem:[%s825 + $0x8] sm:$0xff]
        %v2380 = vld [vmem:[%s825 + $0x10] sm:$0xff]
        %v2381 = vld [vmem:[%s825 + $0x18] sm:$0xff]
        %v2382 = vld [vmem:[%s709] sm:$0x1]
        %v2384 = vlaneseq
        %v2385 = vshrl.u32 %v2384, 7
        %v2386 = vsub.s32 0, %v2385
        %v2387 = vrot.slane %v2382, %v2386
        %v2390 = vsel %vm917, %v2376, 0
        %v2393 = vsel %vm917, %v2377, 0
        %2395 = vmatprep.subr.mxu0 0.0
        %2396 = vmatpush1.msra.mxu0 %v2378
        %2397 = vmatprep.subr.mxu0 0.0
        %2398 = vmatpush1.msra.mxu0 %v2379
        %2399 = vmatprep.subr.mxu0 0.0
        %2400 = vmatpush1.msra.mxu0 %v2380
        %2401 = vmatprep.subr.mxu0 0.0
        %2402 = vmatpush1.msra.mxu0 %v2381
        %2403 = vmatprep.subr.mxu0 0.0
        %2404 = vmatpush1.msra.mxu0 0.0
        %2405 = vmatprep.subr.mxu0 0.0
        %2406 = vmatpush1.msra.mxu0 0.0
        %2407 = vmatprep.subr.mxu0 0.0
        %2408 = vmatpush1.msra.mxu0 0.0
        %2409 = vmatprep.subr.mxu0 0.0
        %2410 = vmatpush1.msra.mxu0 0.0
        %2411 = vmatprep.subr.mxu0 0.0
        %2412 = vmatpush1.msra.mxu0 0.0
        %2413 = vmatprep.subr.mxu0 0.0
        %2414 = vmatpush1.msra.mxu0 0.0
        %2415 = vmatprep.subr.mxu0 0.0
        %2416 = vmatpush1.msra.mxu0 0.0
        %2417 = vmatprep.subr.mxu0 0.0
        %2418 = vmatpush1.msra.mxu0 0.0
        %2419 = vmatprep.subr.mxu0 0.0
        %2420 = vmatpush1.msra.mxu0 0.0
        %2421 = vmatprep.subr.mxu0 0.0
        %2422 = vmatpush1.msra.mxu0 0.0
        %2423 = vmatprep.subr.mxu0 0.0
        %2424 = vmatpush1.msra.mxu0 0.0
        %2425 = vmatprep.subr.mxu0 0.0
        %2426 = vmatpush1.msra.mxu0 0.0
        %2427 = vmatprep.subr.mxu0 0.0
        %2428 = vmatpush1.msra.mxu0 0.0
        %2429 = vmatprep.subr.mxu0 0.0
        %2430 = vmatpush1.msra.mxu0 0.0
        %2431 = vmatprep.subr.mxu0 0.0
        %2432 = vmatpush1.msra.mxu0 0.0
        %2433 = vmatprep.subr.mxu0 0.0
        %2434 = vmatpush1.msra.mxu0 0.0
        %2435 = vmatprep.subr.mxu0 0.0
        %2436 = vmatpush1.msra.mxu0 0.0
        %2437 = vmatprep.subr.mxu0 0.0
        %2438 = vmatpush1.msra.mxu0 0.0
        %2439 = vmatprep.subr.mxu0 0.0
        %2440 = vmatpush1.msra.mxu0 0.0
        %2441 = vmatprep.subr.mxu0 0.0
        %2442 = vmatpush1.msra.mxu0 0.0
        %2443 = vmatprep.subr.mxu0 0.0
        %2444 = vmatpush1.msra.mxu0 0.0
        %2445 = vmatprep.subr.mxu0 0.0
        %2446 = vmatpush1.msra.mxu0 0.0
        %2447 = vmatprep.subr.mxu0 0.0
        %2448 = vmatpush1.msra.mxu0 0.0
        %2449 = vmatprep.subr.mxu0 0.0
        %2450 = vmatpush1.msra.mxu0 0.0
        %2451 = vmatprep.subr.mxu0 0.0
        %2452 = vmatpush1.msra.mxu0 0.0
        %2453 = vmatprep.subr.mxu0 0.0
        %2454 = vmatpush1.msra.mxu0 0.0
        %2455 = vmatprep.subr.mxu0 0.0
        %2456 = vmatpush1.msra.mxu0 0.0
        %2457 = vmatprep.subr.mxu0 0.0
        %2458 = vmatpush1.msra.mxu0 0.0
        %2459 = vmatprep.mubr.f32.mxu0 0.0
        %2460 = vmatmul.mubr.f32.gmra.mrb[0].mxu0 %v2390
        %v2461 = vpop.f32.mrb[0].mxu0
        %v2462 = vadd.f32 %v2387, %v2461
        %v2463 = vpop.f32.mrb[0].mxu0
        %2464 = vmatprep.mubr.f32.mxu0 0.0
        %2465 = vmatmul.mubr.f32.gmra.mrb[0].mxu0 %v2393
        %v2466 = vpop.f32.mrb[0].mxu0
        %v2467 = vadd.f32 %v2387, %v2466
        %v2468 = vpop.f32.mrb[0].mxu0
        %2469 = vdwg.mxu0
        %v2470 = vadd.f32 %v2462, %v902
        %v2471 = vadd.f32 %v2467, %v903
        %v2472 = vld [vmem:[%s717] sm:$0x1]
        %v2473 = vld [vmem:[%s725] sm:$0x1]
        %v2474 = vsel %vm917, %v2470, 0.0
        %2475 = vadd.xlane.f32.xlu0 %v2474
        %v2476 = vpop.xlane.xlu0 %2475
        %v2477 = vsel %vm917, %v2471, 0.0
        %2478 = vadd.xlane.f32.xlu0 %v2477
        %v2479 = vpop.xlane.xlu0 %2478
        %v2480 = vrcp.pop 32.0
        %v2481 = vmul.f32 %v2476, %v2480
        %v2482 = vmul.f32 %v2479, %v2480
        %v2483 = vsub.f32 %v2470, %v2481
        %v2484 = vsub.f32 %v2471, %v2482
        %v2485 = vmul.f32 %v2483, %v2483
        %v2486 = vmul.f32 %v2484, %v2484
        %v2487 = vsel %vm917, %v2485, 0.0
        %2488 = vadd.xlane.f32.xlu0 %v2487
        %v2489 = vpop.xlane.xlu0 %2488
        %v2490 = vsel %vm917, %v2486, 0.0
        %2491 = vadd.xlane.f32.xlu0 %v2490
        %v2492 = vpop.xlane.xlu0 %2491
        %v2493 = vmul.f32 %v2489, %v2480
        %v2494 = vmul.f32 %v2492, %v2480
        %v2495 = vadd.f32 %v2493, 1e-12
        %v2496 = vadd.f32 %v2494, 1e-12
        %v2497 = vrsqrt.pop %v2495
        %v2498 = vrsqrt.pop %v2496
        %v2499 = vmul.f32 %v2483, %v2497
        %v2500 = vmul.f32 %v2484, %v2498
        %v2502 = vlaneseq
        %v2503 = vshrl.u32 %v2502, 7
        %v2504 = vsub.s32 0, %v2503
        %v2505 = vrot.slane %v2472, %v2504
        %v2507 = vmul.f32 %v2499, %v2505
        %v2508 = vmul.f32 %v2500, %v2505
        %v2510 = vlaneseq
        %v2511 = vshrl.u32 %v2510, 7
        %v2512 = vsub.s32 0, %v2511
        %v2513 = vrot.slane %v2473, %v2512
        %v2515 = vadd.f32 %v2507, %v2513
        %v2516 = vadd.f32 %v2508, %v2513
        %v2517 = vld [vmem:[%s830] sm:$0xff]
        %v2518 = vld [vmem:[%s830 + $0x8] sm:$0xff]
        %v2519 = vld [vmem:[%s830 + $0x10] sm:$0xff]
        %v2520 = vld [vmem:[%s830 + $0x18] sm:$0xff]
        %v2521 = vld [vmem:[%s833] sm:$0x1]
        %v2523 = vlaneseq
        %v2524 = vshrl.u32 %v2523, 7
        %v2525 = vsub.s32 0, %v2524
        %v2526 = vrot.slane %v2521, %v2525
        %v2529 = vsel %vm917, %v2515, 0
        %v2532 = vsel %vm917, %v2516, 0
        %2534 = vmatprep.subr.mxu0 0.0
        %2535 = vmatpush1.msra.mxu0 %v2517
        %2536 = vmatprep.subr.mxu0 0.0
        %2537 = vmatpush1.msra.mxu0 %v2518
        %2538 = vmatprep.subr.mxu0 0.0
        %2539 = vmatpush1.msra.mxu0 %v2519
        %2540 = vmatprep.subr.mxu0 0.0
        %2541 = vmatpush1.msra.mxu0 %v2520
        %2542 = vmatprep.subr.mxu0 0.0
        %2543 = vmatpush1.msra.mxu0 0.0
        %2544 = vmatprep.subr.mxu0 0.0
        %2545 = vmatpush1.msra.mxu0 0.0
        %2546 = vmatprep.subr.mxu0 0.0
        %2547 = vmatpush1.msra.mxu0 0.0
        %2548 = vmatprep.subr.mxu0 0.0
        %2549 = vmatpush1.msra.mxu0 0.0
        %2550 = vmatprep.subr.mxu0 0.0
        %2551 = vmatpush1.msra.mxu0 0.0
        %2552 = vmatprep.subr.mxu0 0.0
        %2553 = vmatpush1.msra.mxu0 0.0
        %2554 = vmatprep.subr.mxu0 0.0
        %2555 = vmatpush1.msra.mxu0 0.0
        %2556 = vmatprep.subr.mxu0 0.0
        %2557 = vmatpush1.msra.mxu0 0.0
        %2558 = vmatprep.subr.mxu0 0.0
        %2559 = vmatpush1.msra.mxu0 0.0
        %2560 = vmatprep.subr.mxu0 0.0
        %2561 = vmatpush1.msra.mxu0 0.0
        %2562 = vmatprep.subr.mxu0 0.0
        %2563 = vmatpush1.msra.mxu0 0.0
        %2564 = vmatprep.subr.mxu0 0.0
        %2565 = vmatpush1.msra.mxu0 0.0
        %2566 = vmatprep.subr.mxu0 0.0
        %2567 = vmatpush1.msra.mxu0 0.0
        %2568 = vmatprep.subr.mxu0 0.0
        %2569 = vmatpush1.msra.mxu0 0.0
        %2570 = vmatprep.subr.mxu0 0.0
        %2571 = vmatpush1.msra.mxu0 0.0
        %2572 = vmatprep.subr.mxu0 0.0
        %2573 = vmatpush1.msra.mxu0 0.0
        %2574 = vmatprep.subr.mxu0 0.0
        %2575 = vmatpush1.msra.mxu0 0.0
        %2576 = vmatprep.subr.mxu0 0.0
        %2577 = vmatpush1.msra.mxu0 0.0
        %2578 = vmatprep.subr.mxu0 0.0
        %2579 = vmatpush1.msra.mxu0 0.0
        %2580 = vmatprep.subr.mxu0 0.0
        %2581 = vmatpush1.msra.mxu0 0.0
        %2582 = vmatprep.subr.mxu0 0.0
        %2583 = vmatpush1.msra.mxu0 0.0
        %2584 = vmatprep.subr.mxu0 0.0
        %2585 = vmatpush1.msra.mxu0 0.0
        %2586 = vmatprep.subr.mxu0 0.0
        %2587 = vmatpush1.msra.mxu0 0.0
        %2588 = vmatprep.subr.mxu0 0.0
        %2589 = vmatpush1.msra.mxu0 0.0
        %2590 = vmatprep.subr.mxu0 0.0
        %2591 = vmatpush1.msra.mxu0 0.0
        %2592 = vmatprep.subr.mxu0 0.0
        %2593 = vmatpush1.msra.mxu0 0.0
        %2594 = vmatprep.subr.mxu0 0.0
        %2595 = vmatpush1.msra.mxu0 0.0
        %2596 = vmatprep.subr.mxu0 0.0
        %2597 = vmatpush1.msra.mxu0 0.0
        %2598 = vmatprep.mubr.f32.mxu0 0.0
        %2599 = vmatmul.mubr.f32.gmra.mrb[0].mxu0 %v2529
        %v2600 = vpop.f32.mrb[0].mxu0
        %v2601 = vadd.f32 %v2526, %v2600
        %v2602 = vpop.f32.mrb[0].mxu0
        %2603 = vmatprep.mubr.f32.mxu0 0.0
        %2604 = vmatmul.mubr.f32.gmra.mrb[0].mxu0 %v2532
        %v2605 = vpop.f32.mrb[0].mxu0
        %v2606 = vadd.f32 %v2526, %v2605
        %v2607 = vpop.f32.mrb[0].mxu0
        %2608 = vdwg.mxu0
        %v2609 = vmul.f32 %v2601, 0.5
        %v2610 = vmul.f32 %v2606, 0.5
        %v2611 = vmul.f32 %v2601, 0.70710677
        %v2612 = vmul.f32 %v2606, 0.70710677
        %v2613 = vand.u32 2147483647, %v2611
        %v2614 = vand.u32 2147483647, %v2612
        %v2615 = vmul.f32 %v2613, 0.3275911
        %v2616 = vmul.f32 %v2614, 0.3275911
        %v2617 = vadd.f32 %v2615, 1.0
        %v2618 = vadd.f32 %v2616, 1.0
        %v2619 = vrcp.pop %v2617
        %v2620 = vmul.f32 1.0, %v2619
        %v2621 = vrcp.pop %v2618
        %v2622 = vmul.f32 1.0, %v2621
        %v2623 = vmul.f32 %v2620, 1.0614054
        %v2624 = vmul.f32 %v2622, 1.0614054
        %v2625 = vadd.f32 %v2623, -1.4531521
        %v2626 = vadd.f32 %v2624, -1.4531521
        %v2627 = vmul.f32 %v2625, %v2620
        %v2628 = vmul.f32 %v2626, %v2622
        %v2629 = vadd.f32 %v2627, 1.4214138
        %v2630 = vadd.f32 %v2628, 1.4214138
        %v2631 = vmul.f32 %v2629, %v2620
        %v2632 = vmul.f32 %v2630, %v2622
        %v2633 = vadd.f32 %v2631, -0.28449672
        %v2634 = vadd.f32 %v2632, -0.28449672
        %v2635 = vmul.f32 %v2633, %v2620
        %v2636 = vmul.f32 %v2634, %v2622
        %v2637 = vadd.f32 %v2635, 0.2548296
        %v2638 = vadd.f32 %v2636, 0.2548296
        %v2639 = vmul.f32 %v2637, %v2620
        %v2640 = vmul.f32 %v2638, %v2622
        %v2641 = vsub.f32 0.0, %v2613
        %v2642 = vsub.f32 0.0, %v2614
        %v2643 = vmul.f32 %v2641, %v2613
        %v2644 = vmul.f32 %v2642, %v2614
        %v2645 = vmul.f32 %v2643, 1.442695
        %v2646 = vpow.pop %v2645
        %v2647 = vmul.f32 %v2644, 1.442695
        %v2648 = vpow.pop %v2647
        %v2649 = vmul.f32 %v2639, %v2646
        %v2650 = vmul.f32 %v2640, %v2648
        %v2651 = vsub.f32 1.0, %v2649
        %v2652 = vsub.f32 1.0, %v2650
        %vm2653 = vcmp.ge.f32.partialorder %v2611, 0.0
        %vm2654 = vcmp.ge.f32.partialorder %v2612, 0.0
        %v2655 = vsub.f32 0.0, %v2651
        %v2656 = vsub.f32 0.0, %v2652
        %v2657 = vsel %vm2653, %v2651, %v2655
        %v2658 = vsel %vm2654, %v2652, %v2656
        %v2659 = vadd.f32 %v2657, 1.0
        %v2660 = vadd.f32 %v2658, 1.0
        %v2661 = vmul.f32 %v2609, %v2659
        %v2662 = vmul.f32 %v2610, %v2660
        %v2663 = vld [vmem:[%s838] sm:$0xff]
        %v2664 = vld [vmem:[%s838 + $0x8] sm:$0xff]
        %v2665 = vld [vmem:[%s838 + $0x10] sm:$0xff]
        %v2666 = vld [vmem:[%s838 + $0x18] sm:$0xff]
        %v2667 = vld [vmem:[%s838 + $0x20] sm:$0xff]
        %v2668 = vld [vmem:[%s838 + $0x28] sm:$0xff]
        %v2669 = vld [vmem:[%s838 + $0x30] sm:$0xff]
        %v2670 = vld [vmem:[%s838 + $0x38] sm:$0xff]
        %v2671 = vld [vmem:[%s841] sm:$0x1]
        %v2673 = vlaneseq
        %v2674 = vshrl.u32 %v2673, 7
        %v2675 = vsub.s32 0, %v2674
        %v2676 = vrot.slane %v2671, %v2675
        %vm2678 = vcmask 523264
        %v2680 = vsel %vm2678, %v2661, 0
        %v2683 = vsel %vm2678, %v2662, 0
        %2685 = vmatprep.subr.mxu0 0.0
        %2686 = vmatpush1.msra.mxu0 %v2663
        %2687 = vmatprep.subr.mxu0 0.0
        %2688 = vmatpush1.msra.mxu0 %v2664
        %2689 = vmatprep.subr.mxu0 0.0
        %2690 = vmatpush1.msra.mxu0 %v2665
        %2691 = vmatprep.subr.mxu0 0.0
        %2692 = vmatpush1.msra.mxu0 %v2666
        %2693 = vmatprep.subr.mxu0 0.0
        %2694 = vmatpush1.msra.mxu0 %v2667
        %2695 = vmatprep.subr.mxu0 0.0
        %2696 = vmatpush1.msra.mxu0 %v2668
        %2697 = vmatprep.subr.mxu0 0.0
        %2698 = vmatpush1.msra.mxu0 %v2669
        %2699 = vmatprep.subr.mxu0 0.0
        %2700 = vmatpush1.msra.mxu0 %v2670
        %2701 = vmatprep.subr.mxu0 0.0
        %2702 = vmatpush1.msra.mxu0 0.0
        %2703 = vmatprep.subr.mxu0 0.0
        %2704 = vmatpush1.msra.mxu0 0.0
        %2705 = vmatprep.subr.mxu0 0.0
        %2706 = vmatpush1.msra.mxu0 0.0
        %2707 = vmatprep.subr.mxu0 0.0
        %2708 = vmatpush1.msra.mxu0 0.0
        %2709 = vmatprep.subr.mxu0 0.0
        %2710 = vmatpush1.msra.mxu0 0.0
        %2711 = vmatprep.subr.mxu0 0.0
        %2712 = vmatpush1.msra.mxu0 0.0
        %2713 = vmatprep.subr.mxu0 0.0
        %2714 = vmatpush1.msra.mxu0 0.0
        %2715 = vmatprep.subr.mxu0 0.0
        %2716 = vmatpush1.msra.mxu0 0.0
        %2717 = vmatprep.subr.mxu0 0.0
        %2718 = vmatpush1.msra.mxu0 0.0
        %2719 = vmatprep.subr.mxu0 0.0
        %2720 = vmatpush1.msra.mxu0 0.0
        %2721 = vmatprep.subr.mxu0 0.0
        %2722 = vmatpush1.msra.mxu0 0.0
        %2723 = vmatprep.subr.mxu0 0.0
        %2724 = vmatpush1.msra.mxu0 0.0
        %2725 = vmatprep.subr.mxu0 0.0
        %2726 = vmatpush1.msra.mxu0 0.0
        %2727 = vmatprep.subr.mxu0 0.0
        %2728 = vmatpush1.msra.mxu0 0.0
        %2729 = vmatprep.subr.mxu0 0.0
        %2730 = vmatpush1.msra.mxu0 0.0
        %2731 = vmatprep.subr.mxu0 0.0
        %2732 = vmatpush1.msra.mxu0 0.0
        %2733 = vmatprep.subr.mxu0 0.0
        %2734 = vmatpush1.msra.mxu0 0.0
        %2735 = vmatprep.subr.mxu0 0.0
        %2736 = vmatpush1.msra.mxu0 0.0
        %2737 = vmatprep.subr.mxu0 0.0
        %2738 = vmatpush1.msra.mxu0 0.0
        %2739 = vmatprep.subr.mxu0 0.0
        %2740 = vmatpush1.msra.mxu0 0.0
        %2741 = vmatprep.subr.mxu0 0.0
        %2742 = vmatpush1.msra.mxu0 0.0
        %2743 = vmatprep.subr.mxu0 0.0
        %2744 = vmatpush1.msra.mxu0 0.0
        %2745 = vmatprep.subr.mxu0 0.0
        %2746 = vmatpush1.msra.mxu0 0.0
        %2747 = vmatprep.subr.mxu0 0.0
        %2748 = vmatpush1.msra.mxu0 0.0
        %2749 = vmatprep.mubr.f32.mxu0 0.0
        %2750 = vmatmul.mubr.f32.gmra.mrb[0].mxu0 %v2680
        %v2751 = vpop.f32.mrb[0].mxu0
        %v2752 = vadd.f32 %v2676, %v2751
        %v2753 = vpop.f32.mrb[0].mxu0
        %2754 = vmatprep.mubr.f32.mxu0 0.0
        %2755 = vmatmul.mubr.f32.gmra.mrb[0].mxu0 %v2683
        %v2756 = vpop.f32.mrb[0].mxu0
        %v2757 = vadd.f32 %v2676, %v2756
        %v2758 = vpop.f32.mrb[0].mxu0
        %2759 = vdwg.mxu0
        %v2760 = vadd.f32 %v2752, %v2515
        %v2761 = vadd.f32 %v2757, %v2516
        %v2762 = vld [vmem:[%s844] sm:$0x1]
        %v2763 = vld [vmem:[%s847] sm:$0x1]
        %v2764 = vsel %vm917, %v2760, 0.0
        %2765 = vadd.xlane.f32.xlu0 %v2764
        %v2766 = vpop.xlane.xlu0 %2765
        %v2767 = vsel %vm917, %v2761, 0.0
        %2768 = vadd.xlane.f32.xlu0 %v2767
        %v2769 = vpop.xlane.xlu0 %2768
        %v2770 = vmul.f32 %v2766, %v2480
        %v2771 = vmul.f32 %v2769, %v2480
        %v2772 = vsub.f32 %v2760, %v2770
        %v2773 = vsub.f32 %v2761, %v2771
        %v2774 = vmul.f32 %v2772, %v2772
        %v2775 = vmul.f32 %v2773, %v2773
        %v2776 = vsel %vm917, %v2774, 0.0
        %2777 = vadd.xlane.f32.xlu0 %v2776
        %v2778 = vpop.xlane.xlu0 %2777
        %v2779 = vsel %vm917, %v2775, 0.0
        %2780 = vadd.xlane.f32.xlu0 %v2779
        %v2781 = vpop.xlane.xlu0 %2780
        %v2782 = vmul.f32 %v2778, %v2480
        %v2783 = vmul.f32 %v2781, %v2480
        %v2784 = vadd.f32 %v2782, 1e-12
        %v2785 = vadd.f32 %v2783, 1e-12
        %v2786 = vrsqrt.pop %v2784
        %v2787 = vrsqrt.pop %v2785
        %v2788 = vmul.f32 %v2772, %v2786
        %v2789 = vmul.f32 %v2773, %v2787
        %v2791 = vlaneseq
        %v2792 = vshrl.u32 %v2791, 7
        %v2793 = vsub.s32 0, %v2792
        %v2794 = vrot.slane %v2762, %v2793
        %v2796 = vmul.f32 %v2788, %v2794
        %v2797 = vmul.f32 %v2789, %v2794
        %v2799 = vlaneseq
        %v2800 = vshrl.u32 %v2799, 7
        %v2801 = vsub.s32 0, %v2800
        %v2802 = vrot.slane %v2763, %v2801
        %v2804 = vadd.f32 %v2796, %v2802
        %v2805 = vadd.f32 %v2797, %v2802
        %2806 = vst.msk [vmem:[#allocation2] sm:$0xff] %vm917, %v2804
        %2807 = vst.msk [vmem:[#allocation2 + $0x8] sm:$0xff] %vm917, %v2805
        %p2808 = scmp.eq.s32.totalorder %s38, 1
        // Predicated region
        $region125: #{tpu_custom_call.1} parent=91 // pred_check
          %p2809 = pneg %p2808
        $region126: #{tpu_custom_call.1} parent=91 // pred_check_branch
          %2811 = sbr.rel (%p2809) target = $region128
        $region127: #{tpu_custom_call.1} parent=91 // pred_region
          %v2812 = vld [vmem:[%s16] sm:$0xff]
          %v2813 = vld [vmem:[%s16 + $0x8] sm:$0xff]
          %v2814 = vld [vmem:[%s16 + $0x10] sm:$0xff]
          %v2815 = vld [vmem:[%s16 + $0x18] sm:$0xff]
          %v2816 = vld [vmem:[%s17] sm:$0x1]
          %v2818 = vlaneseq
          %v2819 = vshrl.u32 %v2818, 7
          %v2820 = vsub.s32 0, %v2819
          %v2821 = vrot.slane %v2816, %v2820
          %v2825 = vrot.slane %v2805, 7
          %vm2826 = vcmask 1041409
          %v2827 = vsel %vm2826, %v2825, %v2804
          %v2828 = vsel %vm917, %v2827, 0
          %2830 = vmatprep.subr.mxu0 0.0
          %2831 = vmatpush1.msra.mxu0 %v2812
          %2832 = vmatprep.subr.mxu0 0.0
          %2833 = vmatpush1.msra.mxu0 %v2813
          %2834 = vmatprep.subr.mxu0 0.0
          %2835 = vmatpush1.msra.mxu0 %v2814
          %2836 = vmatprep.subr.mxu0 0.0
          %2837 = vmatpush1.msra.mxu0 %v2815
          %2838 = vmatprep.subr.mxu0 0.0
          %2839 = vmatpush1.msra.mxu0 0.0
          %2840 = vmatprep.subr.mxu0 0.0
          %2841 = vmatpush1.msra.mxu0 0.0
          %2842 = vmatprep.subr.mxu0 0.0
          %2843 = vmatpush1.msra.mxu0 0.0
          %2844 = vmatprep.subr.mxu0 0.0
          %2845 = vmatpush1.msra.mxu0 0.0
          %2846 = vmatprep.subr.mxu0 0.0
          %2847 = vmatpush1.msra.mxu0 0.0
          %2848 = vmatprep.subr.mxu0 0.0
          %2849 = vmatpush1.msra.mxu0 0.0
          %2850 = vmatprep.subr.mxu0 0.0
          %2851 = vmatpush1.msra.mxu0 0.0
          %2852 = vmatprep.subr.mxu0 0.0
          %2853 = vmatpush1.msra.mxu0 0.0
          %2854 = vmatprep.subr.mxu0 0.0
          %2855 = vmatpush1.msra.mxu0 0.0
          %2856 = vmatprep.subr.mxu0 0.0
          %2857 = vmatpush1.msra.mxu0 0.0
          %2858 = vmatprep.subr.mxu0 0.0
          %2859 = vmatpush1.msra.mxu0 0.0
          %2860 = vmatprep.subr.mxu0 0.0
          %2861 = vmatpush1.msra.mxu0 0.0
          %2862 = vmatprep.subr.mxu0 0.0
          %2863 = vmatpush1.msra.mxu0 0.0
          %2864 = vmatprep.subr.mxu0 0.0
          %2865 = vmatpush1.msra.mxu0 0.0
          %2866 = vmatprep.subr.mxu0 0.0
          %2867 = vmatpush1.msra.mxu0 0.0
          %2868 = vmatprep.subr.mxu0 0.0
          %2869 = vmatpush1.msra.mxu0 0.0
          %2870 = vmatprep.subr.mxu0 0.0
          %2871 = vmatpush1.msra.mxu0 0.0
          %2872 = vmatprep.subr.mxu0 0.0
          %2873 = vmatpush1.msra.mxu0 0.0
          %2874 = vmatprep.subr.mxu0 0.0
          %2875 = vmatpush1.msra.mxu0 0.0
          %2876 = vmatprep.subr.mxu0 0.0
          %2877 = vmatpush1.msra.mxu0 0.0
          %2878 = vmatprep.subr.mxu0 0.0
          %2879 = vmatpush1.msra.mxu0 0.0
          %2880 = vmatprep.subr.mxu0 0.0
          %2881 = vmatpush1.msra.mxu0 0.0
          %2882 = vmatprep.subr.mxu0 0.0
          %2883 = vmatpush1.msra.mxu0 0.0
          %2884 = vmatprep.subr.mxu0 0.0
          %2885 = vmatpush1.msra.mxu0 0.0
          %2886 = vmatprep.subr.mxu0 0.0
          %2887 = vmatpush1.msra.mxu0 0.0
          %2888 = vmatprep.subr.mxu0 0.0
          %2889 = vmatpush1.msra.mxu0 0.0
          %2890 = vmatprep.subr.mxu0 0.0
          %2891 = vmatpush1.msra.mxu0 0.0
          %2892 = vmatprep.subr.mxu0 0.0
          %2893 = vmatpush1.msra.mxu0 0.0
          %2894 = vmatprep.mubr.f32.mxu0 0.0
          %2895 = vmatmul.mubr.f32.gmra.mrb[0].mxu0 %v2828
          %v2896 = vpop.f32.mrb[0].mxu0
          %v2897 = vadd.f32 %v2821, %v2896
          %v2898 = vpop.f32.mrb[0].mxu0
          %2899 = vdwg.mxu0
          %v2900 = vtanh.pop %v2897
          %vm2901 = vcmask 254976
          %2902 = vst.msk [vmem:[#allocation15] sm:$0x3] %vm2901, %v2900
        $region128: #{tpu_custom_call.1} parent=91 // pred_fallthru
          _
        // Predicated region
        $region129: #{tpu_custom_call.1} parent=91 // pred_check
          %p2903 = pneg %p489
        $region130: #{tpu_custom_call.1} parent=91 // pred_check_branch
          %2905 = sbr.rel (%p2903) target = $region132
        $region131: #{tpu_custom_call.1} parent=91 // pred_region
          %s2907 = ssub.s32 32, 32
          %2908 = vsyncadd [#allocation5], %s2907
          %s2910 = sshll.u32 [#allocation15], 4
          %s2911 = int_to_ptr.vmem [resolvable:$true] %s2910
          %2913 = dma.vmem_to_hbm [thread:$0]  %s2911, 32, %s18, [#allocation5]
        $region132: #{tpu_custom_call.1} parent=91 // pred_fallthru
          _
        // Predicated region
        $region133: #{tpu_custom_call.1} parent=91 // pred_check
          %p2914 = pneg %p489
        $region134: #{tpu_custom_call.1} parent=91 // pred_check_branch
          %2916 = sbr.rel (%p2914) target = $region136
        $region135: #{tpu_custom_call.1} parent=91 // pred_region
          %2917 = dma.done [#allocation5], 32
        $region136: #{tpu_custom_call.1} parent=91 // pred_fallthru
          _
      $region92: #{tpu_custom_call.1} parent=5 // pred_fallthru
        _
      %p2918 = scmp.le.s32.totalorder 2, %s33
      // Predicated region
      $region137: #{tpu_custom_call.1} parent=5 // pred_check
        %p2919 = pneg %p2918
      $region138: #{tpu_custom_call.1} parent=5 // pred_check_branch
        %2921 = sbr.rel (%p2919) target = $region140
      $region139: #{tpu_custom_call.1} parent=5 // pred_region
        %s2922 = ssub.s32 %s33, 2
      $region140: #{tpu_custom_call.1} parent=5 // pred_fallthru
        _
    $region6: #{tpu_custom_call.1} parent=1 // loop_footer
      %s37 = sadd.s32 1, %s33
    $region7: #{tpu_custom_call.1} parent=1 // loop_footer_branch
      %32 = sbr.rel target = $region3
    $region8: #{tpu_custom_call.1} parent=1 // loop_exit
      _
    %2923 = vsyncpa [#allocation4], 1
    %s2924 = scalar_lea.sflag [#allocation4], 1
    %2925 = vsyncpa %s2924, 1
    %2926 = vsyncpa [#allocation7], 1
    %2927 = vsyncpa [#allocation10], 1
    %s2928 = scalar_lea.sflag [#allocation10], 1
    %2929 = vsyncpa %s2928, 1
    %2930 = vsyncpa [#allocation13], 1
    %s2931 = scalar_lea.sflag [#allocation13], 1
    %2932 = vsyncpa %s2931, 1
    %2933 = vsyncpa [#allocation5], 1
    %s2934 = scalar_lea.sflag [#allocation5], 1
    %2935 = vsyncpa %s2934, 1

</llo_original>
